<compile_context>
chip_gen: v7x
topology: tpu7x:2x2x1
jax: 0.10.0
libtpu: 0.0.40
codegen_flags: <defaults>
</compile_context>

<pallas_src>
import functools

import jax
import jax.numpy as jnp
from jax.experimental import pallas as pl
from jax.experimental.pallas import tpu as pltpu

LANE = 128


# ----------------------------------------------------------------------------
# helpers
# ----------------------------------------------------------------------------
def _round_up(x, m):
    return ((x + m - 1) // m) * m


def _pad2d(a, rows, cols, fill=0.0):
    a = jnp.asarray(a, jnp.float32)
    r, c = a.shape
    return jnp.pad(a, ((0, rows - r), (0, cols - c)), constant_values=fill)


def _vmem_budget_bytes():
    """Per-generation VMEM budget: ~100 MiB on v5e/v6e (128 MiB physical),
    ~48 MiB on v7x (64 MiB physical) or when detection fails."""
    try:
        cap = int(pltpu.get_tpu_info().vmem_capacity_bytes)
    except Exception:
        cap = 64 << 20  # conservative fallback = v7x physical VMEM
    return max(32 << 20, min(cap - (16 << 20), 100 << 20))


def _plan_tiles(n, vmem_budget):
    """Pick (n_pad, tm, tk): large A tiles, even row-tile count."""
    if n <= 512:
        tm, tk = 256, 512
    elif vmem_budget >= (96 << 20):      # v5e / v6e: plenty of VMEM
        tm, tk = 512, 2048
    else:                                # v7x / unknown
        tm, tk = 512, 1024
    # Multiple of both tiles; 2*tm keeps n_pad // tm even so the "parallel"
    # row axis splits cleanly across v7x's two TensorCores.
    n_pad = _round_up(n, max(2 * tm, tk))
    return n_pad, tm, tk


def _read_xw(xw_ref, k, tk, xw_resident):
    """Current k-slice of XW, whether XW is VMEM-resident or k-tiled."""
    if xw_resident:
        start = pl.multiple_of(k * tk, tk)
        return xw_ref[pl.ds(start, tk), :]
    return xw_ref[...]


# ----------------------------------------------------------------------------
# Kernel 1: dense projection  XW1 = X @ W1   (row-tiled, bf16 in/out, f32 acc)
# ----------------------------------------------------------------------------
def dense_proj_kernel(h_ref, w_ref, out_ref):
    out_ref[...] = jnp.dot(h_ref[...], w_ref[...],
                           preferred_element_type=jnp.float32).astype(out_ref.dtype)


def _dense_proj(h_bf16, w_bf16, *, tm, vmem_limit):
    n_pad, fin = h_bf16.shape
    fout = w_bf16.shape[1]
    return pl.pallas_call(
        dense_proj_kernel,
        out_shape=jax.ShapeDtypeStruct((n_pad, fout), jnp.bfloat16),
        grid_spec=pltpu.PrefetchScalarGridSpec(
            num_scalar_prefetch=0,
            grid=(n_pad // tm,),
            in_specs=[pl.BlockSpec((tm, fin), lambda i: (i, 0)),
                      pl.BlockSpec((fin, fout), lambda i: (0, 0))],
            out_specs=pl.BlockSpec((tm, fout), lambda i: (i, 0)),
        ),
        compiler_params=pltpu.CompilerParams(
            dimension_semantics=("parallel",),
            vmem_limit_bytes=vmem_limit),
    )(h_bf16, w_bf16)


# ----------------------------------------------------------------------------
# Kernel 2: aggregation for layers 1/2 with fused next-layer projection
#   acc[i] += A[i,k] @ XW[k] ;  at last k:  out[i] = relu(acc + b) @ W_next
# ----------------------------------------------------------------------------
def gcn_agg_proj_kernel(a_ref, xw_ref, b_ref, wnext_ref, out_ref, acc_ref,
                        *, tk, xw_resident):
    k = pl.program_id(1)

    @pl.when(k == 0)
    def _():
        acc_ref[...] = jnp.zeros_like(acc_ref)

    acc_ref[...] += jnp.dot(a_ref[...], _read_xw(xw_ref, k, tk, xw_resident),
                            preferred_element_type=jnp.float32)

    @pl.when(k == pl.num_programs(1) - 1)
    def _():
        h = jnp.maximum(acc_ref[...] + b_ref[...], 0.0)   # H_l = relu(A XW + b)
        # Emit XW_{l+1} = H_l @ W_{l+1} directly so H_l never touches HBM.
        out_ref[...] = jnp.dot(h.astype(jnp.bfloat16), wnext_ref[...],
                               preferred_element_type=jnp.float32
                               ).astype(out_ref.dtype)


def _gcn_agg_proj(a_bf16, xw_bf16, b_f32, wnext_bf16, *, tm, tk, xw_resident,
                  vmem_limit):
    n_pad = a_bf16.shape[0]
    fout = xw_bf16.shape[1]
    fnext = wnext_bf16.shape[1]
    grid = (n_pad // tm, n_pad // tk)

    if xw_resident:
        xw_spec = pl.BlockSpec((n_pad, fout), lambda i, k: (0, 0))
    else:
        xw_spec = pl.BlockSpec((tk, fout), lambda i, k: (k, 0))

    kernel = functools.partial(gcn_agg_proj_kernel, tk=tk, xw_resident=xw_resident)
    return pl.pallas_call(
        kernel,
        out_shape=jax.ShapeDtypeStruct((n_pad, fnext), jnp.bfloat16),
        grid_spec=pltpu.PrefetchScalarGridSpec(
            num_scalar_prefetch=0,
            grid=grid,
            in_specs=[
                pl.BlockSpec((tm, tk), lambda i, k: (i, k)),       # A (streamed)
                xw_spec,                                           # XW
                pl.BlockSpec((1, fout), lambda i, k: (0, 0)),      # bias
                pl.BlockSpec((fout, fnext), lambda i, k: (0, 0)),  # W_{l+1}
            ],
            out_specs=pl.BlockSpec((tm, fnext), lambda i, k: (i, 0)),
            scratch_shapes=[pltpu.VMEM((tm, fout), jnp.float32)],
        ),
        compiler_params=pltpu.CompilerParams(
            dimension_semantics=("parallel", "arbitrary"),
            vmem_limit_bytes=vmem_limit),
    )(a_bf16, xw_bf16, b_f32, wnext_bf16)


# ----------------------------------------------------------------------------
# Kernel 3: final aggregation + fused post_mp (ReLU->Lin->ReLU->Lin) + log_softmax
# ----------------------------------------------------------------------------
def gcn_agg_post_kernel(a_ref, xw_ref, b_ref, wp1_ref, bp1_ref, wp2_ref, bp2_ref,
                        emb_ref, logp_ref, acc_ref, *, tk, xw_resident):
    k = pl.program_id(1)

    @pl.when(k == 0)
    def _():
        acc_ref[...] = jnp.zeros_like(acc_ref)

    acc_ref[...] += jnp.dot(a_ref[...], _read_xw(xw_ref, k, tk, xw_resident),
                            preferred_element_type=jnp.float32)

    @pl.when(k == pl.num_programs(1) - 1)
    def _():
        emb = acc_ref[...] + b_ref[...]            # 3rd conv output (pre-ReLU)
        emb_ref[...] = emb.astype(emb_ref.dtype)
        h = jnp.maximum(emb, 0.0)                  # ReLU from the conv loop
        h = jnp.dot(h.astype(jnp.bfloat16), wp1_ref[...],
                    preferred_element_type=jnp.float32) + bp1_ref[...]
        h = jnp.maximum(h, 0.0)                    # post_mp ReLU (dropout p=0)
        logits = jnp.dot(h.astype(jnp.bfloat16), wp2_ref[...],
                         preferred_element_type=jnp.float32) + bp2_ref[...]
        # log_softmax over classes; padded classes carry a -1e30 bias -> exp==0
        m = jnp.max(logits, axis=1, keepdims=True)
        z = logits - m
        lse = jnp.log(jnp.sum(jnp.exp(z), axis=1, keepdims=True))
        logp_ref[...] = (z - lse).astype(logp_ref.dtype)


def _gcn_agg_post(a_bf16, xw_bf16, b_f32, wp1, bp1, wp2, bp2, *, tm, tk,
                  xw_resident, vmem_limit):
    n_pad = a_bf16.shape[0]
    hid = xw_bf16.shape[1]
    out_pad = wp2.shape[1]
    grid = (n_pad // tm, n_pad // tk)

    if xw_resident:
        xw_spec = pl.BlockSpec((n_pad, hid), lambda i, k: (0, 0))
    else:
        xw_spec = pl.BlockSpec((tk, hid), lambda i, k: (k, 0))

    kernel = functools.partial(gcn_agg_post_kernel, tk=tk, xw_resident=xw_resident)
    return pl.pallas_call(
        kernel,
        out_shape=(jax.ShapeDtypeStruct((n_pad, hid), jnp.float32),
                   jax.ShapeDtypeStruct((n_pad, out_pad), jnp.float32)),
        grid_spec=pltpu.PrefetchScalarGridSpec(
            num_scalar_prefetch=0,
            grid=grid,
            in_specs=[
                pl.BlockSpec((tm, tk), lambda i, k: (i, k)),        # A (streamed)
                xw_spec,                                            # XW3
                pl.BlockSpec((1, hid), lambda i, k: (0, 0)),        # b3
                pl.BlockSpec((hid, hid), lambda i, k: (0, 0)),      # wp1
                pl.BlockSpec((1, hid), lambda i, k: (0, 0)),        # bp1
                pl.BlockSpec((hid, out_pad), lambda i, k: (0, 0)),  # wp2
                pl.BlockSpec((1, out_pad), lambda i, k: (0, 0)),    # bp2
            ],
            out_specs=[pl.BlockSpec((tm, hid), lambda i, k: (i, 0)),
                       pl.BlockSpec((tm, out_pad), lambda i, k: (i, 0))],
            scratch_shapes=[pltpu.VMEM((tm, hid), jnp.float32)],
        ),
        compiler_params=pltpu.CompilerParams(
            dimension_semantics=("parallel", "arbitrary"),
            vmem_limit_bytes=vmem_limit),
    )(a_bf16, xw_bf16, b_f32, wp1, bp1, wp2, bp2)


# ----------------------------------------------------------------------------
# Kernel 4: fully fused small-N path (A read once for all 3 layers + post-MLP)
# ----------------------------------------------------------------------------
def fused_small_kernel(a_ref, x_ref, w1_ref, b1_ref, w2_ref, b2_ref, w3_ref,
                       b3_ref, wp1_ref, bp1_ref, wp2_ref, bp2_ref,
                       emb_ref, logp_ref):
    a = a_ref[...]  # bf16 A_hat, VMEM-resident across all three layers

    def gcn(h_bf16, w_ref, b_ref, relu):
        xw = jnp.dot(h_bf16, w_ref[...], preferred_element_type=jnp.float32)
        out = jnp.dot(a, xw.astype(jnp.bfloat16),
                      preferred_element_type=jnp.float32) + b_ref[...]
        return jnp.maximum(out, 0.0) if relu else out

    h1 = gcn(x_ref[...], w1_ref, b1_ref, True).astype(jnp.bfloat16)
    h2 = gcn(h1, w2_ref, b2_ref, True).astype(jnp.bfloat16)
    emb = gcn(h2, w3_ref, b3_ref, False)
    emb_ref[...] = emb.astype(emb_ref.dtype)

    h = jnp.maximum(emb, 0.0)
    h = jnp.maximum(jnp.dot(h.astype(jnp.bfloat16), wp1_ref[...],
                            preferred_element_type=jnp.float32) + bp1_ref[...],
                    0.0)
    logits = jnp.dot(h.astype(jnp.bfloat16), wp2_ref[...],
                     preferred_element_type=jnp.float32) + bp2_ref[...]
    m = jnp.max(logits, axis=1, keepdims=True)
    z = logits - m
    lse = jnp.log(jnp.sum(jnp.exp(z), axis=1, keepdims=True))
    logp_ref[...] = (z - lse).astype(logp_ref.dtype)


def _fused_small(a_bf16, x_bf16, w1, b1, w2, b2, w3, b3, wp1, bp1, wp2, bp2,
                 *, vmem_limit):
    n_pad = a_bf16.shape[0]
    hid = w3.shape[1]
    out_pad = wp2.shape[1]
    args = (a_bf16, x_bf16, w1, b1, w2, b2, w3, b3, wp1, bp1, wp2, bp2)

    def full_spec(arr):
        return pl.BlockSpec(arr.shape, lambda i: (0, 0))

    return pl.pallas_call(
        fused_small_kernel,
        out_shape=(jax.ShapeDtypeStruct((n_pad, hid), jnp.float32),
                   jax.ShapeDtypeStruct((n_pad, out_pad), jnp.float32)),
        grid_spec=pltpu.PrefetchScalarGridSpec(
            num_scalar_prefetch=0,
            grid=(1,),
            in_specs=[full_spec(a) for a in args],
            out_specs=[pl.BlockSpec((n_pad, hid), lambda i: (0, 0)),
                       pl.BlockSpec((n_pad, out_pad), lambda i: (0, 0))],
        ),
        compiler_params=pltpu.CompilerParams(
            dimension_semantics=("arbitrary",),
            vmem_limit_bytes=vmem_limit),
    )(*args)


# ----------------------------------------------------------------------------
# full forward
# ----------------------------------------------------------------------------
def gnn_stack_forward(a_hat, x, params, *, force_tiled=False,
                      xw_resident_max_bytes=None):
    """Returns (emb, log_probs) matching GNNStack.forward semantics."""
    n, input_dim = x.shape
    hidden = params["w1"].shape[1]
    out_dim = params["wp2"].shape[1]

    fin_pad = _round_up(input_dim, LANE)
    hid_pad = _round_up(hidden, LANE)
    out_pad = _round_up(out_dim, LANE)

    budget = _vmem_budget_bytes()
    small_n_max = 3072 if budget >= (96 << 20) else 2048
    use_fused = (not force_tiled) and (n <= small_n_max)

    if use_fused:
        n_pad = _round_up(n, LANE)
        tm = tk = None
    else:
        n_pad, tm, tk = _plan_tiles(n, budget)

    # Pad + cast at the boundary: bf16 for A_hat / weights / features, f32 biases.
    a_p = _pad2d(a_hat, n_pad, n_pad).astype(jnp.bfloat16)
    x_p = _pad2d(x, n_pad, fin_pad).astype(jnp.bfloat16)

    w1 = _pad2d(params["w1"], fin_pad, hid_pad).astype(jnp.bfloat16)
    w2 = _pad2d(params["w2"], hid_pad, hid_pad).astype(jnp.bfloat16)
    w3 = _pad2d(params["w3"], hid_pad, hid_pad).astype(jnp.bfloat16)
    wp1 = _pad2d(params["wp1"], hid_pad, hid_pad).astype(jnp.bfloat16)
    wp2 = _pad2d(params["wp2"], hid_pad, out_pad).astype(jnp.bfloat16)

    b1 = _pad2d(params["b1"], 1, hid_pad)
    b2 = _pad2d(params["b2"], 1, hid_pad)
    b3 = _pad2d(params["b3"], 1, hid_pad)
    bp1 = _pad2d(params["bp1"], 1, hid_pad)
    bp2 = _pad2d(params["bp2"], 1, out_pad, fill=-1e30)  # kill padded classes

    if use_fused:
        emb_pad, logp_pad = _fused_small(a_p, x_p, w1, b1, w2, b2, w3, b3,
                                         wp1, bp1, wp2, bp2, vmem_limit=budget)
    else:
        if xw_resident_max_bytes is None:
            xw_resident_max_bytes = budget // 3
        # Count a possible double-buffered resident XW block (bf16).
        xw_resident = (2 * n_pad * hid_pad * 2) <= xw_resident_max_bytes

        xw1 = _dense_proj(x_p, w1, tm=tm, vmem_limit=budget)
        xw2 = _gcn_agg_proj(a_p, xw1, b1, w2, tm=tm, tk=tk,
                            xw_resident=xw_resident, vmem_limit=budget)
        xw3 = _gcn_agg_proj(a_p, xw2, b2, w3, tm=tm, tk=tk,
                            xw_resident=xw_resident, vmem_limit=budget)
        emb_pad, logp_pad = _gcn_agg_post(a_p, xw3, b3, wp1, bp1, wp2, bp2,
                                          tm=tm, tk=tk, xw_resident=xw_resident,
                                          vmem_limit=budget)

    return emb_pad[:n, :hidden], logp_pad[:n, :out_dim]


# ----------------------------------------------------------------------------
# graph / params construction (host side) + pure-JAX reference
# ----------------------------------------------------------------------------
def build_normalized_adjacency(edge_index, num_nodes):
    """Dense GCN normalization: A_hat = D^{-1/2} (A + I) D^{-1/2}."""
    src, dst = edge_index[0], edge_index[1]
    adj = jnp.zeros((num_nodes, num_nodes), jnp.float32)
    adj = adj.at[dst, src].add(1.0)                       # message j -> i
    adj = adj + jnp.eye(num_nodes, dtype=jnp.float32)     # self loops
    deg = jnp.sum(adj, axis=1)
    dinv = jnp.where(deg > 0, 1.0 / jnp.sqrt(deg), 0.0)
    return dinv[:, None] * adj * dinv[None, :]


def init_params(key, input_dim, hidden_dim, output_dim):
    ks = jax.random.split(key, 10)

    def lin(k, fan_in, fan_out):
        scale = 1.0 / jnp.sqrt(jnp.float32(fan_in))
        return jax.random.uniform(k, (fan_in, fan_out), jnp.float32, -scale, scale)

    return {
        "w1": lin(ks[0], input_dim, hidden_dim),
        "b1": jnp.zeros((1, hidden_dim), jnp.float32),
        "w2": lin(ks[1], hidden_dim, hidden_dim),
        "b2": jnp.zeros((1, hidden_dim), jnp.float32),
        "w3": lin(ks[2], hidden_dim, hidden_dim),
        "b3": jnp.zeros((1, hidden_dim), jnp.float32),
        "wp1": lin(ks[3], hidden_dim, hidden_dim),
        "bp1": jax.random.uniform(ks[4], (1, hidden_dim), jnp.float32, -0.1, 0.1),
        "wp2": lin(ks[5], hidden_dim, output_dim),
        "bp2": jax.random.uniform(ks[6], (1, output_dim), jnp.float32, -0.1, 0.1),
    }


def gnn_stack_reference(a_hat, x, params):
    """Pure-JAX f32 reference of the same forward pass."""
    def gcn(h, w, b):
        return a_hat @ (h @ w) + b

    h = jnp.maximum(gcn(x, params["w1"], params["b1"]), 0.0)
    h = jnp.maximum(gcn(h, params["w2"], params["b2"]), 0.0)
    emb = gcn(h, params["w3"], params["b3"])
    h = jnp.maximum(emb, 0.0)
    h = jnp.maximum(h @ params["wp1"] + params["bp1"], 0.0)
    logits = h @ params["wp2"] + params["bp2"]
    return emb, jax.nn.log_softmax(logits, axis=1)


if __name__ == "__main__":
    N = 300
    INPUT_DIM = 16
    HIDDEN_DIM = 32
    OUTPUT_DIM = 8

    key = jax.random.PRNGKey(0)
    k_x, k_p = jax.random.split(key)

    # Deterministic node features.
    x = jax.random.normal(k_x, (N, INPUT_DIM), jnp.float32)

    # Deterministic symmetric edge set: ring graph (both directions).
    nodes = jnp.arange(N, dtype=jnp.int32)
    src = jnp.concatenate([nodes, (nodes + 1) % N])
    dst = jnp.concatenate([(nodes + 1) % N, nodes])
    edge_index = jnp.stack([src, dst], axis=0)            # [2, 2N]

    a_hat = build_normalized_adjacency(edge_index, N)
    params = init_params(k_p, INPUT_DIM, HIDDEN_DIM, OUTPUT_DIM)

    emb_ref, logp_ref = gnn_stack_reference(a_hat, x, params)

    # 1) Auto path: small-N fully fused kernel (A read once).
    emb, log_probs = gnn_stack_forward(a_hat, x, params)
    jax.block_until_ready((emb, log_probs))
    assert emb.shape == (N, HIDDEN_DIM)
    assert log_probs.shape == (N, OUTPUT_DIM)
    assert bool(jnp.allclose(jnp.sum(jnp.exp(log_probs), axis=1), 1.0, atol=1e-3))
    assert bool(jnp.max(jnp.abs(emb - emb_ref)) < 0.1)
    assert bool(jnp.max(jnp.abs(log_probs - logp_ref)) < 0.1)

    # 2) Tiled large-N path with VMEM-resident XW (exercised explicitly).
    emb_t, logp_t = gnn_stack_forward(a_hat, x, params, force_tiled=True)
    jax.block_until_ready((emb_t, logp_t))
    assert bool(jnp.max(jnp.abs(emb_t - emb_ref)) < 0.1)
    assert bool(jnp.max(jnp.abs(logp_t - logp_ref)) < 0.1)

    # 3) Tiled path with the k-tiled (non-resident) XW fallback.
    emb_s, logp_s = gnn_stack_forward(a_hat, x, params, force_tiled=True,
                                      xw_resident_max_bytes=0)
    jax.block_until_ready((emb_s, logp_s))
    assert bool(jnp.max(jnp.abs(emb_s - emb_ref)) < 0.1)
    assert bool(jnp.max(jnp.abs(logp_s - logp_ref)) < 0.1)

    print("KERNEL_OK")
</pallas_src>

<mosaic_0001>
module attributes {stable_mosaic.version = 11 : i64} {
  func.func @fused_small_kernel(%arg0: i32, %arg1: memref<384x384xbf16, #tpu.memory_space<vmem>>, %arg2: memref<384x128xbf16, #tpu.memory_space<vmem>>, %arg3: memref<128x128xbf16, #tpu.memory_space<vmem>>, %arg4: memref<1x128xf32, #tpu.memory_space<vmem>>, %arg5: memref<128x128xbf16, #tpu.memory_space<vmem>>, %arg6: memref<1x128xf32, #tpu.memory_space<vmem>>, %arg7: memref<128x128xbf16, #tpu.memory_space<vmem>>, %arg8: memref<1x128xf32, #tpu.memory_space<vmem>>, %arg9: memref<128x128xbf16, #tpu.memory_space<vmem>>, %arg10: memref<1x128xf32, #tpu.memory_space<vmem>>, %arg11: memref<128x128xbf16, #tpu.memory_space<vmem>>, %arg12: memref<1x128xf32, #tpu.memory_space<vmem>>, %arg13: memref<384x128xf32, #tpu.memory_space<vmem>>, %arg14: memref<384x128xf32, #tpu.memory_space<vmem>>) attributes {dimension_semantics = [#tpu.dimension_semantics<arbitrary>], iteration_bounds = array<i64: 1>, scalar_prefetch = 0 : i64, scratch_operands = 0 : i64, tpu.core_type = #tpu.core_type<tc>, window_params = [{pipeline_mode = #tpu.pipeline_mode<synchronous>, transform_indices = @transform_0, window_bounds = array<i64: 384, 384>}, {pipeline_mode = #tpu.pipeline_mode<synchronous>, transform_indices = @transform_1, window_bounds = array<i64: 384, 128>}, {pipeline_mode = #tpu.pipeline_mode<synchronous>, transform_indices = @transform_2, window_bounds = array<i64: 128, 128>}, {pipeline_mode = #tpu.pipeline_mode<synchronous>, transform_indices = @transform_3, window_bounds = array<i64: 1, 128>}, {pipeline_mode = #tpu.pipeline_mode<synchronous>, transform_indices = @transform_4, window_bounds = array<i64: 128, 128>}, {pipeline_mode = #tpu.pipeline_mode<synchronous>, transform_indices = @transform_5, window_bounds = array<i64: 1, 128>}, {pipeline_mode = #tpu.pipeline_mode<synchronous>, transform_indices = @transform_6, window_bounds = array<i64: 128, 128>}, {pipeline_mode = #tpu.pipeline_mode<synchronous>, transform_indices = @transform_7, window_bounds = array<i64: 1, 128>}, {pipeline_mode = #tpu.pipeline_mode<synchronous>, transform_indices = @transform_8, window_bounds = array<i64: 128, 128>}, {pipeline_mode = #tpu.pipeline_mode<synchronous>, transform_indices = @transform_9, window_bounds = array<i64: 1, 128>}, {pipeline_mode = #tpu.pipeline_mode<synchronous>, transform_indices = @transform_10, window_bounds = array<i64: 128, 128>}, {pipeline_mode = #tpu.pipeline_mode<synchronous>, transform_indices = @transform_11, window_bounds = array<i64: 1, 128>}, {pipeline_mode = #tpu.pipeline_mode<synchronous>, transform_indices = @transform_12, window_bounds = array<i64: 384, 128>}, {pipeline_mode = #tpu.pipeline_mode<synchronous>, transform_indices = @transform_13, window_bounds = array<i64: 384, 128>}]} {
    %c0 = arith.constant 0 : index
    %c0_0 = arith.constant 0 : index
    %0 = vector.load %arg1[%c0, %c0_0] : memref<384x384xbf16, #tpu.memory_space<vmem>>, vector<384x384xbf16>
    %c0_1 = arith.constant 0 : index
    %c0_2 = arith.constant 0 : index
    %1 = vector.load %arg2[%c0_1, %c0_2] : memref<384x128xbf16, #tpu.memory_space<vmem>>, vector<384x128xbf16>
    %c0_3 = arith.constant 0 : index
    %c0_4 = arith.constant 0 : index
    %2 = vector.load %arg3[%c0_3, %c0_4] : memref<128x128xbf16, #tpu.memory_space<vmem>>, vector<128x128xbf16>
    %cst = arith.constant dense<0.000000e+00> : vector<384x128xf32>
    %3 = tpu.matmul %1, %2, %cst {dimension_numbers = #tpu.dot_dimension_numbers<[1], [0], [0], [1], [0, 0, 1, 1], [], []>} : vector<384x128xbf16>, vector<128x128xbf16>, vector<384x128xf32> -> vector<384x128xf32>
    %4 = arith.truncf %3 : vector<384x128xf32> to vector<384x128xbf16>
    %cst_5 = arith.constant dense<0.000000e+00> : vector<384x128xf32>
    %5 = tpu.matmul %0, %4, %cst_5 {dimension_numbers = #tpu.dot_dimension_numbers<[1], [0], [0], [1], [0, 0, 1, 1], [], []>} : vector<384x384xbf16>, vector<384x128xbf16>, vector<384x128xf32> -> vector<384x128xf32>
    %c0_6 = arith.constant 0 : index
    %c0_7 = arith.constant 0 : index
    %6 = vector.load %arg4[%c0_6, %c0_7] : memref<1x128xf32, #tpu.memory_space<vmem>>, vector<1x128xf32>
    %7 = vector.broadcast %6 : vector<1x128xf32> to vector<384x128xf32>
    %8 = arith.addf %5, %7 : vector<384x128xf32>
    %cst_8 = arith.constant 0.000000e+00 : f32
    %9 = vector.broadcast %cst_8 : f32 to vector<384x128xf32>
    %10 = arith.maximumf %8, %9 : vector<384x128xf32>
    %11 = arith.truncf %10 : vector<384x128xf32> to vector<384x128xbf16>
    %c0_9 = arith.constant 0 : index
    %c0_10 = arith.constant 0 : index
    %12 = vector.load %arg5[%c0_9, %c0_10] : memref<128x128xbf16, #tpu.memory_space<vmem>>, vector<128x128xbf16>
    %cst_11 = arith.constant dense<0.000000e+00> : vector<384x128xf32>
    %13 = tpu.matmul %11, %12, %cst_11 {dimension_numbers = #tpu.dot_dimension_numbers<[1], [0], [0], [1], [0, 0, 1, 1], [], []>} : vector<384x128xbf16>, vector<128x128xbf16>, vector<384x128xf32> -> vector<384x128xf32>
    %14 = arith.truncf %13 : vector<384x128xf32> to vector<384x128xbf16>
    %cst_12 = arith.constant dense<0.000000e+00> : vector<384x128xf32>
    %15 = tpu.matmul %0, %14, %cst_12 {dimension_numbers = #tpu.dot_dimension_numbers<[1], [0], [0], [1], [0, 0, 1, 1], [], []>} : vector<384x384xbf16>, vector<384x128xbf16>, vector<384x128xf32> -> vector<384x128xf32>
    %c0_13 = arith.constant 0 : index
    %c0_14 = arith.constant 0 : index
    %16 = vector.load %arg6[%c0_13, %c0_14] : memref<1x128xf32, #tpu.memory_space<vmem>>, vector<1x128xf32>
    %17 = vector.broadcast %16 : vector<1x128xf32> to vector<384x128xf32>
    %18 = arith.addf %15, %17 : vector<384x128xf32>
    %cst_15 = arith.constant 0.000000e+00 : f32
    %19 = vector.broadcast %cst_15 : f32 to vector<384x128xf32>
    %20 = arith.maximumf %18, %19 : vector<384x128xf32>
    %21 = arith.truncf %20 : vector<384x128xf32> to vector<384x128xbf16>
    %c0_16 = arith.constant 0 : index
    %c0_17 = arith.constant 0 : index
    %22 = vector.load %arg7[%c0_16, %c0_17] : memref<128x128xbf16, #tpu.memory_space<vmem>>, vector<128x128xbf16>
    %cst_18 = arith.constant dense<0.000000e+00> : vector<384x128xf32>
    %23 = tpu.matmul %21, %22, %cst_18 {dimension_numbers = #tpu.dot_dimension_numbers<[1], [0], [0], [1], [0, 0, 1, 1], [], []>} : vector<384x128xbf16>, vector<128x128xbf16>, vector<384x128xf32> -> vector<384x128xf32>
    %24 = arith.truncf %23 : vector<384x128xf32> to vector<384x128xbf16>
    %cst_19 = arith.constant dense<0.000000e+00> : vector<384x128xf32>
    %25 = tpu.matmul %0, %24, %cst_19 {dimension_numbers = #tpu.dot_dimension_numbers<[1], [0], [0], [1], [0, 0, 1, 1], [], []>} : vector<384x384xbf16>, vector<384x128xbf16>, vector<384x128xf32> -> vector<384x128xf32>
    %c0_20 = arith.constant 0 : index
    %c0_21 = arith.constant 0 : index
    %26 = vector.load %arg8[%c0_20, %c0_21] : memref<1x128xf32, #tpu.memory_space<vmem>>, vector<1x128xf32>
    %27 = vector.broadcast %26 : vector<1x128xf32> to vector<384x128xf32>
    %28 = arith.addf %25, %27 : vector<384x128xf32>
    %c0_22 = arith.constant 0 : index
    %c0_23 = arith.constant 0 : index
    %29 = vector.load %arg13[%c0_22, %c0_23] : memref<384x128xf32, #tpu.memory_space<vmem>>, vector<384x128xf32>
    tpu.vector_store %arg13[%c0_22, %c0_23], %28 {strides = array<i32>} : memref<384x128xf32, #tpu.memory_space<vmem>>, vector<384x128xf32>,
    %cst_24 = arith.constant 0.000000e+00 : f32
    %30 = vector.broadcast %cst_24 : f32 to vector<384x128xf32>
    %31 = arith.maximumf %28, %30 : vector<384x128xf32>
    %32 = arith.truncf %31 : vector<384x128xf32> to vector<384x128xbf16>
    %c0_25 = arith.constant 0 : index
    %c0_26 = arith.constant 0 : index
    %33 = vector.load %arg9[%c0_25, %c0_26] : memref<128x128xbf16, #tpu.memory_space<vmem>>, vector<128x128xbf16>
    %cst_27 = arith.constant dense<0.000000e+00> : vector<384x128xf32>
    %34 = tpu.matmul %32, %33, %cst_27 {dimension_numbers = #tpu.dot_dimension_numbers<[1], [0], [0], [1], [0, 0, 1, 1], [], []>} : vector<384x128xbf16>, vector<128x128xbf16>, vector<384x128xf32> -> vector<384x128xf32>
    %c0_28 = arith.constant 0 : index
    %c0_29 = arith.constant 0 : index
    %35 = vector.load %arg10[%c0_28, %c0_29] : memref<1x128xf32, #tpu.memory_space<vmem>>, vector<1x128xf32>
    %36 = vector.broadcast %35 : vector<1x128xf32> to vector<384x128xf32>
    %37 = arith.addf %34, %36 : vector<384x128xf32>
    %cst_30 = arith.constant 0.000000e+00 : f32
    %38 = vector.broadcast %cst_30 : f32 to vector<384x128xf32>
    %39 = arith.maximumf %37, %38 : vector<384x128xf32>
    %40 = arith.truncf %39 : vector<384x128xf32> to vector<384x128xbf16>
    %c0_31 = arith.constant 0 : index
    %c0_32 = arith.constant 0 : index
    %41 = vector.load %arg11[%c0_31, %c0_32] : memref<128x128xbf16, #tpu.memory_space<vmem>>, vector<128x128xbf16>
    %cst_33 = arith.constant dense<0.000000e+00> : vector<384x128xf32>
    %42 = tpu.matmul %40, %41, %cst_33 {dimension_numbers = #tpu.dot_dimension_numbers<[1], [0], [0], [1], [0, 0, 1, 1], [], []>} : vector<384x128xbf16>, vector<128x128xbf16>, vector<384x128xf32> -> vector<384x128xf32>
    %c0_34 = arith.constant 0 : index
    %c0_35 = arith.constant 0 : index
    %43 = vector.load %arg12[%c0_34, %c0_35] : memref<1x128xf32, #tpu.memory_space<vmem>>, vector<1x128xf32>
    %44 = vector.broadcast %43 : vector<1x128xf32> to vector<384x128xf32>
    %45 = arith.addf %42, %44 : vector<384x128xf32>
    %cst_36 = arith.constant dense<0xFF800000> : vector<384xf32>
    %46 = vector.multi_reduction <maximumf>, %45, %cst_36 [1] : vector<384x128xf32> to vector<384xf32>
    %47 = vector.shape_cast %46 : vector<384xf32> to vector<384x1xf32>
    %48 = vector.broadcast %47 : vector<384x1xf32> to vector<384x128xf32>
    %49 = arith.subf %45, %48 : vector<384x128xf32>
    %50 = math.exp %49 : vector<384x128xf32>
    %cst_37 = arith.constant dense<0.000000e+00> : vector<384xf32>
    %51 = vector.multi_reduction <add>, %50, %cst_37 [1] : vector<384x128xf32> to vector<384xf32>
    %52 = vector.shape_cast %51 : vector<384xf32> to vector<384x1xf32>
    %53 = math.log %52 : vector<384x1xf32>
    %54 = vector.broadcast %53 : vector<384x1xf32> to vector<384x128xf32>
    %55 = arith.subf %49, %54 : vector<384x128xf32>
    %c0_38 = arith.constant 0 : index
    %c0_39 = arith.constant 0 : index
    %56 = vector.load %arg14[%c0_38, %c0_39] : memref<384x128xf32, #tpu.memory_space<vmem>>, vector<384x128xf32>
    tpu.vector_store %arg14[%c0_38, %c0_39], %55 {strides = array<i32>} : memref<384x128xf32, #tpu.memory_space<vmem>>, vector<384x128xf32>,
    return
  }
  func.func @transform_0(%arg0: i32) -> (i32, i32) {
    %c0_i32 = arith.constant 0 : i32
    %c0_i32_0 = arith.constant 0 : i32
    %c0_i32_1 = arith.constant 0 : i32
    return %c0_i32, %c0_i32_0 : i32, i32
  }
  func.func @transform_1(%arg0: i32) -> (i32, i32) {
    %c0_i32 = arith.constant 0 : i32
    %c0_i32_0 = arith.constant 0 : i32
    %c0_i32_1 = arith.constant 0 : i32
    return %c0_i32, %c0_i32_0 : i32, i32
  }
  func.func @transform_2(%arg0: i32) -> (i32, i32) {
    %c0_i32 = arith.constant 0 : i32
    %c0_i32_0 = arith.constant 0 : i32
    %c0_i32_1 = arith.constant 0 : i32
    return %c0_i32, %c0_i32_0 : i32, i32
  }
  func.func @transform_3(%arg0: i32) -> (i32, i32) {
    %c0_i32 = arith.constant 0 : i32
    %c0_i32_0 = arith.constant 0 : i32
    %c0_i32_1 = arith.constant 0 : i32
    return %c0_i32, %c0_i32_0 : i32, i32
  }
  func.func @transform_4(%arg0: i32) -> (i32, i32) {
    %c0_i32 = arith.constant 0 : i32
    %c0_i32_0 = arith.constant 0 : i32
    %c0_i32_1 = arith.constant 0 : i32
    return %c0_i32, %c0_i32_0 : i32, i32
  }
  func.func @transform_5(%arg0: i32) -> (i32, i32) {
    %c0_i32 = arith.constant 0 : i32
    %c0_i32_0 = arith.constant 0 : i32
    %c0_i32_1 = arith.constant 0 : i32
    return %c0_i32, %c0_i32_0 : i32, i32
  }
  func.func @transform_6(%arg0: i32) -> (i32, i32) {
    %c0_i32 = arith.constant 0 : i32
    %c0_i32_0 = arith.constant 0 : i32
    %c0_i32_1 = arith.constant 0 : i32
    return %c0_i32, %c0_i32_0 : i32, i32
  }
  func.func @transform_7(%arg0: i32) -> (i32, i32) {
    %c0_i32 = arith.constant 0 : i32
    %c0_i32_0 = arith.constant 0 : i32
    %c0_i32_1 = arith.constant 0 : i32
    return %c0_i32, %c0_i32_0 : i32, i32
  }
  func.func @transform_8(%arg0: i32) -> (i32, i32) {
    %c0_i32 = arith.constant 0 : i32
    %c0_i32_0 = arith.constant 0 : i32
    %c0_i32_1 = arith.constant 0 : i32
    return %c0_i32, %c0_i32_0 : i32, i32
  }
  func.func @transform_9(%arg0: i32) -> (i32, i32) {
    %c0_i32 = arith.constant 0 : i32
    %c0_i32_0 = arith.constant 0 : i32
    %c0_i32_1 = arith.constant 0 : i32
    return %c0_i32, %c0_i32_0 : i32, i32
  }
  func.func @transform_10(%arg0: i32) -> (i32, i32) {
    %c0_i32 = arith.constant 0 : i32
    %c0_i32_0 = arith.constant 0 : i32
    %c0_i32_1 = arith.constant 0 : i32
    return %c0_i32, %c0_i32_0 : i32, i32
  }
  func.func @transform_11(%arg0: i32) -> (i32, i32) {
    %c0_i32 = arith.constant 0 : i32
    %c0_i32_0 = arith.constant 0 : i32
    %c0_i32_1 = arith.constant 0 : i32
    return %c0_i32, %c0_i32_0 : i32, i32
  }
  func.func @transform_12(%arg0: i32) -> (i32, i32) {
    %c0_i32 = arith.constant 0 : i32
    %c0_i32_0 = arith.constant 0 : i32
    %c0_i32_1 = arith.constant 0 : i32
    return %c0_i32, %c0_i32_0 : i32, i32
  }
  func.func @transform_13(%arg0: i32) -> (i32, i32) {
    %c0_i32 = arith.constant 0 : i32
    %c0_i32_0 = arith.constant 0 : i32
    %c0_i32_1 = arith.constant 0 : i32
    return %c0_i32, %c0_i32_0 : i32, i32
  }
}

</mosaic_0001>

<llo_original>
// kernel: tpu_custom_call.1
$region0: #{tpu_custom_call.1}
  #allocation0 [shape = 'u32[]', space=smem, size = 0x4, offset = 0x4, fixed_abs, tag = 'smem constant byte address 0x4 - core index']
  #allocation1 [shape = 'u32[144,128]{1,0:T(1,128)}', space=vmem, size = 0x12000, scoped, tag = 'internal scratch']
  %s0 = inlined_call_operand.hbm [shape: bf16[384,384], index: 0, kind: input, shape index: {}]
  %s1 = inlined_call_operand.hbm [shape: bf16[384,128], index: 1, kind: input, shape index: {}]
  %s2 = inlined_call_operand.hbm [shape: bf16[128,128], index: 2, kind: input, shape index: {}]
  %s3 = inlined_call_operand.vmem [shape: f32[1,128], index: 3, kind: input, shape index: {}]
  %s4 = inlined_call_operand.hbm [shape: bf16[128,128], index: 4, kind: input, shape index: {}]
  %s5 = inlined_call_operand.vmem [shape: f32[1,128], index: 5, kind: input, shape index: {}]
  %s6 = inlined_call_operand.hbm [shape: bf16[128,128], index: 6, kind: input, shape index: {}]
  %s7 = inlined_call_operand.vmem [shape: f32[1,128], index: 7, kind: input, shape index: {}]
  %s8 = inlined_call_operand.hbm [shape: bf16[128,128], index: 8, kind: input, shape index: {}]
  %s9 = inlined_call_operand.vmem [shape: f32[1,128], index: 9, kind: input, shape index: {}]
  %s10 = inlined_call_operand.hbm [shape: bf16[128,128], index: 10, kind: input, shape index: {}]
  %s11 = inlined_call_operand.vmem [shape: f32[1,128], index: 11, kind: input, shape index: {}]
  %s12 = inlined_call_operand.hbm [shape: f32[384,128], index: 12, kind: output, shape index: {0}]
  %s13 = inlined_call_operand.hbm [shape: f32[384,128], index: 13, kind: output, shape index: {1}]
  %14 = xla_tuple %s12, %s13
  %s15 = sld [smem:[#allocation0]]
  $region94: #{tpu_custom_call.1} parent=0
    _
  %s17 = ssub.s32 1, %s15
  %s18 = scalar_select 0, %s17, %s15
  $region1: #{tpu_custom_call.1} parent=0
    #allocation2 [shape = 'u8[294912]{0}', space=vmem, size = 0x48000, scoped, tag = 'input window, operand 0, single buffered']
    #allocation3 [shape = 's32[1]{0}', space=sflag, size = 0x4, scoped, tag = 'scoped memory for tpu_custom_call.1']
    #allocation4 [shape = 's32[1]{0}', space=sflag, size = 0x4, scoped, tag = 'scoped memory for tpu_custom_call.1']
    #allocation5 [shape = 'u8[98304]{0}', space=vmem, size = 0x18000, scoped, tag = 'input window, operand 1, single buffered']
    #allocation6 [shape = 's32[1]{0}', space=sflag, size = 0x4, scoped, tag = 'scoped memory for tpu_custom_call.1']
    #allocation7 [shape = 'u8[32768]{0}', space=vmem, size = 0x8000, scoped, tag = 'input window, operand 2, single buffered']
    #allocation8 [shape = 'u8[32768]{0}', space=vmem, size = 0x8000, scoped, tag = 'input window, operand 4, single buffered']
    #allocation9 [shape = 's32[1]{0}', space=sflag, size = 0x4, scoped, tag = 'scoped memory for tpu_custom_call.1']
    #allocation10 [shape = 'u8[32768]{0}', space=vmem, size = 0x8000, scoped, tag = 'input window, operand 6, single buffered']
    #allocation11 [shape = 'u8[32768]{0}', space=vmem, size = 0x8000, scoped, tag = 'input window, operand 8, single buffered']
    #allocation12 [shape = 's32[1]{0}', space=sflag, size = 0x4, scoped, tag = 'scoped memory for tpu_custom_call.1']
    #allocation13 [shape = 'u8[32768]{0}', space=vmem, size = 0x8000, scoped, tag = 'input window, operand 10, single buffered']
    #allocation14 [shape = 'u8[196608]{0}', space=vmem, size = 0x30000, scoped, tag = 'output window, operand 0, single buffered']
    #allocation15 [shape = 'u8[196608]{0}', space=vmem, size = 0x30000, scoped, tag = 'output window, operand 1, single buffered']
    #allocation16 [shape = 's32[1]{0}', space=sflag, size = 0x4, scoped, tag = 'scoped memory for tpu_custom_call.1']
    %19 = vsyncpa [#allocation3], 0
    %20 = vsyncpa [#allocation6], 0
    %21 = vsyncpa [#allocation9], 0
    %22 = vsyncpa [#allocation12], 0
    %23 = vsyncpa [#allocation4], 0
    %24 = vsyncpa [#allocation16], 0
    // Predicated region
    $region2: #{tpu_custom_call.1} parent=1 // pred_check
      _
    $region3: #{tpu_custom_call.1} parent=1 // pred_check_branch
      %26 = sbr.rel (0) target = $region5
    $region4: #{tpu_custom_call.1} parent=1 // pred_region
      %s28 = ssub.s32 9216, 9216
      %29 = vsyncadd [#allocation3], %s28
      %s30 = sshll.u32 [#allocation2], 4
      %s31 = int_to_ptr.vmem [resolvable:$true] %s30
      %36 = dma.hbm_to_vmem [thread:$0]  %s0, 9216, %s31, [#allocation3], 192, 192, 12
    $region5: #{tpu_custom_call.1} parent=1 // pred_fallthru
      _
    // Predicated region
    $region6: #{tpu_custom_call.1} parent=1 // pred_check
      _
    $region7: #{tpu_custom_call.1} parent=1 // pred_check_branch
      %38 = sbr.rel (0) target = $region9
    $region8: #{tpu_custom_call.1} parent=1 // pred_region
      %s40 = ssub.s32 3072, 3072
      %41 = vsyncadd [#allocation6], %s40
      %s42 = sshll.u32 [#allocation5], 4
      %s43 = int_to_ptr.vmem [resolvable:$true] %s42
      %48 = dma.hbm_to_vmem [thread:$0]  %s1, 3072, %s43, [#allocation6], 64, 64, 4
    $region9: #{tpu_custom_call.1} parent=1 // pred_fallthru
      _
    // Predicated region
    $region10: #{tpu_custom_call.1} parent=1 // pred_check
      _
    $region11: #{tpu_custom_call.1} parent=1 // pred_check_branch
      %50 = sbr.rel (0) target = $region13
    $region12: #{tpu_custom_call.1} parent=1 // pred_region
      %s52 = ssub.s32 1024, 1024
      %53 = vsyncadd [#allocation6], %s52
      %s54 = sshll.u32 [#allocation7], 4
      %s55 = int_to_ptr.vmem [resolvable:$true] %s54
      %60 = dma.hbm_to_vmem [thread:$0]  %s2, 1024, %s55, [#allocation6], 64, 64, 4
    $region13: #{tpu_custom_call.1} parent=1 // pred_fallthru
      _
    // Predicated region
    $region14: #{tpu_custom_call.1} parent=1 // pred_check
      _
    $region15: #{tpu_custom_call.1} parent=1 // pred_check_branch
      %62 = sbr.rel (0) target = $region17
    $region16: #{tpu_custom_call.1} parent=1 // pred_region
      _
    $region17: #{tpu_custom_call.1} parent=1 // pred_fallthru
      _
    // Predicated region
    $region18: #{tpu_custom_call.1} parent=1 // pred_check
      _
    $region19: #{tpu_custom_call.1} parent=1 // pred_check_branch
      %64 = sbr.rel (0) target = $region21
    $region20: #{tpu_custom_call.1} parent=1 // pred_region
      %s66 = ssub.s32 1024, 1024
      %67 = vsyncadd [#allocation9], %s66
      %s68 = sshll.u32 [#allocation8], 4
      %s69 = int_to_ptr.vmem [resolvable:$true] %s68
      %74 = dma.hbm_to_vmem [thread:$0]  %s4, 1024, %s69, [#allocation9], 64, 64, 4
    $region21: #{tpu_custom_call.1} parent=1 // pred_fallthru
      _
    // Predicated region
    $region22: #{tpu_custom_call.1} parent=1 // pred_check
      _
    $region23: #{tpu_custom_call.1} parent=1 // pred_check_branch
      %76 = sbr.rel (0) target = $region25
    $region24: #{tpu_custom_call.1} parent=1 // pred_region
      _
    $region25: #{tpu_custom_call.1} parent=1 // pred_fallthru
      _
    // Predicated region
    $region26: #{tpu_custom_call.1} parent=1 // pred_check
      _
    $region27: #{tpu_custom_call.1} parent=1 // pred_check_branch
      %78 = sbr.rel (0) target = $region29
    $region28: #{tpu_custom_call.1} parent=1 // pred_region
      %s80 = ssub.s32 1024, 1024
      %81 = vsyncadd [#allocation9], %s80
      %s82 = sshll.u32 [#allocation10], 4
      %s83 = int_to_ptr.vmem [resolvable:$true] %s82
      %88 = dma.hbm_to_vmem [thread:$0]  %s6, 1024, %s83, [#allocation9], 64, 64, 4
    $region29: #{tpu_custom_call.1} parent=1 // pred_fallthru
      _
    // Predicated region
    $region30: #{tpu_custom_call.1} parent=1 // pred_check
      _
    $region31: #{tpu_custom_call.1} parent=1 // pred_check_branch
      %90 = sbr.rel (0) target = $region33
    $region32: #{tpu_custom_call.1} parent=1 // pred_region
      _
    $region33: #{tpu_custom_call.1} parent=1 // pred_fallthru
      _
    // Predicated region
    $region34: #{tpu_custom_call.1} parent=1 // pred_check
      _
    $region35: #{tpu_custom_call.1} parent=1 // pred_check_branch
      %92 = sbr.rel (0) target = $region37
    $region36: #{tpu_custom_call.1} parent=1 // pred_region
      %s94 = ssub.s32 1024, 1024
      %95 = vsyncadd [#allocation12], %s94
      %s96 = sshll.u32 [#allocation11], 4
      %s97 = int_to_ptr.vmem [resolvable:$true] %s96
      %102 = dma.hbm_to_vmem [thread:$0]  %s8, 1024, %s97, [#allocation12], 64, 64, 4
    $region37: #{tpu_custom_call.1} parent=1 // pred_fallthru
      _
    // Predicated region
    $region38: #{tpu_custom_call.1} parent=1 // pred_check
      _
    $region39: #{tpu_custom_call.1} parent=1 // pred_check_branch
      %104 = sbr.rel (0) target = $region41
    $region40: #{tpu_custom_call.1} parent=1 // pred_region
      _
    $region41: #{tpu_custom_call.1} parent=1 // pred_fallthru
      _
    // Predicated region
    $region42: #{tpu_custom_call.1} parent=1 // pred_check
      _
    $region43: #{tpu_custom_call.1} parent=1 // pred_check_branch
      %106 = sbr.rel (0) target = $region45
    $region44: #{tpu_custom_call.1} parent=1 // pred_region
      %s108 = ssub.s32 1024, 1024
      %109 = vsyncadd [#allocation12], %s108
      %s110 = sshll.u32 [#allocation13], 4
      %s111 = int_to_ptr.vmem [resolvable:$true] %s110
      %116 = dma.hbm_to_vmem [thread:$0]  %s10, 1024, %s111, [#allocation12], 64, 64, 4
    $region45: #{tpu_custom_call.1} parent=1 // pred_fallthru
      _
    // Predicated region
    $region46: #{tpu_custom_call.1} parent=1 // pred_check
      _
    $region47: #{tpu_custom_call.1} parent=1 // pred_check_branch
      %118 = sbr.rel (0) target = $region49
    $region48: #{tpu_custom_call.1} parent=1 // pred_region
      _
    $region49: #{tpu_custom_call.1} parent=1 // pred_fallthru
      _
    // Predicated region
    $region50: #{tpu_custom_call.1} parent=1 // pred_check
      _
    $region51: #{tpu_custom_call.1} parent=1 // pred_check_branch
      %120 = sbr.rel (0) target = $region53
    $region52: #{tpu_custom_call.1} parent=1 // pred_region
      %121 = dma.done [#allocation3], 9216
    $region53: #{tpu_custom_call.1} parent=1 // pred_fallthru
      _
    // Predicated region
    $region54: #{tpu_custom_call.1} parent=1 // pred_check
      _
    $region55: #{tpu_custom_call.1} parent=1 // pred_check_branch
      %123 = sbr.rel (0) target = $region57
    $region56: #{tpu_custom_call.1} parent=1 // pred_region
      %124 = dma.done [#allocation6], 3072
    $region57: #{tpu_custom_call.1} parent=1 // pred_fallthru
      _
    // Predicated region
    $region58: #{tpu_custom_call.1} parent=1 // pred_check
      _
    $region59: #{tpu_custom_call.1} parent=1 // pred_check_branch
      %126 = sbr.rel (0) target = $region61
    $region60: #{tpu_custom_call.1} parent=1 // pred_region
      %127 = dma.done [#allocation6], 1024
    $region61: #{tpu_custom_call.1} parent=1 // pred_fallthru
      _
    // Predicated region
    $region62: #{tpu_custom_call.1} parent=1 // pred_check
      _
    $region63: #{tpu_custom_call.1} parent=1 // pred_check_branch
      %129 = sbr.rel (0) target = $region65
    $region64: #{tpu_custom_call.1} parent=1 // pred_region
      %130 = dma.done [#allocation9], 1024
    $region65: #{tpu_custom_call.1} parent=1 // pred_fallthru
      _
    // Predicated region
    $region66: #{tpu_custom_call.1} parent=1 // pred_check
      _
    $region67: #{tpu_custom_call.1} parent=1 // pred_check_branch
      %132 = sbr.rel (0) target = $region69
    $region68: #{tpu_custom_call.1} parent=1 // pred_region
      %133 = dma.done [#allocation9], 1024
    $region69: #{tpu_custom_call.1} parent=1 // pred_fallthru
      _
    // Predicated region
    $region70: #{tpu_custom_call.1} parent=1 // pred_check
      _
    $region71: #{tpu_custom_call.1} parent=1 // pred_check_branch
      %135 = sbr.rel (0) target = $region73
    $region72: #{tpu_custom_call.1} parent=1 // pred_region
      %136 = dma.done [#allocation12], 1024
    $region73: #{tpu_custom_call.1} parent=1 // pred_fallthru
      _
    // Predicated region
    $region74: #{tpu_custom_call.1} parent=1 // pred_check
      _
    $region75: #{tpu_custom_call.1} parent=1 // pred_check_branch
      %138 = sbr.rel (0) target = $region77
    $region76: #{tpu_custom_call.1} parent=1 // pred_region
      %139 = dma.done [#allocation12], 1024
    $region77: #{tpu_custom_call.1} parent=1 // pred_fallthru
      _
    %v141 = vld [vmem:[#allocation2] sm:$0xff]
    %v142 = vld [vmem:[#allocation2 + $0x8] sm:$0xf]
    %v143 = vld [vmem:[#allocation2 + $0xc] sm:$0xff]
    %v144 = vld [vmem:[#allocation2 + $0x14] sm:$0xf]
    %v145 = vld [vmem:[#allocation2 + $0x18] sm:$0xff]
    %v146 = vld [vmem:[#allocation2 + $0x20] sm:$0xf]
    %v147 = vld [vmem:[#allocation2 + $0x24] sm:$0xff]
    %v148 = vld [vmem:[#allocation2 + $0x2c] sm:$0xf]
    %v149 = vld [vmem:[#allocation2 + $0x30] sm:$0xff]
    %v150 = vld [vmem:[#allocation2 + $0x38] sm:$0xf]
    %v151 = vld [vmem:[#allocation2 + $0x3c] sm:$0xff]
    %v152 = vld [vmem:[#allocation2 + $0x44] sm:$0xf]
    %v153 = vld [vmem:[#allocation2 + $0x48] sm:$0xff]
    %v154 = vld [vmem:[#allocation2 + $0x50] sm:$0xf]
    %v155 = vld [vmem:[#allocation2 + $0x54] sm:$0xff]
    %v156 = vld [vmem:[#allocation2 + $0x5c] sm:$0xf]
    %v157 = vld [vmem:[#allocation2 + $0x60] sm:$0xff]
    %v158 = vld [vmem:[#allocation2 + $0x68] sm:$0xf]
    %v159 = vld [vmem:[#allocation2 + $0x6c] sm:$0xff]
    %v160 = vld [vmem:[#allocation2 + $0x74] sm:$0xf]
    %v161 = vld [vmem:[#allocation2 + $0x78] sm:$0xff]
    %v162 = vld [vmem:[#allocation2 + $0x80] sm:$0xf]
    %v163 = vld [vmem:[#allocation2 + $0x84] sm:$0xff]
    %v164 = vld [vmem:[#allocation2 + $0x8c] sm:$0xf]
    %v165 = vld [vmem:[#allocation2 + $0x90] sm:$0xff]
    %v166 = vld [vmem:[#allocation2 + $0x98] sm:$0xf]
    %v167 = vld [vmem:[#allocation2 + $0x9c] sm:$0xff]
    %v168 = vld [vmem:[#allocation2 + $0xa4] sm:$0xf]
    %v169 = vld [vmem:[#allocation2 + $0xa8] sm:$0xff]
    %v170 = vld [vmem:[#allocation2 + $0xb0] sm:$0xf]
    %v171 = vld [vmem:[#allocation2 + $0xb4] sm:$0xff]
    %v172 = vld [vmem:[#allocation2 + $0xbc] sm:$0xf]
    %v173 = vld [vmem:[#allocation2 + $0xc0] sm:$0xff]
    %v174 = vld [vmem:[#allocation2 + $0xc8] sm:$0xf]
    %v175 = vld [vmem:[#allocation2 + $0xcc] sm:$0xff]
    %v176 = vld [vmem:[#allocation2 + $0xd4] sm:$0xf]
    %v177 = vld [vmem:[#allocation2 + $0xd8] sm:$0xff]
    %v178 = vld [vmem:[#allocation2 + $0xe0] sm:$0xf]
    %v179 = vld [vmem:[#allocation2 + $0xe4] sm:$0xff]
    %v180 = vld [vmem:[#allocation2 + $0xec] sm:$0xf]
    %v181 = vld [vmem:[#allocation2 + $0xf0] sm:$0xff]
    %v182 = vld [vmem:[#allocation2 + $0xf8] sm:$0xf]
    %v183 = vld [vmem:[#allocation2 + $0xfc] sm:$0xff]
    %v184 = vld [vmem:[#allocation2 + $0x104] sm:$0xf]
    %v185 = vld [vmem:[#allocation2 + $0x108] sm:$0xff]
    %v186 = vld [vmem:[#allocation2 + $0x110] sm:$0xf]
    %v187 = vld [vmem:[#allocation2 + $0x114] sm:$0xff]
    %v188 = vld [vmem:[#allocation2 + $0x11c] sm:$0xf]
    %v189 = vld [vmem:[#allocation2 + $0x120] sm:$0xff]
    %v190 = vld [vmem:[#allocation2 + $0x128] sm:$0xf]
    %v191 = vld [vmem:[#allocation2 + $0x12c] sm:$0xff]
    %v192 = vld [vmem:[#allocation2 + $0x134] sm:$0xf]
    %v193 = vld [vmem:[#allocation2 + $0x138] sm:$0xff]
    %v194 = vld [vmem:[#allocation2 + $0x140] sm:$0xf]
    %v195 = vld [vmem:[#allocation2 + $0x144] sm:$0xff]
    %v196 = vld [vmem:[#allocation2 + $0x14c] sm:$0xf]
    %v197 = vld [vmem:[#allocation2 + $0x150] sm:$0xff]
    %v198 = vld [vmem:[#allocation2 + $0x158] sm:$0xf]
    %v199 = vld [vmem:[#allocation2 + $0x15c] sm:$0xff]
    %v200 = vld [vmem:[#allocation2 + $0x164] sm:$0xf]
    %v201 = vld [vmem:[#allocation2 + $0x168] sm:$0xff]
    %v202 = vld [vmem:[#allocation2 + $0x170] sm:$0xf]
    %v203 = vld [vmem:[#allocation2 + $0x174] sm:$0xff]
    %v204 = vld [vmem:[#allocation2 + $0x17c] sm:$0xf]
    %v205 = vld [vmem:[#allocation2 + $0x180] sm:$0xff]
    %v206 = vld [vmem:[#allocation2 + $0x188] sm:$0xf]
    %v207 = vld [vmem:[#allocation2 + $0x18c] sm:$0xff]
    %v208 = vld [vmem:[#allocation2 + $0x194] sm:$0xf]
    %v209 = vld [vmem:[#allocation2 + $0x198] sm:$0xff]
    %v210 = vld [vmem:[#allocation2 + $0x1a0] sm:$0xf]
    %v211 = vld [vmem:[#allocation2 + $0x1a4] sm:$0xff]
    %v212 = vld [vmem:[#allocation2 + $0x1ac] sm:$0xf]
    %v213 = vld [vmem:[#allocation2 + $0x1b0] sm:$0xff]
    %v214 = vld [vmem:[#allocation2 + $0x1b8] sm:$0xf]
    %v215 = vld [vmem:[#allocation2 + $0x1bc] sm:$0xff]
    %v216 = vld [vmem:[#allocation2 + $0x1c4] sm:$0xf]
    %v217 = vld [vmem:[#allocation2 + $0x1c8] sm:$0xff]
    %v218 = vld [vmem:[#allocation2 + $0x1d0] sm:$0xf]
    %v219 = vld [vmem:[#allocation2 + $0x1d4] sm:$0xff]
    %v220 = vld [vmem:[#allocation2 + $0x1dc] sm:$0xf]
    %v221 = vld [vmem:[#allocation2 + $0x1e0] sm:$0xff]
    %v222 = vld [vmem:[#allocation2 + $0x1e8] sm:$0xf]
    %v223 = vld [vmem:[#allocation2 + $0x1ec] sm:$0xff]
    %v224 = vld [vmem:[#allocation2 + $0x1f4] sm:$0xf]
    %v225 = vld [vmem:[#allocation2 + $0x1f8] sm:$0xff]
    %v226 = vld [vmem:[#allocation2 + $0x200] sm:$0xf]
    %v227 = vld [vmem:[#allocation2 + $0x204] sm:$0xff]
    %v228 = vld [vmem:[#allocation2 + $0x20c] sm:$0xf]
    %v229 = vld [vmem:[#allocation2 + $0x210] sm:$0xff]
    %v230 = vld [vmem:[#allocation2 + $0x218] sm:$0xf]
    %v231 = vld [vmem:[#allocation2 + $0x21c] sm:$0xff]
    %v232 = vld [vmem:[#allocation2 + $0x224] sm:$0xf]
    %v233 = vld [vmem:[#allocation2 + $0x228] sm:$0xff]
    %v234 = vld [vmem:[#allocation2 + $0x230] sm:$0xf]
    %v235 = vld [vmem:[#allocation2 + $0x234] sm:$0xff]
    %v236 = vld [vmem:[#allocation2 + $0x23c] sm:$0xf]
    %v237 = vld [vmem:[#allocation5] sm:$0xf]
    %v238 = vld [vmem:[#allocation5 + $0x4] sm:$0xf]
    %v239 = vld [vmem:[#allocation5 + $0x8] sm:$0xf]
    %v240 = vld [vmem:[#allocation5 + $0xc] sm:$0xf]
    %v241 = vld [vmem:[#allocation5 + $0x10] sm:$0xf]
    %v242 = vld [vmem:[#allocation5 + $0x14] sm:$0xf]
    %v243 = vld [vmem:[#allocation5 + $0x18] sm:$0xf]
    %v244 = vld [vmem:[#allocation5 + $0x1c] sm:$0xf]
    %v245 = vld [vmem:[#allocation5 + $0x20] sm:$0xf]
    %v246 = vld [vmem:[#allocation5 + $0x24] sm:$0xf]
    %v247 = vld [vmem:[#allocation5 + $0x28] sm:$0xf]
    %v248 = vld [vmem:[#allocation5 + $0x2c] sm:$0xf]
    %v249 = vld [vmem:[#allocation5 + $0x30] sm:$0xf]
    %v250 = vld [vmem:[#allocation5 + $0x34] sm:$0xf]
    %v251 = vld [vmem:[#allocation5 + $0x38] sm:$0xf]
    %v252 = vld [vmem:[#allocation5 + $0x3c] sm:$0xf]
    %v253 = vld [vmem:[#allocation5 + $0x40] sm:$0xf]
    %v254 = vld [vmem:[#allocation5 + $0x44] sm:$0xf]
    %v255 = vld [vmem:[#allocation5 + $0x48] sm:$0xf]
    %v256 = vld [vmem:[#allocation5 + $0x4c] sm:$0xf]
    %v257 = vld [vmem:[#allocation5 + $0x50] sm:$0xf]
    %v258 = vld [vmem:[#allocation5 + $0x54] sm:$0xf]
    %v259 = vld [vmem:[#allocation5 + $0x58] sm:$0xf]
    %v260 = vld [vmem:[#allocation5 + $0x5c] sm:$0xf]
    %v261 = vld [vmem:[#allocation5 + $0x60] sm:$0xf]
    %v262 = vld [vmem:[#allocation5 + $0x64] sm:$0xf]
    %v263 = vld [vmem:[#allocation5 + $0x68] sm:$0xf]
    %v264 = vld [vmem:[#allocation5 + $0x6c] sm:$0xf]
    %v265 = vld [vmem:[#allocation5 + $0x70] sm:$0xf]
    %v266 = vld [vmem:[#allocation5 + $0x74] sm:$0xf]
    %v267 = vld [vmem:[#allocation5 + $0x78] sm:$0xf]
    %v268 = vld [vmem:[#allocation5 + $0x7c] sm:$0xf]
    %v269 = vld [vmem:[#allocation5 + $0x80] sm:$0xf]
    %v270 = vld [vmem:[#allocation5 + $0x84] sm:$0xf]
    %v271 = vld [vmem:[#allocation5 + $0x88] sm:$0xf]
    %v272 = vld [vmem:[#allocation5 + $0x8c] sm:$0xf]
    %v273 = vld [vmem:[#allocation5 + $0x90] sm:$0xf]
    %v274 = vld [vmem:[#allocation5 + $0x94] sm:$0xf]
    %v275 = vld [vmem:[#allocation5 + $0x98] sm:$0xf]
    %v276 = vld [vmem:[#allocation5 + $0x9c] sm:$0xf]
    %v277 = vld [vmem:[#allocation5 + $0xa0] sm:$0xf]
    %v278 = vld [vmem:[#allocation5 + $0xa4] sm:$0xf]
    %v279 = vld [vmem:[#allocation5 + $0xa8] sm:$0xf]
    %v280 = vld [vmem:[#allocation5 + $0xac] sm:$0xf]
    %v281 = vld [vmem:[#allocation5 + $0xb0] sm:$0xf]
    %v282 = vld [vmem:[#allocation5 + $0xb4] sm:$0xf]
    %v283 = vld [vmem:[#allocation5 + $0xb8] sm:$0xf]
    %v284 = vld [vmem:[#allocation5 + $0xbc] sm:$0xf]
    %v285 = vld [vmem:[#allocation7] sm:$0xf]
    %v286 = vld [vmem:[#allocation7 + $0x4] sm:$0xf]
    %v287 = vld [vmem:[#allocation7 + $0x8] sm:$0xf]
    %v288 = vld [vmem:[#allocation7 + $0xc] sm:$0xf]
    %v289 = vld [vmem:[#allocation7 + $0x10] sm:$0xf]
    %v290 = vld [vmem:[#allocation7 + $0x14] sm:$0xf]
    %v291 = vld [vmem:[#allocation7 + $0x18] sm:$0xf]
    %v292 = vld [vmem:[#allocation7 + $0x1c] sm:$0xf]
    %v293 = vld [vmem:[#allocation7 + $0x20] sm:$0xf]
    %v294 = vld [vmem:[#allocation7 + $0x24] sm:$0xf]
    %v295 = vld [vmem:[#allocation7 + $0x28] sm:$0xf]
    %v296 = vld [vmem:[#allocation7 + $0x2c] sm:$0xf]
    %v297 = vld [vmem:[#allocation7 + $0x30] sm:$0xf]
    %v298 = vld [vmem:[#allocation7 + $0x34] sm:$0xf]
    %v299 = vld [vmem:[#allocation7 + $0x38] sm:$0xf]
    %v300 = vld [vmem:[#allocation7 + $0x3c] sm:$0xf]
    %v349 = vunpack.c.l.b16 %v237
    %v350 = vunpack.c.l.b16 %v238
    %v351 = vunpack.c.l.b16 %v239
    %v352 = vunpack.c.l.b16 %v240
    %v353 = vunpack.c.l.b16 %v241
    %v354 = vunpack.c.l.b16 %v242
    %v355 = vunpack.c.l.b16 %v243
    %v356 = vunpack.c.l.b16 %v244
    %v357 = vunpack.c.l.b16 %v245
    %v358 = vunpack.c.l.b16 %v246
    %v359 = vunpack.c.l.b16 %v247
    %v360 = vunpack.c.l.b16 %v248
    %v361 = vunpack.c.l.b16 %v249
    %v362 = vunpack.c.l.b16 %v250
    %v363 = vunpack.c.l.b16 %v251
    %v364 = vunpack.c.l.b16 %v252
    %v365 = vunpack.c.l.b16 %v253
    %v366 = vunpack.c.l.b16 %v254
    %v367 = vunpack.c.l.b16 %v255
    %v368 = vunpack.c.l.b16 %v256
    %v369 = vunpack.c.l.b16 %v257
    %v370 = vunpack.c.l.b16 %v258
    %v371 = vunpack.c.l.b16 %v259
    %v372 = vunpack.c.l.b16 %v260
    %v373 = vunpack.c.l.b16 %v261
    %v374 = vunpack.c.l.b16 %v262
    %v375 = vunpack.c.l.b16 %v263
    %v376 = vunpack.c.l.b16 %v264
    %v377 = vunpack.c.l.b16 %v265
    %v378 = vunpack.c.l.b16 %v266
    %v379 = vunpack.c.l.b16 %v267
    %v380 = vunpack.c.l.b16 %v268
    %v381 = vunpack.c.l.b16 %v269
    %v382 = vunpack.c.l.b16 %v270
    %v383 = vunpack.c.l.b16 %v271
    %v384 = vunpack.c.l.b16 %v272
    %v385 = vunpack.c.l.b16 %v273
    %v386 = vunpack.c.l.b16 %v274
    %v387 = vunpack.c.l.b16 %v275
    %v388 = vunpack.c.l.b16 %v276
    %v389 = vunpack.c.l.b16 %v277
    %v390 = vunpack.c.l.b16 %v278
    %v391 = vunpack.c.l.b16 %v279
    %v392 = vunpack.c.l.b16 %v280
    %v393 = vunpack.c.l.b16 %v281
    %v394 = vunpack.c.l.b16 %v282
    %v395 = vunpack.c.l.b16 %v283
    %v396 = vunpack.c.l.b16 %v284
    %v397 = vpack.c.b16 %v350, %v349
    %v398 = vpack.c.b16 %v352, %v351
    %v399 = vpack.c.b16 %v354, %v353
    %v400 = vpack.c.b16 %v356, %v355
    %v401 = vpack.c.b16 %v358, %v357
    %v402 = vpack.c.b16 %v360, %v359
    %v403 = vpack.c.b16 %v362, %v361
    %v404 = vpack.c.b16 %v364, %v363
    %v405 = vpack.c.b16 %v366, %v365
    %v406 = vpack.c.b16 %v368, %v367
    %v407 = vpack.c.b16 %v370, %v369
    %v408 = vpack.c.b16 %v372, %v371
    %v409 = vpack.c.b16 %v374, %v373
    %v410 = vpack.c.b16 %v376, %v375
    %v411 = vpack.c.b16 %v378, %v377
    %v412 = vpack.c.b16 %v380, %v379
    %v413 = vpack.c.b16 %v382, %v381
    %v414 = vpack.c.b16 %v384, %v383
    %v415 = vpack.c.b16 %v386, %v385
    %v416 = vpack.c.b16 %v388, %v387
    %v417 = vpack.c.b16 %v390, %v389
    %v418 = vpack.c.b16 %v392, %v391
    %v419 = vpack.c.b16 %v394, %v393
    %v420 = vpack.c.b16 %v396, %v395
    %v461 = vunpack.c.l.b16 %v285
    %v462 = vunpack.c.l.b16 %v286
    %v463 = vunpack.c.l.b16 %v287
    %v464 = vunpack.c.l.b16 %v288
    %v465 = vunpack.c.l.b16 %v289
    %v466 = vunpack.c.l.b16 %v290
    %v467 = vunpack.c.l.b16 %v291
    %v468 = vunpack.c.l.b16 %v292
    %v469 = vunpack.c.l.b16 %v293
    %v470 = vunpack.c.l.b16 %v294
    %v471 = vunpack.c.l.b16 %v295
    %v472 = vunpack.c.l.b16 %v296
    %v473 = vunpack.c.l.b16 %v297
    %v474 = vunpack.c.l.b16 %v298
    %v475 = vunpack.c.l.b16 %v299
    %v476 = vunpack.c.l.b16 %v300
    %v477 = vpack.c.b16 %v462, %v461
    %v478 = vpack.c.b16 %v464, %v463
    %v479 = vpack.c.b16 %v466, %v465
    %v480 = vpack.c.b16 %v468, %v467
    %v481 = vpack.c.b16 %v470, %v469
    %v482 = vpack.c.b16 %v472, %v471
    %v483 = vpack.c.b16 %v474, %v473
    %v484 = vpack.c.b16 %v476, %v475
    %493 = vmatprep.subr.bf16.mxu0 0
    %494 = vmatpush1.bf16.msra.mxu0 %v477
    %495 = vmatprep.subr.bf16.mxu0 0
    %496 = vmatpush1.bf16.msra.mxu0 %v478
    %497 = vmatprep.subr.bf16.mxu0 0
    %498 = vmatpush1.bf16.msra.mxu0 %v479
    %499 = vmatprep.subr.bf16.mxu0 0
    %500 = vmatpush1.bf16.msra.mxu0 %v480
    %501 = vmatprep.subr.bf16.mxu0 0
    %502 = vmatpush1.bf16.msra.mxu0 %v481
    %503 = vmatprep.subr.bf16.mxu0 0
    %504 = vmatpush1.bf16.msra.mxu0 %v482
    %505 = vmatprep.subr.bf16.mxu0 0
    %506 = vmatpush1.bf16.msra.mxu0 %v483
    %507 = vmatprep.subr.bf16.mxu0 0
    %508 = vmatpush1.bf16.msra.mxu0 %v484
    %509 = vmatprep.subr.bf16.mxu0 0
    %510 = vmatpush1.bf16.msra.mxu0 0
    %511 = vmatprep.subr.bf16.mxu0 0
    %512 = vmatpush1.bf16.msra.mxu0 0
    %513 = vmatprep.subr.bf16.mxu0 0
    %514 = vmatpush1.bf16.msra.mxu0 0
    %515 = vmatprep.subr.bf16.mxu0 0
    %516 = vmatpush1.bf16.msra.mxu0 0
    %517 = vmatprep.subr.bf16.mxu0 0
    %518 = vmatpush1.bf16.msra.mxu0 0
    %519 = vmatprep.subr.bf16.mxu0 0
    %520 = vmatpush1.bf16.msra.mxu0 0
    %521 = vmatprep.subr.bf16.mxu0 0
    %522 = vmatpush1.bf16.msra.mxu0 0
    %523 = vmatprep.subr.bf16.mxu0 0
    %524 = vmatpush1.bf16.msra.mxu0 0
    %525 = vmatprep.mubr.bf16.mxu0 0
    %526 = vmatmul.mubr.bf16.gmra.mrb[0].mxu0 %v397
    %v527 = vpop.f32.mrb[0].mxu0
    %v528 = vadd.f32 0.0, %v527
    %v529 = vpop.f32.mrb[0].mxu0
    %v530 = vpop.f32.mrb[0].mxu0
    %v531 = vadd.f32 0.0, %v530
    %v532 = vpop.f32.mrb[0].mxu0
    %533 = vmatprep.mubr.bf16.mxu0 0
    %534 = vmatmul.mubr.bf16.gmra.mrb[0].mxu0 %v398
    %v535 = vpop.f32.mrb[0].mxu0
    %v536 = vadd.f32 0.0, %v535
    %v537 = vpop.f32.mrb[0].mxu0
    %v538 = vpop.f32.mrb[0].mxu0
    %v539 = vadd.f32 0.0, %v538
    %v540 = vpop.f32.mrb[0].mxu0
    %541 = vmatprep.mubr.bf16.mxu0 0
    %542 = vmatmul.mubr.bf16.gmra.mrb[0].mxu0 %v399
    %v543 = vpop.f32.mrb[0].mxu0
    %v544 = vadd.f32 0.0, %v543
    %v545 = vpop.f32.mrb[0].mxu0
    %v546 = vpop.f32.mrb[0].mxu0
    %v547 = vadd.f32 0.0, %v546
    %v548 = vpop.f32.mrb[0].mxu0
    %549 = vmatprep.mubr.bf16.mxu0 0
    %550 = vmatmul.mubr.bf16.gmra.mrb[0].mxu0 %v400
    %v551 = vpop.f32.mrb[0].mxu0
    %v552 = vadd.f32 0.0, %v551
    %v553 = vpop.f32.mrb[0].mxu0
    %v554 = vpop.f32.mrb[0].mxu0
    %v555 = vadd.f32 0.0, %v554
    %v556 = vpop.f32.mrb[0].mxu0
    %557 = vmatprep.mubr.bf16.mxu0 0
    %558 = vmatmul.mubr.bf16.gmra.mrb[0].mxu0 %v401
    %v559 = vpop.f32.mrb[0].mxu0
    %v560 = vadd.f32 0.0, %v559
    %v561 = vpop.f32.mrb[0].mxu0
    %v562 = vpop.f32.mrb[0].mxu0
    %v563 = vadd.f32 0.0, %v562
    %v564 = vpop.f32.mrb[0].mxu0
    %565 = vmatprep.mubr.bf16.mxu0 0
    %566 = vmatmul.mubr.bf16.gmra.mrb[0].mxu0 %v402
    %v567 = vpop.f32.mrb[0].mxu0
    %v568 = vadd.f32 0.0, %v567
    %v569 = vpop.f32.mrb[0].mxu0
    %v570 = vpop.f32.mrb[0].mxu0
    %v571 = vadd.f32 0.0, %v570
    %v572 = vpop.f32.mrb[0].mxu0
    %573 = vmatprep.mubr.bf16.mxu0 0
    %574 = vmatmul.mubr.bf16.gmra.mrb[0].mxu0 %v403
    %v575 = vpop.f32.mrb[0].mxu0
    %v576 = vadd.f32 0.0, %v575
    %v577 = vpop.f32.mrb[0].mxu0
    %v578 = vpop.f32.mrb[0].mxu0
    %v579 = vadd.f32 0.0, %v578
    %v580 = vpop.f32.mrb[0].mxu0
    %581 = vmatprep.mubr.bf16.mxu0 0
    %582 = vmatmul.mubr.bf16.gmra.mrb[0].mxu0 %v404
    %v583 = vpop.f32.mrb[0].mxu0
    %v584 = vadd.f32 0.0, %v583
    %v585 = vpop.f32.mrb[0].mxu0
    %v586 = vpop.f32.mrb[0].mxu0
    %v587 = vadd.f32 0.0, %v586
    %v588 = vpop.f32.mrb[0].mxu0
    %589 = vmatprep.mubr.bf16.mxu0 0
    %590 = vmatmul.mubr.bf16.gmra.mrb[0].mxu0 %v405
    %v591 = vpop.f32.mrb[0].mxu0
    %v592 = vadd.f32 0.0, %v591
    %v593 = vpop.f32.mrb[0].mxu0
    %v594 = vpop.f32.mrb[0].mxu0
    %v595 = vadd.f32 0.0, %v594
    %v596 = vpop.f32.mrb[0].mxu0
    %597 = vmatprep.mubr.bf16.mxu0 0
    %598 = vmatmul.mubr.bf16.gmra.mrb[0].mxu0 %v406
    %v599 = vpop.f32.mrb[0].mxu0
    %v600 = vadd.f32 0.0, %v599
    %v601 = vpop.f32.mrb[0].mxu0
    %v602 = vpop.f32.mrb[0].mxu0
    %v603 = vadd.f32 0.0, %v602
    %v604 = vpop.f32.mrb[0].mxu0
    %605 = vmatprep.mubr.bf16.mxu0 0
    %606 = vmatmul.mubr.bf16.gmra.mrb[0].mxu0 %v407
    %v607 = vpop.f32.mrb[0].mxu0
    %v608 = vadd.f32 0.0, %v607
    %v609 = vpop.f32.mrb[0].mxu0
    %v610 = vpop.f32.mrb[0].mxu0
    %v611 = vadd.f32 0.0, %v610
    %v612 = vpop.f32.mrb[0].mxu0
    %613 = vmatprep.mubr.bf16.mxu0 0
    %614 = vmatmul.mubr.bf16.gmra.mrb[0].mxu0 %v408
    %v615 = vpop.f32.mrb[0].mxu0
    %v616 = vadd.f32 0.0, %v615
    %v617 = vpop.f32.mrb[0].mxu0
    %v618 = vpop.f32.mrb[0].mxu0
    %v619 = vadd.f32 0.0, %v618
    %v620 = vpop.f32.mrb[0].mxu0
    %621 = vmatprep.mubr.bf16.mxu0 0
    %622 = vmatmul.mubr.bf16.gmra.mrb[0].mxu0 %v409
    %v623 = vpop.f32.mrb[0].mxu0
    %v624 = vadd.f32 0.0, %v623
    %v625 = vpop.f32.mrb[0].mxu0
    %v626 = vpop.f32.mrb[0].mxu0
    %v627 = vadd.f32 0.0, %v626
    %v628 = vpop.f32.mrb[0].mxu0
    %629 = vmatprep.mubr.bf16.mxu0 0
    %630 = vmatmul.mubr.bf16.gmra.mrb[0].mxu0 %v410
    %v631 = vpop.f32.mrb[0].mxu0
    %v632 = vadd.f32 0.0, %v631
    %v633 = vpop.f32.mrb[0].mxu0
    %v634 = vpop.f32.mrb[0].mxu0
    %v635 = vadd.f32 0.0, %v634
    %v636 = vpop.f32.mrb[0].mxu0
    %637 = vmatprep.mubr.bf16.mxu0 0
    %638 = vmatmul.mubr.bf16.gmra.mrb[0].mxu0 %v411
    %v639 = vpop.f32.mrb[0].mxu0
    %v640 = vadd.f32 0.0, %v639
    %v641 = vpop.f32.mrb[0].mxu0
    %v642 = vpop.f32.mrb[0].mxu0
    %v643 = vadd.f32 0.0, %v642
    %v644 = vpop.f32.mrb[0].mxu0
    %645 = vmatprep.mubr.bf16.mxu0 0
    %646 = vmatmul.mubr.bf16.gmra.mrb[0].mxu0 %v412
    %v647 = vpop.f32.mrb[0].mxu0
    %v648 = vadd.f32 0.0, %v647
    %v649 = vpop.f32.mrb[0].mxu0
    %v650 = vpop.f32.mrb[0].mxu0
    %v651 = vadd.f32 0.0, %v650
    %v652 = vpop.f32.mrb[0].mxu0
    %653 = vmatprep.mubr.bf16.mxu0 0
    %654 = vmatmul.mubr.bf16.gmra.mrb[0].mxu0 %v413
    %v655 = vpop.f32.mrb[0].mxu0
    %v656 = vadd.f32 0.0, %v655
    %v657 = vpop.f32.mrb[0].mxu0
    %v658 = vpop.f32.mrb[0].mxu0
    %v659 = vadd.f32 0.0, %v658
    %v660 = vpop.f32.mrb[0].mxu0
    %661 = vmatprep.mubr.bf16.mxu0 0
    %662 = vmatmul.mubr.bf16.gmra.mrb[0].mxu0 %v414
    %v663 = vpop.f32.mrb[0].mxu0
    %v664 = vadd.f32 0.0, %v663
    %v665 = vpop.f32.mrb[0].mxu0
    %v666 = vpop.f32.mrb[0].mxu0
    %v667 = vadd.f32 0.0, %v666
    %v668 = vpop.f32.mrb[0].mxu0
    %669 = vmatprep.mubr.bf16.mxu0 0
    %670 = vmatmul.mubr.bf16.gmra.mrb[0].mxu0 %v415
    %v671 = vpop.f32.mrb[0].mxu0
    %v672 = vadd.f32 0.0, %v671
    %v673 = vpop.f32.mrb[0].mxu0
    %v674 = vpop.f32.mrb[0].mxu0
    %v675 = vadd.f32 0.0, %v674
    %v676 = vpop.f32.mrb[0].mxu0
    %677 = vmatprep.mubr.bf16.mxu0 0
    %678 = vmatmul.mubr.bf16.gmra.mrb[0].mxu0 %v416
    %v679 = vpop.f32.mrb[0].mxu0
    %v680 = vadd.f32 0.0, %v679
    %v681 = vpop.f32.mrb[0].mxu0
    %v682 = vpop.f32.mrb[0].mxu0
    %v683 = vadd.f32 0.0, %v682
    %v684 = vpop.f32.mrb[0].mxu0
    %685 = vmatprep.mubr.bf16.mxu0 0
    %686 = vmatmul.mubr.bf16.gmra.mrb[0].mxu0 %v417
    %v687 = vpop.f32.mrb[0].mxu0
    %v688 = vadd.f32 0.0, %v687
    %v689 = vpop.f32.mrb[0].mxu0
    %v690 = vpop.f32.mrb[0].mxu0
    %v691 = vadd.f32 0.0, %v690
    %v692 = vpop.f32.mrb[0].mxu0
    %693 = vmatprep.mubr.bf16.mxu0 0
    %694 = vmatmul.mubr.bf16.gmra.mrb[0].mxu0 %v418
    %v695 = vpop.f32.mrb[0].mxu0
    %v696 = vadd.f32 0.0, %v695
    %v697 = vpop.f32.mrb[0].mxu0
    %v698 = vpop.f32.mrb[0].mxu0
    %v699 = vadd.f32 0.0, %v698
    %v700 = vpop.f32.mrb[0].mxu0
    %701 = vmatprep.mubr.bf16.mxu0 0
    %702 = vmatmul.mubr.bf16.gmra.mrb[0].mxu0 %v419
    %v703 = vpop.f32.mrb[0].mxu0
    %v704 = vadd.f32 0.0, %v703
    %v705 = vpop.f32.mrb[0].mxu0
    %v706 = vpop.f32.mrb[0].mxu0
    %v707 = vadd.f32 0.0, %v706
    %v708 = vpop.f32.mrb[0].mxu0
    %709 = vmatprep.mubr.bf16.mxu0 0
    %710 = vmatmul.mubr.bf16.gmra.mrb[0].mxu0 %v420
    %v711 = vpop.f32.mrb[0].mxu0
    %v712 = vadd.f32 0.0, %v711
    %v713 = vpop.f32.mrb[0].mxu0
    %v714 = vpop.f32.mrb[0].mxu0
    %v715 = vadd.f32 0.0, %v714
    %v716 = vpop.f32.mrb[0].mxu0
    %717 = vdwg.mxu0
    %v718 = vpack.c.bf16 %v531, %v528
    %v719 = vpack.c.bf16 %v539, %v536
    %v720 = vpack.c.bf16 %v547, %v544
    %v721 = vpack.c.bf16 %v555, %v552
    %v722 = vpack.c.bf16 %v563, %v560
    %v723 = vpack.c.bf16 %v571, %v568
    %v724 = vpack.c.bf16 %v579, %v576
    %v725 = vpack.c.bf16 %v587, %v584
    %v726 = vpack.c.bf16 %v595, %v592
    %v727 = vpack.c.bf16 %v603, %v600
    %v728 = vpack.c.bf16 %v611, %v608
    %v729 = vpack.c.bf16 %v619, %v616
    %v730 = vpack.c.bf16 %v627, %v624
    %v731 = vpack.c.bf16 %v635, %v632
    %v732 = vpack.c.bf16 %v643, %v640
    %v733 = vpack.c.bf16 %v651, %v648
    %v734 = vpack.c.bf16 %v659, %v656
    %v735 = vpack.c.bf16 %v667, %v664
    %v736 = vpack.c.bf16 %v675, %v672
    %v737 = vpack.c.bf16 %v683, %v680
    %v738 = vpack.c.bf16 %v691, %v688
    %v739 = vpack.c.bf16 %v699, %v696
    %v740 = vpack.c.bf16 %v707, %v704
    %v741 = vpack.c.bf16 %v715, %v712
    %v742 = vld [vmem:[%s3] sm:$0x1]
    %v744 = vlaneseq
    %v745 = vshrl.u32 %v744, 7
    %v746 = vsub.s32 0, %v745
    %v747 = vrot.slane %v742, %v746
    %v845 = vunpack.c.l.b16 %v141
    %v846 = vunpack.c.h.b16 %v141
    %v847 = vunpack.c.l.b16 %v142
    %v848 = vunpack.c.l.b16 %v143
    %v849 = vunpack.c.h.b16 %v143
    %v850 = vunpack.c.l.b16 %v144
    %v851 = vunpack.c.l.b16 %v145
    %v852 = vunpack.c.h.b16 %v145
    %v853 = vunpack.c.l.b16 %v146
    %v854 = vunpack.c.l.b16 %v147
    %v855 = vunpack.c.h.b16 %v147
    %v856 = vunpack.c.l.b16 %v148
    %v857 = vunpack.c.l.b16 %v149
    %v858 = vunpack.c.h.b16 %v149
    %v859 = vunpack.c.l.b16 %v150
    %v860 = vunpack.c.l.b16 %v151
    %v861 = vunpack.c.h.b16 %v151
    %v862 = vunpack.c.l.b16 %v152
    %v863 = vunpack.c.l.b16 %v153
    %v864 = vunpack.c.h.b16 %v153
    %v865 = vunpack.c.l.b16 %v154
    %v866 = vunpack.c.l.b16 %v155
    %v867 = vunpack.c.h.b16 %v155
    %v868 = vunpack.c.l.b16 %v156
    %v869 = vunpack.c.l.b16 %v157
    %v870 = vunpack.c.h.b16 %v157
    %v871 = vunpack.c.l.b16 %v158
    %v872 = vunpack.c.l.b16 %v159
    %v873 = vunpack.c.h.b16 %v159
    %v874 = vunpack.c.l.b16 %v160
    %v875 = vunpack.c.l.b16 %v161
    %v876 = vunpack.c.h.b16 %v161
    %v877 = vunpack.c.l.b16 %v162
    %v878 = vunpack.c.l.b16 %v163
    %v879 = vunpack.c.h.b16 %v163
    %v880 = vunpack.c.l.b16 %v164
    %v881 = vunpack.c.l.b16 %v165
    %v882 = vunpack.c.h.b16 %v165
    %v883 = vunpack.c.l.b16 %v166
    %v884 = vunpack.c.l.b16 %v167
    %v885 = vunpack.c.h.b16 %v167
    %v886 = vunpack.c.l.b16 %v168
    %v887 = vunpack.c.l.b16 %v169
    %v888 = vunpack.c.h.b16 %v169
    %v889 = vunpack.c.l.b16 %v170
    %v890 = vunpack.c.l.b16 %v171
    %v891 = vunpack.c.h.b16 %v171
    %v892 = vunpack.c.l.b16 %v172
    %v893 = vunpack.c.l.b16 %v173
    %v894 = vunpack.c.h.b16 %v173
    %v895 = vunpack.c.l.b16 %v174
    %v896 = vunpack.c.l.b16 %v175
    %v897 = vunpack.c.h.b16 %v175
    %v898 = vunpack.c.l.b16 %v176
    %v899 = vunpack.c.l.b16 %v177
    %v900 = vunpack.c.h.b16 %v177
    %v901 = vunpack.c.l.b16 %v178
    %v902 = vunpack.c.l.b16 %v179
    %v903 = vunpack.c.h.b16 %v179
    %v904 = vunpack.c.l.b16 %v180
    %v905 = vunpack.c.l.b16 %v181
    %v906 = vunpack.c.h.b16 %v181
    %v907 = vunpack.c.l.b16 %v182
    %v908 = vunpack.c.l.b16 %v183
    %v909 = vunpack.c.h.b16 %v183
    %v910 = vunpack.c.l.b16 %v184
    %v911 = vunpack.c.l.b16 %v185
    %v912 = vunpack.c.h.b16 %v185
    %v913 = vunpack.c.l.b16 %v186
    %v914 = vunpack.c.l.b16 %v187
    %v915 = vunpack.c.h.b16 %v187
    %v916 = vunpack.c.l.b16 %v188
    %v917 = vunpack.c.l.b16 %v189
    %v918 = vunpack.c.h.b16 %v189
    %v919 = vunpack.c.l.b16 %v190
    %v920 = vunpack.c.l.b16 %v191
    %v921 = vunpack.c.h.b16 %v191
    %v922 = vunpack.c.l.b16 %v192
    %v923 = vunpack.c.l.b16 %v193
    %v924 = vunpack.c.h.b16 %v193
    %v925 = vunpack.c.l.b16 %v194
    %v926 = vunpack.c.l.b16 %v195
    %v927 = vunpack.c.h.b16 %v195
    %v928 = vunpack.c.l.b16 %v196
    %v929 = vunpack.c.l.b16 %v197
    %v930 = vunpack.c.h.b16 %v197
    %v931 = vunpack.c.l.b16 %v198
    %v932 = vunpack.c.l.b16 %v199
    %v933 = vunpack.c.h.b16 %v199
    %v934 = vunpack.c.l.b16 %v200
    %v935 = vunpack.c.l.b16 %v201
    %v936 = vunpack.c.h.b16 %v201
    %v937 = vunpack.c.l.b16 %v202
    %v938 = vunpack.c.l.b16 %v203
    %v939 = vunpack.c.h.b16 %v203
    %v940 = vunpack.c.l.b16 %v204
    %v941 = vunpack.c.l.b16 %v205
    %v942 = vunpack.c.h.b16 %v205
    %v943 = vunpack.c.l.b16 %v206
    %v944 = vunpack.c.l.b16 %v207
    %v945 = vunpack.c.h.b16 %v207
    %v946 = vunpack.c.l.b16 %v208
    %v947 = vunpack.c.l.b16 %v209
    %v948 = vunpack.c.h.b16 %v209
    %v949 = vunpack.c.l.b16 %v210
    %v950 = vunpack.c.l.b16 %v211
    %v951 = vunpack.c.h.b16 %v211
    %v952 = vunpack.c.l.b16 %v212
    %v953 = vunpack.c.l.b16 %v213
    %v954 = vunpack.c.h.b16 %v213
    %v955 = vunpack.c.l.b16 %v214
    %v956 = vunpack.c.l.b16 %v215
    %v957 = vunpack.c.h.b16 %v215
    %v958 = vunpack.c.l.b16 %v216
    %v959 = vunpack.c.l.b16 %v217
    %v960 = vunpack.c.h.b16 %v217
    %v961 = vunpack.c.l.b16 %v218
    %v962 = vunpack.c.l.b16 %v219
    %v963 = vunpack.c.h.b16 %v219
    %v964 = vunpack.c.l.b16 %v220
    %v965 = vunpack.c.l.b16 %v221
    %v966 = vunpack.c.h.b16 %v221
    %v967 = vunpack.c.l.b16 %v222
    %v968 = vunpack.c.l.b16 %v223
    %v969 = vunpack.c.h.b16 %v223
    %v970 = vunpack.c.l.b16 %v224
    %v971 = vunpack.c.l.b16 %v225
    %v972 = vunpack.c.h.b16 %v225
    %v973 = vunpack.c.l.b16 %v226
    %v974 = vunpack.c.l.b16 %v227
    %v975 = vunpack.c.h.b16 %v227
    %v976 = vunpack.c.l.b16 %v228
    %v977 = vunpack.c.l.b16 %v229
    %v978 = vunpack.c.h.b16 %v229
    %v979 = vunpack.c.l.b16 %v230
    %v980 = vunpack.c.l.b16 %v231
    %v981 = vunpack.c.h.b16 %v231
    %v982 = vunpack.c.l.b16 %v232
    %v983 = vunpack.c.l.b16 %v233
    %v984 = vunpack.c.h.b16 %v233
    %v985 = vunpack.c.l.b16 %v234
    %v986 = vunpack.c.l.b16 %v235
    %v987 = vunpack.c.h.b16 %v235
    %v988 = vunpack.c.l.b16 %v236
    %v989 = vpack.c.b16 %v848, %v845
    %v990 = vpack.c.b16 %v849, %v846
    %v991 = vpack.c.b16 %v850, %v847
    %v992 = vpack.c.b16 %v854, %v851
    %v993 = vpack.c.b16 %v855, %v852
    %v994 = vpack.c.b16 %v856, %v853
    %v995 = vpack.c.b16 %v860, %v857
    %v996 = vpack.c.b16 %v861, %v858
    %v997 = vpack.c.b16 %v862, %v859
    %v998 = vpack.c.b16 %v866, %v863
    %v999 = vpack.c.b16 %v867, %v864
    %v1000 = vpack.c.b16 %v868, %v865
    %v1001 = vpack.c.b16 %v872, %v869
    %v1002 = vpack.c.b16 %v873, %v870
    %v1003 = vpack.c.b16 %v874, %v871
    %v1004 = vpack.c.b16 %v878, %v875
    %v1005 = vpack.c.b16 %v879, %v876
    %v1006 = vpack.c.b16 %v880, %v877
    %v1007 = vpack.c.b16 %v884, %v881
    %v1008 = vpack.c.b16 %v885, %v882
    %v1009 = vpack.c.b16 %v886, %v883
    %v1010 = vpack.c.b16 %v890, %v887
    %v1011 = vpack.c.b16 %v891, %v888
    %v1012 = vpack.c.b16 %v892, %v889
    %v1013 = vpack.c.b16 %v896, %v893
    %v1014 = vpack.c.b16 %v897, %v894
    %v1015 = vpack.c.b16 %v898, %v895
    %v1016 = vpack.c.b16 %v902, %v899
    %v1017 = vpack.c.b16 %v903, %v900
    %v1018 = vpack.c.b16 %v904, %v901
    %v1019 = vpack.c.b16 %v908, %v905
    %v1020 = vpack.c.b16 %v909, %v906
    %v1021 = vpack.c.b16 %v910, %v907
    %v1022 = vpack.c.b16 %v914, %v911
    %v1023 = vpack.c.b16 %v915, %v912
    %v1024 = vpack.c.b16 %v916, %v913
    %v1025 = vpack.c.b16 %v920, %v917
    %v1026 = vpack.c.b16 %v921, %v918
    %v1027 = vpack.c.b16 %v922, %v919
    %v1028 = vpack.c.b16 %v926, %v923
    %v1029 = vpack.c.b16 %v927, %v924
    %v1030 = vpack.c.b16 %v928, %v925
    %v1031 = vpack.c.b16 %v932, %v929
    %v1032 = vpack.c.b16 %v933, %v930
    %v1033 = vpack.c.b16 %v934, %v931
    %v1034 = vpack.c.b16 %v938, %v935
    %v1035 = vpack.c.b16 %v939, %v936
    %v1036 = vpack.c.b16 %v940, %v937
    %v1037 = vpack.c.b16 %v944, %v941
    %v1038 = vpack.c.b16 %v945, %v942
    %v1039 = vpack.c.b16 %v946, %v943
    %v1040 = vpack.c.b16 %v950, %v947
    %v1041 = vpack.c.b16 %v951, %v948
    %v1042 = vpack.c.b16 %v952, %v949
    %v1043 = vpack.c.b16 %v956, %v953
    %v1044 = vpack.c.b16 %v957, %v954
    %v1045 = vpack.c.b16 %v958, %v955
    %v1046 = vpack.c.b16 %v962, %v959
    %v1047 = vpack.c.b16 %v963, %v960
    %v1048 = vpack.c.b16 %v964, %v961
    %v1049 = vpack.c.b16 %v968, %v965
    %v1050 = vpack.c.b16 %v969, %v966
    %v1051 = vpack.c.b16 %v970, %v967
    %v1052 = vpack.c.b16 %v974, %v971
    %v1053 = vpack.c.b16 %v975, %v972
    %v1054 = vpack.c.b16 %v976, %v973
    %v1055 = vpack.c.b16 %v980, %v977
    %v1056 = vpack.c.b16 %v981, %v978
    %v1057 = vpack.c.b16 %v982, %v979
    %v1058 = vpack.c.b16 %v986, %v983
    %v1059 = vpack.c.b16 %v987, %v984
    %v1060 = vpack.c.b16 %v988, %v985
    %1133 = vmatprep.subr.bf16.mxu0 0
    %1134 = vmatpush1.bf16.msra.mxu0 %v718
    %1135 = vmatprep.subr.bf16.mxu0 0
    %1136 = vmatpush1.bf16.msra.mxu0 %v719
    %1137 = vmatprep.subr.bf16.mxu0 0
    %1138 = vmatpush1.bf16.msra.mxu0 %v720
    %1139 = vmatprep.subr.bf16.mxu0 0
    %1140 = vmatpush1.bf16.msra.mxu0 %v721
    %1141 = vmatprep.subr.bf16.mxu0 0
    %1142 = vmatpush1.bf16.msra.mxu0 %v722
    %1143 = vmatprep.subr.bf16.mxu0 0
    %1144 = vmatpush1.bf16.msra.mxu0 %v723
    %1145 = vmatprep.subr.bf16.mxu0 0
    %1146 = vmatpush1.bf16.msra.mxu0 %v724
    %1147 = vmatprep.subr.bf16.mxu0 0
    %1148 = vmatpush1.bf16.msra.mxu0 %v725
    %1149 = vmatprep.subr.bf16.mxu0 0
    %1150 = vmatpush1.bf16.msra.mxu0 %v726
    %1151 = vmatprep.subr.bf16.mxu0 0
    %1152 = vmatpush1.bf16.msra.mxu0 %v727
    %1153 = vmatprep.subr.bf16.mxu0 0
    %1154 = vmatpush1.bf16.msra.mxu0 %v728
    %1155 = vmatprep.subr.bf16.mxu0 0
    %1156 = vmatpush1.bf16.msra.mxu0 %v729
    %1157 = vmatprep.subr.bf16.mxu0 0
    %1158 = vmatpush1.bf16.msra.mxu0 %v730
    %1159 = vmatprep.subr.bf16.mxu0 0
    %1160 = vmatpush1.bf16.msra.mxu0 %v731
    %1161 = vmatprep.subr.bf16.mxu0 0
    %1162 = vmatpush1.bf16.msra.mxu0 %v732
    %1163 = vmatprep.subr.bf16.mxu0 0
    %1164 = vmatpush1.bf16.msra.mxu0 %v733
    %1165 = vmatprep.mubr.bf16.mxu0 %v990
    %1166 = vmatmul.mubr.bf16.gmra.mrb[0].mxu0 %v989
    %v1167 = vpop.f32.mrb[0].mxu0
    %v1168 = vadd.f32 %v747, %v1167
    %v1169 = vpop.f32.mrb[0].mxu0
    %v1170 = vpop.f32.mrb[0].mxu0
    %v1171 = vadd.f32 %v747, %v1170
    %v1172 = vpop.f32.mrb[0].mxu0
    %1173 = vmatprep.mubr.bf16.mxu0 %v993
    %1174 = vmatmul.mubr.bf16.gmra.mrb[0].mxu0 %v992
    %v1175 = vpop.f32.mrb[0].mxu0
    %v1176 = vadd.f32 %v747, %v1175
    %v1177 = vpop.f32.mrb[0].mxu0
    %v1178 = vpop.f32.mrb[0].mxu0
    %v1179 = vadd.f32 %v747, %v1178
    %v1180 = vpop.f32.mrb[0].mxu0
    %1181 = vmatprep.mubr.bf16.mxu0 %v996
    %1182 = vmatmul.mubr.bf16.gmra.mrb[0].mxu0 %v995
    %v1183 = vpop.f32.mrb[0].mxu0
    %v1184 = vadd.f32 %v747, %v1183
    %v1185 = vpop.f32.mrb[0].mxu0
    %v1186 = vpop.f32.mrb[0].mxu0
    %v1187 = vadd.f32 %v747, %v1186
    %v1188 = vpop.f32.mrb[0].mxu0
    %1189 = vmatprep.mubr.bf16.mxu0 %v999
    %1190 = vmatmul.mubr.bf16.gmra.mrb[0].mxu0 %v998
    %v1191 = vpop.f32.mrb[0].mxu0
    %v1192 = vadd.f32 %v747, %v1191
    %v1193 = vpop.f32.mrb[0].mxu0
    %v1194 = vpop.f32.mrb[0].mxu0
    %v1195 = vadd.f32 %v747, %v1194
    %v1196 = vpop.f32.mrb[0].mxu0
    %1197 = vmatprep.mubr.bf16.mxu0 %v1002
    %1198 = vmatmul.mubr.bf16.gmra.mrb[0].mxu0 %v1001
    %v1199 = vpop.f32.mrb[0].mxu0
    %v1200 = vadd.f32 %v747, %v1199
    %v1201 = vpop.f32.mrb[0].mxu0
    %v1202 = vpop.f32.mrb[0].mxu0
    %v1203 = vadd.f32 %v747, %v1202
    %v1204 = vpop.f32.mrb[0].mxu0
    %1205 = vmatprep.mubr.bf16.mxu0 %v1005
    %1206 = vmatmul.mubr.bf16.gmra.mrb[0].mxu0 %v1004
    %v1207 = vpop.f32.mrb[0].mxu0
    %v1208 = vadd.f32 %v747, %v1207
    %v1209 = vpop.f32.mrb[0].mxu0
    %v1210 = vpop.f32.mrb[0].mxu0
    %v1211 = vadd.f32 %v747, %v1210
    %v1212 = vpop.f32.mrb[0].mxu0
    %1213 = vmatprep.mubr.bf16.mxu0 %v1008
    %1214 = vmatmul.mubr.bf16.gmra.mrb[0].mxu0 %v1007
    %v1215 = vpop.f32.mrb[0].mxu0
    %v1216 = vadd.f32 %v747, %v1215
    %v1217 = vpop.f32.mrb[0].mxu0
    %v1218 = vpop.f32.mrb[0].mxu0
    %v1219 = vadd.f32 %v747, %v1218
    %v1220 = vpop.f32.mrb[0].mxu0
    %1221 = vmatprep.mubr.bf16.mxu0 %v1011
    %1222 = vmatmul.mubr.bf16.gmra.mrb[0].mxu0 %v1010
    %v1223 = vpop.f32.mrb[0].mxu0
    %v1224 = vadd.f32 %v747, %v1223
    %v1225 = vpop.f32.mrb[0].mxu0
    %v1226 = vpop.f32.mrb[0].mxu0
    %v1227 = vadd.f32 %v747, %v1226
    %v1228 = vpop.f32.mrb[0].mxu0
    %1229 = vmatprep.mubr.bf16.mxu0 %v1014
    %1230 = vmatmul.mubr.bf16.gmra.mrb[0].mxu0 %v1013
    %v1231 = vpop.f32.mrb[0].mxu0
    %v1232 = vadd.f32 %v747, %v1231
    %v1233 = vpop.f32.mrb[0].mxu0
    %v1234 = vpop.f32.mrb[0].mxu0
    %v1235 = vadd.f32 %v747, %v1234
    %v1236 = vpop.f32.mrb[0].mxu0
    %1237 = vmatprep.mubr.bf16.mxu0 %v1017
    %1238 = vmatmul.mubr.bf16.gmra.mrb[0].mxu0 %v1016
    %v1239 = vpop.f32.mrb[0].mxu0
    %v1240 = vadd.f32 %v747, %v1239
    %v1241 = vpop.f32.mrb[0].mxu0
    %v1242 = vpop.f32.mrb[0].mxu0
    %v1243 = vadd.f32 %v747, %v1242
    %v1244 = vpop.f32.mrb[0].mxu0
    %1245 = vmatprep.mubr.bf16.mxu0 %v1020
    %1246 = vmatmul.mubr.bf16.gmra.mrb[0].mxu0 %v1019
    %v1247 = vpop.f32.mrb[0].mxu0
    %v1248 = vadd.f32 %v747, %v1247
    %v1249 = vpop.f32.mrb[0].mxu0
    %v1250 = vpop.f32.mrb[0].mxu0
    %v1251 = vadd.f32 %v747, %v1250
    %v1252 = vpop.f32.mrb[0].mxu0
    %1253 = vmatprep.mubr.bf16.mxu0 %v1023
    %1254 = vmatmul.mubr.bf16.gmra.mrb[0].mxu0 %v1022
    %v1255 = vpop.f32.mrb[0].mxu0
    %v1256 = vadd.f32 %v747, %v1255
    %v1257 = vpop.f32.mrb[0].mxu0
    %v1258 = vpop.f32.mrb[0].mxu0
    %v1259 = vadd.f32 %v747, %v1258
    %v1260 = vpop.f32.mrb[0].mxu0
    %1261 = vmatprep.mubr.bf16.mxu0 %v1026
    %1262 = vmatmul.mubr.bf16.gmra.mrb[0].mxu0 %v1025
    %v1263 = vpop.f32.mrb[0].mxu0
    %v1264 = vadd.f32 %v747, %v1263
    %v1265 = vpop.f32.mrb[0].mxu0
    %v1266 = vpop.f32.mrb[0].mxu0
    %v1267 = vadd.f32 %v747, %v1266
    %v1268 = vpop.f32.mrb[0].mxu0
    %1269 = vmatprep.mubr.bf16.mxu0 %v1029
    %1270 = vmatmul.mubr.bf16.gmra.mrb[0].mxu0 %v1028
    %v1271 = vpop.f32.mrb[0].mxu0
    %v1272 = vadd.f32 %v747, %v1271
    %v1273 = vpop.f32.mrb[0].mxu0
    %v1274 = vpop.f32.mrb[0].mxu0
    %v1275 = vadd.f32 %v747, %v1274
    %v1276 = vpop.f32.mrb[0].mxu0
    %1277 = vmatprep.mubr.bf16.mxu0 %v1032
    %1278 = vmatmul.mubr.bf16.gmra.mrb[0].mxu0 %v1031
    %v1279 = vpop.f32.mrb[0].mxu0
    %v1280 = vadd.f32 %v747, %v1279
    %v1281 = vpop.f32.mrb[0].mxu0
    %v1282 = vpop.f32.mrb[0].mxu0
    %v1283 = vadd.f32 %v747, %v1282
    %v1284 = vpop.f32.mrb[0].mxu0
    %1285 = vmatprep.mubr.bf16.mxu0 %v1035
    %1286 = vmatmul.mubr.bf16.gmra.mrb[0].mxu0 %v1034
    %v1287 = vpop.f32.mrb[0].mxu0
    %v1288 = vadd.f32 %v747, %v1287
    %v1289 = vpop.f32.mrb[0].mxu0
    %v1290 = vpop.f32.mrb[0].mxu0
    %v1291 = vadd.f32 %v747, %v1290
    %v1292 = vpop.f32.mrb[0].mxu0
    %1293 = vmatprep.mubr.bf16.mxu0 %v1038
    %1294 = vmatmul.mubr.bf16.gmra.mrb[0].mxu0 %v1037
    %v1295 = vpop.f32.mrb[0].mxu0
    %v1296 = vadd.f32 %v747, %v1295
    %v1297 = vpop.f32.mrb[0].mxu0
    %v1298 = vpop.f32.mrb[0].mxu0
    %v1299 = vadd.f32 %v747, %v1298
    %v1300 = vpop.f32.mrb[0].mxu0
    %1301 = vmatprep.mubr.bf16.mxu0 %v1041
    %1302 = vmatmul.mubr.bf16.gmra.mrb[0].mxu0 %v1040
    %v1303 = vpop.f32.mrb[0].mxu0
    %v1304 = vadd.f32 %v747, %v1303
    %v1305 = vpop.f32.mrb[0].mxu0
    %v1306 = vpop.f32.mrb[0].mxu0
    %v1307 = vadd.f32 %v747, %v1306
    %v1308 = vpop.f32.mrb[0].mxu0
    %1309 = vmatprep.mubr.bf16.mxu0 %v1044
    %1310 = vmatmul.mubr.bf16.gmra.mrb[0].mxu0 %v1043
    %v1311 = vpop.f32.mrb[0].mxu0
    %v1312 = vadd.f32 %v747, %v1311
    %v1313 = vpop.f32.mrb[0].mxu0
    %v1314 = vpop.f32.mrb[0].mxu0
    %v1315 = vadd.f32 %v747, %v1314
    %v1316 = vpop.f32.mrb[0].mxu0
    %1317 = vmatprep.mubr.bf16.mxu0 %v1047
    %1318 = vmatmul.mubr.bf16.gmra.mrb[0].mxu0 %v1046
    %v1319 = vpop.f32.mrb[0].mxu0
    %v1320 = vadd.f32 %v747, %v1319
    %v1321 = vpop.f32.mrb[0].mxu0
    %v1322 = vpop.f32.mrb[0].mxu0
    %v1323 = vadd.f32 %v747, %v1322
    %v1324 = vpop.f32.mrb[0].mxu0
    %1325 = vmatprep.mubr.bf16.mxu0 %v1050
    %1326 = vmatmul.mubr.bf16.gmra.mrb[0].mxu0 %v1049
    %v1327 = vpop.f32.mrb[0].mxu0
    %v1328 = vadd.f32 %v747, %v1327
    %v1329 = vpop.f32.mrb[0].mxu0
    %v1330 = vpop.f32.mrb[0].mxu0
    %v1331 = vadd.f32 %v747, %v1330
    %v1332 = vpop.f32.mrb[0].mxu0
    %1333 = vmatprep.mubr.bf16.mxu0 %v1053
    %1334 = vmatmul.mubr.bf16.gmra.mrb[0].mxu0 %v1052
    %v1335 = vpop.f32.mrb[0].mxu0
    %v1336 = vadd.f32 %v747, %v1335
    %v1337 = vpop.f32.mrb[0].mxu0
    %v1338 = vpop.f32.mrb[0].mxu0
    %v1339 = vadd.f32 %v747, %v1338
    %v1340 = vpop.f32.mrb[0].mxu0
    %1341 = vmatprep.mubr.bf16.mxu0 %v1056
    %1342 = vmatmul.mubr.bf16.gmra.mrb[0].mxu0 %v1055
    %v1343 = vpop.f32.mrb[0].mxu0
    %v1344 = vadd.f32 %v747, %v1343
    %v1345 = vpop.f32.mrb[0].mxu0
    %v1346 = vpop.f32.mrb[0].mxu0
    %v1347 = vadd.f32 %v747, %v1346
    %v1348 = vpop.f32.mrb[0].mxu0
    %1349 = vmatprep.mubr.bf16.mxu0 %v1059
    %1350 = vmatmul.mubr.bf16.gmra.mrb[0].mxu0 %v1058
    %v1351 = vpop.f32.mrb[0].mxu0
    %v1352 = vadd.f32 %v747, %v1351
    %v1353 = vpop.f32.mrb[0].mxu0
    %v1354 = vpop.f32.mrb[0].mxu0
    %v1355 = vadd.f32 %v747, %v1354
    %v1356 = vpop.f32.mrb[0].mxu0
    %1357 = vdwg.mxu0
    %1358 = vmatprep.subr.bf16.mxu0 0
    %1359 = vmatpush1.bf16.msra.mxu0 %v734
    %1360 = vmatprep.subr.bf16.mxu0 0
    %1361 = vmatpush1.bf16.msra.mxu0 %v735
    %1362 = vmatprep.subr.bf16.mxu0 0
    %1363 = vmatpush1.bf16.msra.mxu0 %v736
    %1364 = vmatprep.subr.bf16.mxu0 0
    %1365 = vmatpush1.bf16.msra.mxu0 %v737
    %1366 = vmatprep.subr.bf16.mxu0 0
    %1367 = vmatpush1.bf16.msra.mxu0 %v738
    %1368 = vmatprep.subr.bf16.mxu0 0
    %1369 = vmatpush1.bf16.msra.mxu0 %v739
    %1370 = vmatprep.subr.bf16.mxu0 0
    %1371 = vmatpush1.bf16.msra.mxu0 %v740
    %1372 = vmatprep.subr.bf16.mxu0 0
    %1373 = vmatpush1.bf16.msra.mxu0 %v741
    %1374 = vmatprep.subr.bf16.mxu0 0
    %1375 = vmatpush1.bf16.msra.mxu0 0
    %1376 = vmatprep.subr.bf16.mxu0 0
    %1377 = vmatpush1.bf16.msra.mxu0 0
    %1378 = vmatprep.subr.bf16.mxu0 0
    %1379 = vmatpush1.bf16.msra.mxu0 0
    %1380 = vmatprep.subr.bf16.mxu0 0
    %1381 = vmatpush1.bf16.msra.mxu0 0
    %1382 = vmatprep.subr.bf16.mxu0 0
    %1383 = vmatpush1.bf16.msra.mxu0 0
    %1384 = vmatprep.subr.bf16.mxu0 0
    %1385 = vmatpush1.bf16.msra.mxu0 0
    %1386 = vmatprep.subr.bf16.mxu0 0
    %1387 = vmatpush1.bf16.msra.mxu0 0
    %1388 = vmatprep.subr.bf16.mxu0 0
    %1389 = vmatpush1.bf16.msra.mxu0 0
    %1390 = vmatprep.mubr.bf16.mxu0 0
    %1391 = vmatmul.mubr.bf16.gmra.mrb[0].mxu0 %v991
    %v1392 = vpop.f32.mrb[0].mxu0
    %v1393 = vadd.f32 %v1168, %v1392
    %v1394 = vpop.f32.mrb[0].mxu0
    %v1395 = vpop.f32.mrb[0].mxu0
    %v1396 = vadd.f32 %v1171, %v1395
    %v1397 = vpop.f32.mrb[0].mxu0
    %1398 = vmatprep.mubr.bf16.mxu0 0
    %1399 = vmatmul.mubr.bf16.gmra.mrb[0].mxu0 %v994
    %v1400 = vpop.f32.mrb[0].mxu0
    %v1401 = vadd.f32 %v1176, %v1400
    %v1402 = vpop.f32.mrb[0].mxu0
    %v1403 = vpop.f32.mrb[0].mxu0
    %v1404 = vadd.f32 %v1179, %v1403
    %v1405 = vpop.f32.mrb[0].mxu0
    %1406 = vmatprep.mubr.bf16.mxu0 0
    %1407 = vmatmul.mubr.bf16.gmra.mrb[0].mxu0 %v997
    %v1408 = vpop.f32.mrb[0].mxu0
    %v1409 = vadd.f32 %v1184, %v1408
    %v1410 = vpop.f32.mrb[0].mxu0
    %v1411 = vpop.f32.mrb[0].mxu0
    %v1412 = vadd.f32 %v1187, %v1411
    %v1413 = vpop.f32.mrb[0].mxu0
    %1414 = vmatprep.mubr.bf16.mxu0 0
    %1415 = vmatmul.mubr.bf16.gmra.mrb[0].mxu0 %v1000
    %v1416 = vpop.f32.mrb[0].mxu0
    %v1417 = vadd.f32 %v1192, %v1416
    %v1418 = vpop.f32.mrb[0].mxu0
    %v1419 = vpop.f32.mrb[0].mxu0
    %v1420 = vadd.f32 %v1195, %v1419
    %v1421 = vpop.f32.mrb[0].mxu0
    %1422 = vmatprep.mubr.bf16.mxu0 0
    %1423 = vmatmul.mubr.bf16.gmra.mrb[0].mxu0 %v1003
    %v1424 = vpop.f32.mrb[0].mxu0
    %v1425 = vadd.f32 %v1200, %v1424
    %v1426 = vpop.f32.mrb[0].mxu0
    %v1427 = vpop.f32.mrb[0].mxu0
    %v1428 = vadd.f32 %v1203, %v1427
    %v1429 = vpop.f32.mrb[0].mxu0
    %1430 = vmatprep.mubr.bf16.mxu0 0
    %1431 = vmatmul.mubr.bf16.gmra.mrb[0].mxu0 %v1006
    %v1432 = vpop.f32.mrb[0].mxu0
    %v1433 = vadd.f32 %v1208, %v1432
    %v1434 = vpop.f32.mrb[0].mxu0
    %v1435 = vpop.f32.mrb[0].mxu0
    %v1436 = vadd.f32 %v1211, %v1435
    %v1437 = vpop.f32.mrb[0].mxu0
    %1438 = vmatprep.mubr.bf16.mxu0 0
    %1439 = vmatmul.mubr.bf16.gmra.mrb[0].mxu0 %v1009
    %v1440 = vpop.f32.mrb[0].mxu0
    %v1441 = vadd.f32 %v1216, %v1440
    %v1442 = vpop.f32.mrb[0].mxu0
    %v1443 = vpop.f32.mrb[0].mxu0
    %v1444 = vadd.f32 %v1219, %v1443
    %v1445 = vpop.f32.mrb[0].mxu0
    %1446 = vmatprep.mubr.bf16.mxu0 0
    %1447 = vmatmul.mubr.bf16.gmra.mrb[0].mxu0 %v1012
    %v1448 = vpop.f32.mrb[0].mxu0
    %v1449 = vadd.f32 %v1224, %v1448
    %v1450 = vpop.f32.mrb[0].mxu0
    %v1451 = vpop.f32.mrb[0].mxu0
    %v1452 = vadd.f32 %v1227, %v1451
    %v1453 = vpop.f32.mrb[0].mxu0
    %1454 = vmatprep.mubr.bf16.mxu0 0
    %1455 = vmatmul.mubr.bf16.gmra.mrb[0].mxu0 %v1015
    %v1456 = vpop.f32.mrb[0].mxu0
    %v1457 = vadd.f32 %v1232, %v1456
    %v1458 = vpop.f32.mrb[0].mxu0
    %v1459 = vpop.f32.mrb[0].mxu0
    %v1460 = vadd.f32 %v1235, %v1459
    %v1461 = vpop.f32.mrb[0].mxu0
    %1462 = vmatprep.mubr.bf16.mxu0 0
    %1463 = vmatmul.mubr.bf16.gmra.mrb[0].mxu0 %v1018
    %v1464 = vpop.f32.mrb[0].mxu0
    %v1465 = vadd.f32 %v1240, %v1464
    %v1466 = vpop.f32.mrb[0].mxu0
    %v1467 = vpop.f32.mrb[0].mxu0
    %v1468 = vadd.f32 %v1243, %v1467
    %v1469 = vpop.f32.mrb[0].mxu0
    %1470 = vmatprep.mubr.bf16.mxu0 0
    %1471 = vmatmul.mubr.bf16.gmra.mrb[0].mxu0 %v1021
    %v1472 = vpop.f32.mrb[0].mxu0
    %v1473 = vadd.f32 %v1248, %v1472
    %v1474 = vpop.f32.mrb[0].mxu0
    %v1475 = vpop.f32.mrb[0].mxu0
    %v1476 = vadd.f32 %v1251, %v1475
    %v1477 = vpop.f32.mrb[0].mxu0
    %1478 = vmatprep.mubr.bf16.mxu0 0
    %1479 = vmatmul.mubr.bf16.gmra.mrb[0].mxu0 %v1024
    %v1480 = vpop.f32.mrb[0].mxu0
    %v1481 = vadd.f32 %v1256, %v1480
    %v1482 = vpop.f32.mrb[0].mxu0
    %v1483 = vpop.f32.mrb[0].mxu0
    %v1484 = vadd.f32 %v1259, %v1483
    %v1485 = vpop.f32.mrb[0].mxu0
    %1486 = vmatprep.mubr.bf16.mxu0 0
    %1487 = vmatmul.mubr.bf16.gmra.mrb[0].mxu0 %v1027
    %v1488 = vpop.f32.mrb[0].mxu0
    %v1489 = vadd.f32 %v1264, %v1488
    %v1490 = vpop.f32.mrb[0].mxu0
    %v1491 = vpop.f32.mrb[0].mxu0
    %v1492 = vadd.f32 %v1267, %v1491
    %v1493 = vpop.f32.mrb[0].mxu0
    %1494 = vmatprep.mubr.bf16.mxu0 0
    %1495 = vmatmul.mubr.bf16.gmra.mrb[0].mxu0 %v1030
    %v1496 = vpop.f32.mrb[0].mxu0
    %v1497 = vadd.f32 %v1272, %v1496
    %v1498 = vpop.f32.mrb[0].mxu0
    %v1499 = vpop.f32.mrb[0].mxu0
    %v1500 = vadd.f32 %v1275, %v1499
    %v1501 = vpop.f32.mrb[0].mxu0
    %1502 = vmatprep.mubr.bf16.mxu0 0
    %1503 = vmatmul.mubr.bf16.gmra.mrb[0].mxu0 %v1033
    %v1504 = vpop.f32.mrb[0].mxu0
    %v1505 = vadd.f32 %v1280, %v1504
    %v1506 = vpop.f32.mrb[0].mxu0
    %v1507 = vpop.f32.mrb[0].mxu0
    %v1508 = vadd.f32 %v1283, %v1507
    %v1509 = vpop.f32.mrb[0].mxu0
    %1510 = vmatprep.mubr.bf16.mxu0 0
    %1511 = vmatmul.mubr.bf16.gmra.mrb[0].mxu0 %v1036
    %v1512 = vpop.f32.mrb[0].mxu0
    %v1513 = vadd.f32 %v1288, %v1512
    %v1514 = vpop.f32.mrb[0].mxu0
    %v1515 = vpop.f32.mrb[0].mxu0
    %v1516 = vadd.f32 %v1291, %v1515
    %v1517 = vpop.f32.mrb[0].mxu0
    %1518 = vmatprep.mubr.bf16.mxu0 0
    %1519 = vmatmul.mubr.bf16.gmra.mrb[0].mxu0 %v1039
    %v1520 = vpop.f32.mrb[0].mxu0
    %v1521 = vadd.f32 %v1296, %v1520
    %v1522 = vpop.f32.mrb[0].mxu0
    %v1523 = vpop.f32.mrb[0].mxu0
    %v1524 = vadd.f32 %v1299, %v1523
    %v1525 = vpop.f32.mrb[0].mxu0
    %1526 = vmatprep.mubr.bf16.mxu0 0
    %1527 = vmatmul.mubr.bf16.gmra.mrb[0].mxu0 %v1042
    %v1528 = vpop.f32.mrb[0].mxu0
    %v1529 = vadd.f32 %v1304, %v1528
    %v1530 = vpop.f32.mrb[0].mxu0
    %v1531 = vpop.f32.mrb[0].mxu0
    %v1532 = vadd.f32 %v1307, %v1531
    %v1533 = vpop.f32.mrb[0].mxu0
    %1534 = vmatprep.mubr.bf16.mxu0 0
    %1535 = vmatmul.mubr.bf16.gmra.mrb[0].mxu0 %v1045
    %v1536 = vpop.f32.mrb[0].mxu0
    %v1537 = vadd.f32 %v1312, %v1536
    %v1538 = vpop.f32.mrb[0].mxu0
    %v1539 = vpop.f32.mrb[0].mxu0
    %v1540 = vadd.f32 %v1315, %v1539
    %v1541 = vpop.f32.mrb[0].mxu0
    %1542 = vmatprep.mubr.bf16.mxu0 0
    %1543 = vmatmul.mubr.bf16.gmra.mrb[0].mxu0 %v1048
    %v1544 = vpop.f32.mrb[0].mxu0
    %v1545 = vadd.f32 %v1320, %v1544
    %v1546 = vpop.f32.mrb[0].mxu0
    %v1547 = vpop.f32.mrb[0].mxu0
    %v1548 = vadd.f32 %v1323, %v1547
    %v1549 = vpop.f32.mrb[0].mxu0
    %1550 = vmatprep.mubr.bf16.mxu0 0
    %1551 = vmatmul.mubr.bf16.gmra.mrb[0].mxu0 %v1051
    %v1552 = vpop.f32.mrb[0].mxu0
    %v1553 = vadd.f32 %v1328, %v1552
    %v1554 = vpop.f32.mrb[0].mxu0
    %v1555 = vpop.f32.mrb[0].mxu0
    %v1556 = vadd.f32 %v1331, %v1555
    %v1557 = vpop.f32.mrb[0].mxu0
    %1558 = vmatprep.mubr.bf16.mxu0 0
    %1559 = vmatmul.mubr.bf16.gmra.mrb[0].mxu0 %v1054
    %v1560 = vpop.f32.mrb[0].mxu0
    %v1561 = vadd.f32 %v1336, %v1560
    %v1562 = vpop.f32.mrb[0].mxu0
    %v1563 = vpop.f32.mrb[0].mxu0
    %v1564 = vadd.f32 %v1339, %v1563
    %v1565 = vpop.f32.mrb[0].mxu0
    %1566 = vmatprep.mubr.bf16.mxu0 0
    %1567 = vmatmul.mubr.bf16.gmra.mrb[0].mxu0 %v1057
    %v1568 = vpop.f32.mrb[0].mxu0
    %v1569 = vadd.f32 %v1344, %v1568
    %v1570 = vpop.f32.mrb[0].mxu0
    %v1571 = vpop.f32.mrb[0].mxu0
    %v1572 = vadd.f32 %v1347, %v1571
    %v1573 = vpop.f32.mrb[0].mxu0
    %1574 = vmatprep.mubr.bf16.mxu0 0
    %1575 = vmatmul.mubr.bf16.gmra.mrb[0].mxu0 %v1060
    %v1576 = vpop.f32.mrb[0].mxu0
    %v1577 = vadd.f32 %v1352, %v1576
    %v1578 = vpop.f32.mrb[0].mxu0
    %v1579 = vpop.f32.mrb[0].mxu0
    %v1580 = vadd.f32 %v1355, %v1579
    %v1581 = vpop.f32.mrb[0].mxu0
    %1582 = vdwg.mxu0
    %v1583 = vmax.f32 %v1393, 0.0
    %v1584 = vmax.f32 %v1396, 0.0
    %v1585 = vmax.f32 %v1401, 0.0
    %v1586 = vmax.f32 %v1404, 0.0
    %v1587 = vmax.f32 %v1409, 0.0
    %v1588 = vmax.f32 %v1412, 0.0
    %v1589 = vmax.f32 %v1417, 0.0
    %v1590 = vmax.f32 %v1420, 0.0
    %v1591 = vmax.f32 %v1425, 0.0
    %v1592 = vmax.f32 %v1428, 0.0
    %v1593 = vmax.f32 %v1433, 0.0
    %v1594 = vmax.f32 %v1436, 0.0
    %v1595 = vmax.f32 %v1441, 0.0
    %v1596 = vmax.f32 %v1444, 0.0
    %v1597 = vmax.f32 %v1449, 0.0
    %v1598 = vmax.f32 %v1452, 0.0
    %v1599 = vmax.f32 %v1457, 0.0
    %v1600 = vmax.f32 %v1460, 0.0
    %v1601 = vmax.f32 %v1465, 0.0
    %v1602 = vmax.f32 %v1468, 0.0
    %v1603 = vmax.f32 %v1473, 0.0
    %v1604 = vmax.f32 %v1476, 0.0
    %v1605 = vmax.f32 %v1481, 0.0
    %v1606 = vmax.f32 %v1484, 0.0
    %v1607 = vmax.f32 %v1489, 0.0
    %v1608 = vmax.f32 %v1492, 0.0
    %v1609 = vmax.f32 %v1497, 0.0
    %v1610 = vmax.f32 %v1500, 0.0
    %v1611 = vmax.f32 %v1505, 0.0
    %v1612 = vmax.f32 %v1508, 0.0
    %v1613 = vmax.f32 %v1513, 0.0
    %v1614 = vmax.f32 %v1516, 0.0
    %v1615 = vmax.f32 %v1521, 0.0
    %v1616 = vmax.f32 %v1524, 0.0
    %v1617 = vmax.f32 %v1529, 0.0
    %v1618 = vmax.f32 %v1532, 0.0
    %v1619 = vmax.f32 %v1537, 0.0
    %v1620 = vmax.f32 %v1540, 0.0
    %v1621 = vmax.f32 %v1545, 0.0
    %v1622 = vmax.f32 %v1548, 0.0
    %v1623 = vmax.f32 %v1553, 0.0
    %v1624 = vmax.f32 %v1556, 0.0
    %v1625 = vmax.f32 %v1561, 0.0
    %v1626 = vmax.f32 %v1564, 0.0
    %v1627 = vmax.f32 %v1569, 0.0
    %v1628 = vmax.f32 %v1572, 0.0
    %v1629 = vmax.f32 %v1577, 0.0
    %v1630 = vmax.f32 %v1580, 0.0
    %v1631 = vpack.c.bf16 %v1584, %v1583
    %v1632 = vpack.c.bf16 %v1586, %v1585
    %v1633 = vpack.c.bf16 %v1588, %v1587
    %v1634 = vpack.c.bf16 %v1590, %v1589
    %v1635 = vpack.c.bf16 %v1592, %v1591
    %v1636 = vpack.c.bf16 %v1594, %v1593
    %v1637 = vpack.c.bf16 %v1596, %v1595
    %v1638 = vpack.c.bf16 %v1598, %v1597
    %v1639 = vpack.c.bf16 %v1600, %v1599
    %v1640 = vpack.c.bf16 %v1602, %v1601
    %v1641 = vpack.c.bf16 %v1604, %v1603
    %v1642 = vpack.c.bf16 %v1606, %v1605
    %v1643 = vpack.c.bf16 %v1608, %v1607
    %v1644 = vpack.c.bf16 %v1610, %v1609
    %v1645 = vpack.c.bf16 %v1612, %v1611
    %v1646 = vpack.c.bf16 %v1614, %v1613
    %v1647 = vpack.c.bf16 %v1616, %v1615
    %v1648 = vpack.c.bf16 %v1618, %v1617
    %v1649 = vpack.c.bf16 %v1620, %v1619
    %v1650 = vpack.c.bf16 %v1622, %v1621
    %v1651 = vpack.c.bf16 %v1624, %v1623
    %v1652 = vpack.c.bf16 %v1626, %v1625
    %v1653 = vpack.c.bf16 %v1628, %v1627
    %v1654 = vpack.c.bf16 %v1630, %v1629
    %v1655 = vld [vmem:[#allocation8] sm:$0xf]
    %v1656 = vld [vmem:[#allocation8 + $0x4] sm:$0xf]
    %v1657 = vld [vmem:[#allocation8 + $0x8] sm:$0xf]
    %v1658 = vld [vmem:[#allocation8 + $0xc] sm:$0xf]
    %v1659 = vld [vmem:[#allocation8 + $0x10] sm:$0xf]
    %v1660 = vld [vmem:[#allocation8 + $0x14] sm:$0xf]
    %v1661 = vld [vmem:[#allocation8 + $0x18] sm:$0xf]
    %v1662 = vld [vmem:[#allocation8 + $0x1c] sm:$0xf]
    %v1663 = vld [vmem:[#allocation8 + $0x20] sm:$0xf]
    %v1664 = vld [vmem:[#allocation8 + $0x24] sm:$0xf]
    %v1665 = vld [vmem:[#allocation8 + $0x28] sm:$0xf]
    %v1666 = vld [vmem:[#allocation8 + $0x2c] sm:$0xf]
    %v1667 = vld [vmem:[#allocation8 + $0x30] sm:$0xf]
    %v1668 = vld [vmem:[#allocation8 + $0x34] sm:$0xf]
    %v1669 = vld [vmem:[#allocation8 + $0x38] sm:$0xf]
    %v1670 = vld [vmem:[#allocation8 + $0x3c] sm:$0xf]
    %v1687 = vunpack.c.l.b16 %v1655
    %v1688 = vunpack.c.l.b16 %v1656
    %v1689 = vunpack.c.l.b16 %v1657
    %v1690 = vunpack.c.l.b16 %v1658
    %v1691 = vunpack.c.l.b16 %v1659
    %v1692 = vunpack.c.l.b16 %v1660
    %v1693 = vunpack.c.l.b16 %v1661
    %v1694 = vunpack.c.l.b16 %v1662
    %v1695 = vunpack.c.l.b16 %v1663
    %v1696 = vunpack.c.l.b16 %v1664
    %v1697 = vunpack.c.l.b16 %v1665
    %v1698 = vunpack.c.l.b16 %v1666
    %v1699 = vunpack.c.l.b16 %v1667
    %v1700 = vunpack.c.l.b16 %v1668
    %v1701 = vunpack.c.l.b16 %v1669
    %v1702 = vunpack.c.l.b16 %v1670
    %v1703 = vpack.c.b16 %v1688, %v1687
    %v1704 = vpack.c.b16 %v1690, %v1689
    %v1705 = vpack.c.b16 %v1692, %v1691
    %v1706 = vpack.c.b16 %v1694, %v1693
    %v1707 = vpack.c.b16 %v1696, %v1695
    %v1708 = vpack.c.b16 %v1698, %v1697
    %v1709 = vpack.c.b16 %v1700, %v1699
    %v1710 = vpack.c.b16 %v1702, %v1701
    %1719 = vmatprep.subr.bf16.mxu0 0
    %1720 = vmatpush1.bf16.msra.mxu0 %v1703
    %1721 = vmatprep.subr.bf16.mxu0 0
    %1722 = vmatpush1.bf16.msra.mxu0 %v1704
    %1723 = vmatprep.subr.bf16.mxu0 0
    %1724 = vmatpush1.bf16.msra.mxu0 %v1705
    %1725 = vmatprep.subr.bf16.mxu0 0
    %1726 = vmatpush1.bf16.msra.mxu0 %v1706
    %1727 = vmatprep.subr.bf16.mxu0 0
    %1728 = vmatpush1.bf16.msra.mxu0 %v1707
    %1729 = vmatprep.subr.bf16.mxu0 0
    %1730 = vmatpush1.bf16.msra.mxu0 %v1708
    %1731 = vmatprep.subr.bf16.mxu0 0
    %1732 = vmatpush1.bf16.msra.mxu0 %v1709
    %1733 = vmatprep.subr.bf16.mxu0 0
    %1734 = vmatpush1.bf16.msra.mxu0 %v1710
    %1735 = vmatprep.subr.bf16.mxu0 0
    %1736 = vmatpush1.bf16.msra.mxu0 0
    %1737 = vmatprep.subr.bf16.mxu0 0
    %1738 = vmatpush1.bf16.msra.mxu0 0
    %1739 = vmatprep.subr.bf16.mxu0 0
    %1740 = vmatpush1.bf16.msra.mxu0 0
    %1741 = vmatprep.subr.bf16.mxu0 0
    %1742 = vmatpush1.bf16.msra.mxu0 0
    %1743 = vmatprep.subr.bf16.mxu0 0
    %1744 = vmatpush1.bf16.msra.mxu0 0
    %1745 = vmatprep.subr.bf16.mxu0 0
    %1746 = vmatpush1.bf16.msra.mxu0 0
    %1747 = vmatprep.subr.bf16.mxu0 0
    %1748 = vmatpush1.bf16.msra.mxu0 0
    %1749 = vmatprep.subr.bf16.mxu0 0
    %1750 = vmatpush1.bf16.msra.mxu0 0
    %1751 = vmatprep.mubr.bf16.mxu0 0
    %1752 = vmatmul.mubr.bf16.gmra.mrb[0].mxu0 %v1631
    %v1753 = vpop.f32.mrb[0].mxu0
    %v1754 = vadd.f32 0.0, %v1753
    %v1755 = vpop.f32.mrb[0].mxu0
    %v1756 = vpop.f32.mrb[0].mxu0
    %v1757 = vadd.f32 0.0, %v1756
    %v1758 = vpop.f32.mrb[0].mxu0
    %1759 = vmatprep.mubr.bf16.mxu0 0
    %1760 = vmatmul.mubr.bf16.gmra.mrb[0].mxu0 %v1632
    %v1761 = vpop.f32.mrb[0].mxu0
    %v1762 = vadd.f32 0.0, %v1761
    %v1763 = vpop.f32.mrb[0].mxu0
    %v1764 = vpop.f32.mrb[0].mxu0
    %v1765 = vadd.f32 0.0, %v1764
    %v1766 = vpop.f32.mrb[0].mxu0
    %1767 = vmatprep.mubr.bf16.mxu0 0
    %1768 = vmatmul.mubr.bf16.gmra.mrb[0].mxu0 %v1633
    %v1769 = vpop.f32.mrb[0].mxu0
    %v1770 = vadd.f32 0.0, %v1769
    %v1771 = vpop.f32.mrb[0].mxu0
    %v1772 = vpop.f32.mrb[0].mxu0
    %v1773 = vadd.f32 0.0, %v1772
    %v1774 = vpop.f32.mrb[0].mxu0
    %1775 = vmatprep.mubr.bf16.mxu0 0
    %1776 = vmatmul.mubr.bf16.gmra.mrb[0].mxu0 %v1634
    %v1777 = vpop.f32.mrb[0].mxu0
    %v1778 = vadd.f32 0.0, %v1777
    %v1779 = vpop.f32.mrb[0].mxu0
    %v1780 = vpop.f32.mrb[0].mxu0
    %v1781 = vadd.f32 0.0, %v1780
    %v1782 = vpop.f32.mrb[0].mxu0
    %1783 = vmatprep.mubr.bf16.mxu0 0
    %1784 = vmatmul.mubr.bf16.gmra.mrb[0].mxu0 %v1635
    %v1785 = vpop.f32.mrb[0].mxu0
    %v1786 = vadd.f32 0.0, %v1785
    %v1787 = vpop.f32.mrb[0].mxu0
    %v1788 = vpop.f32.mrb[0].mxu0
    %v1789 = vadd.f32 0.0, %v1788
    %v1790 = vpop.f32.mrb[0].mxu0
    %1791 = vmatprep.mubr.bf16.mxu0 0
    %1792 = vmatmul.mubr.bf16.gmra.mrb[0].mxu0 %v1636
    %v1793 = vpop.f32.mrb[0].mxu0
    %v1794 = vadd.f32 0.0, %v1793
    %v1795 = vpop.f32.mrb[0].mxu0
    %v1796 = vpop.f32.mrb[0].mxu0
    %v1797 = vadd.f32 0.0, %v1796
    %v1798 = vpop.f32.mrb[0].mxu0
    %1799 = vmatprep.mubr.bf16.mxu0 0
    %1800 = vmatmul.mubr.bf16.gmra.mrb[0].mxu0 %v1637
    %v1801 = vpop.f32.mrb[0].mxu0
    %v1802 = vadd.f32 0.0, %v1801
    %v1803 = vpop.f32.mrb[0].mxu0
    %v1804 = vpop.f32.mrb[0].mxu0
    %v1805 = vadd.f32 0.0, %v1804
    %v1806 = vpop.f32.mrb[0].mxu0
    %1807 = vmatprep.mubr.bf16.mxu0 0
    %1808 = vmatmul.mubr.bf16.gmra.mrb[0].mxu0 %v1638
    %v1809 = vpop.f32.mrb[0].mxu0
    %v1810 = vadd.f32 0.0, %v1809
    %v1811 = vpop.f32.mrb[0].mxu0
    %v1812 = vpop.f32.mrb[0].mxu0
    %v1813 = vadd.f32 0.0, %v1812
    %v1814 = vpop.f32.mrb[0].mxu0
    %1815 = vmatprep.mubr.bf16.mxu0 0
    %1816 = vmatmul.mubr.bf16.gmra.mrb[0].mxu0 %v1639
    %v1817 = vpop.f32.mrb[0].mxu0
    %v1818 = vadd.f32 0.0, %v1817
    %v1819 = vpop.f32.mrb[0].mxu0
    %v1820 = vpop.f32.mrb[0].mxu0
    %v1821 = vadd.f32 0.0, %v1820
    %v1822 = vpop.f32.mrb[0].mxu0
    %1823 = vmatprep.mubr.bf16.mxu0 0
    %1824 = vmatmul.mubr.bf16.gmra.mrb[0].mxu0 %v1640
    %v1825 = vpop.f32.mrb[0].mxu0
    %v1826 = vadd.f32 0.0, %v1825
    %v1827 = vpop.f32.mrb[0].mxu0
    %v1828 = vpop.f32.mrb[0].mxu0
    %v1829 = vadd.f32 0.0, %v1828
    %v1830 = vpop.f32.mrb[0].mxu0
    %1831 = vmatprep.mubr.bf16.mxu0 0
    %1832 = vmatmul.mubr.bf16.gmra.mrb[0].mxu0 %v1641
    %v1833 = vpop.f32.mrb[0].mxu0
    %v1834 = vadd.f32 0.0, %v1833
    %v1835 = vpop.f32.mrb[0].mxu0
    %v1836 = vpop.f32.mrb[0].mxu0
    %v1837 = vadd.f32 0.0, %v1836
    %v1838 = vpop.f32.mrb[0].mxu0
    %1839 = vmatprep.mubr.bf16.mxu0 0
    %1840 = vmatmul.mubr.bf16.gmra.mrb[0].mxu0 %v1642
    %v1841 = vpop.f32.mrb[0].mxu0
    %v1842 = vadd.f32 0.0, %v1841
    %v1843 = vpop.f32.mrb[0].mxu0
    %v1844 = vpop.f32.mrb[0].mxu0
    %v1845 = vadd.f32 0.0, %v1844
    %v1846 = vpop.f32.mrb[0].mxu0
    %1847 = vmatprep.mubr.bf16.mxu0 0
    %1848 = vmatmul.mubr.bf16.gmra.mrb[0].mxu0 %v1643
    %v1849 = vpop.f32.mrb[0].mxu0
    %v1850 = vadd.f32 0.0, %v1849
    %v1851 = vpop.f32.mrb[0].mxu0
    %v1852 = vpop.f32.mrb[0].mxu0
    %v1853 = vadd.f32 0.0, %v1852
    %v1854 = vpop.f32.mrb[0].mxu0
    %1855 = vmatprep.mubr.bf16.mxu0 0
    %1856 = vmatmul.mubr.bf16.gmra.mrb[0].mxu0 %v1644
    %v1857 = vpop.f32.mrb[0].mxu0
    %v1858 = vadd.f32 0.0, %v1857
    %v1859 = vpop.f32.mrb[0].mxu0
    %v1860 = vpop.f32.mrb[0].mxu0
    %v1861 = vadd.f32 0.0, %v1860
    %v1862 = vpop.f32.mrb[0].mxu0
    %1863 = vmatprep.mubr.bf16.mxu0 0
    %1864 = vmatmul.mubr.bf16.gmra.mrb[0].mxu0 %v1645
    %v1865 = vpop.f32.mrb[0].mxu0
    %v1866 = vadd.f32 0.0, %v1865
    %v1867 = vpop.f32.mrb[0].mxu0
    %v1868 = vpop.f32.mrb[0].mxu0
    %v1869 = vadd.f32 0.0, %v1868
    %v1870 = vpop.f32.mrb[0].mxu0
    %1871 = vmatprep.mubr.bf16.mxu0 0
    %1872 = vmatmul.mubr.bf16.gmra.mrb[0].mxu0 %v1646
    %v1873 = vpop.f32.mrb[0].mxu0
    %v1874 = vadd.f32 0.0, %v1873
    %v1875 = vpop.f32.mrb[0].mxu0
    %v1876 = vpop.f32.mrb[0].mxu0
    %v1877 = vadd.f32 0.0, %v1876
    %v1878 = vpop.f32.mrb[0].mxu0
    %1879 = vmatprep.mubr.bf16.mxu0 0
    %1880 = vmatmul.mubr.bf16.gmra.mrb[0].mxu0 %v1647
    %v1881 = vpop.f32.mrb[0].mxu0
    %v1882 = vadd.f32 0.0, %v1881
    %v1883 = vpop.f32.mrb[0].mxu0
    %v1884 = vpop.f32.mrb[0].mxu0
    %v1885 = vadd.f32 0.0, %v1884
    %v1886 = vpop.f32.mrb[0].mxu0
    %1887 = vmatprep.mubr.bf16.mxu0 0
    %1888 = vmatmul.mubr.bf16.gmra.mrb[0].mxu0 %v1648
    %v1889 = vpop.f32.mrb[0].mxu0
    %v1890 = vadd.f32 0.0, %v1889
    %v1891 = vpop.f32.mrb[0].mxu0
    %v1892 = vpop.f32.mrb[0].mxu0
    %v1893 = vadd.f32 0.0, %v1892
    %v1894 = vpop.f32.mrb[0].mxu0
    %1895 = vmatprep.mubr.bf16.mxu0 0
    %1896 = vmatmul.mubr.bf16.gmra.mrb[0].mxu0 %v1649
    %v1897 = vpop.f32.mrb[0].mxu0
    %v1898 = vadd.f32 0.0, %v1897
    %v1899 = vpop.f32.mrb[0].mxu0
    %v1900 = vpop.f32.mrb[0].mxu0
    %v1901 = vadd.f32 0.0, %v1900
    %v1902 = vpop.f32.mrb[0].mxu0
    %1903 = vmatprep.mubr.bf16.mxu0 0
    %1904 = vmatmul.mubr.bf16.gmra.mrb[0].mxu0 %v1650
    %v1905 = vpop.f32.mrb[0].mxu0
    %v1906 = vadd.f32 0.0, %v1905
    %v1907 = vpop.f32.mrb[0].mxu0
    %v1908 = vpop.f32.mrb[0].mxu0
    %v1909 = vadd.f32 0.0, %v1908
    %v1910 = vpop.f32.mrb[0].mxu0
    %1911 = vmatprep.mubr.bf16.mxu0 0
    %1912 = vmatmul.mubr.bf16.gmra.mrb[0].mxu0 %v1651
    %v1913 = vpop.f32.mrb[0].mxu0
    %v1914 = vadd.f32 0.0, %v1913
    %v1915 = vpop.f32.mrb[0].mxu0
    %v1916 = vpop.f32.mrb[0].mxu0
    %v1917 = vadd.f32 0.0, %v1916
    %v1918 = vpop.f32.mrb[0].mxu0
    %1919 = vmatprep.mubr.bf16.mxu0 0
    %1920 = vmatmul.mubr.bf16.gmra.mrb[0].mxu0 %v1652
    %v1921 = vpop.f32.mrb[0].mxu0
    %v1922 = vadd.f32 0.0, %v1921
    %v1923 = vpop.f32.mrb[0].mxu0
    %v1924 = vpop.f32.mrb[0].mxu0
    %v1925 = vadd.f32 0.0, %v1924
    %v1926 = vpop.f32.mrb[0].mxu0
    %1927 = vmatprep.mubr.bf16.mxu0 0
    %1928 = vmatmul.mubr.bf16.gmra.mrb[0].mxu0 %v1653
    %v1929 = vpop.f32.mrb[0].mxu0
    %v1930 = vadd.f32 0.0, %v1929
    %v1931 = vpop.f32.mrb[0].mxu0
    %v1932 = vpop.f32.mrb[0].mxu0
    %v1933 = vadd.f32 0.0, %v1932
    %v1934 = vpop.f32.mrb[0].mxu0
    %1935 = vmatprep.mubr.bf16.mxu0 0
    %1936 = vmatmul.mubr.bf16.gmra.mrb[0].mxu0 %v1654
    %v1937 = vpop.f32.mrb[0].mxu0
    %v1938 = vadd.f32 0.0, %v1937
    %v1939 = vpop.f32.mrb[0].mxu0
    %v1940 = vpop.f32.mrb[0].mxu0
    %v1941 = vadd.f32 0.0, %v1940
    %v1942 = vpop.f32.mrb[0].mxu0
    %1943 = vdwg.mxu0
    %v1944 = vpack.c.bf16 %v1757, %v1754
    %v1945 = vpack.c.bf16 %v1765, %v1762
    %v1946 = vpack.c.bf16 %v1773, %v1770
    %v1947 = vpack.c.bf16 %v1781, %v1778
    %v1948 = vpack.c.bf16 %v1789, %v1786
    %v1949 = vpack.c.bf16 %v1797, %v1794
    %v1950 = vpack.c.bf16 %v1805, %v1802
    %v1951 = vpack.c.bf16 %v1813, %v1810
    %v1952 = vpack.c.bf16 %v1821, %v1818
    %v1953 = vpack.c.bf16 %v1829, %v1826
    %v1954 = vpack.c.bf16 %v1837, %v1834
    %v1955 = vpack.c.bf16 %v1845, %v1842
    %v1956 = vpack.c.bf16 %v1853, %v1850
    %v1957 = vpack.c.bf16 %v1861, %v1858
    %v1958 = vpack.c.bf16 %v1869, %v1866
    %v1959 = vpack.c.bf16 %v1877, %v1874
    %v1960 = vpack.c.bf16 %v1885, %v1882
    %v1961 = vpack.c.bf16 %v1893, %v1890
    %v1962 = vpack.c.bf16 %v1901, %v1898
    %v1963 = vpack.c.bf16 %v1909, %v1906
    %v1964 = vpack.c.bf16 %v1917, %v1914
    %v1965 = vpack.c.bf16 %v1925, %v1922
    %v1966 = vpack.c.bf16 %v1933, %v1930
    %v1967 = vpack.c.bf16 %v1941, %v1938
    %v1968 = vld [vmem:[%s5] sm:$0x1]
    %v1970 = vlaneseq
    %v1971 = vshrl.u32 %v1970, 7
    %v1972 = vsub.s32 0, %v1971
    %v1973 = vrot.slane %v1968, %v1972
    %1975 = vmatprep.subr.bf16.mxu0 0
    %1976 = vmatpush1.bf16.msra.mxu0 %v1944
    %1977 = vmatprep.subr.bf16.mxu0 0
    %1978 = vmatpush1.bf16.msra.mxu0 %v1945
    %1979 = vmatprep.subr.bf16.mxu0 0
    %1980 = vmatpush1.bf16.msra.mxu0 %v1946
    %1981 = vmatprep.subr.bf16.mxu0 0
    %1982 = vmatpush1.bf16.msra.mxu0 %v1947
    %1983 = vmatprep.subr.bf16.mxu0 0
    %1984 = vmatpush1.bf16.msra.mxu0 %v1948
    %1985 = vmatprep.subr.bf16.mxu0 0
    %1986 = vmatpush1.bf16.msra.mxu0 %v1949
    %1987 = vmatprep.subr.bf16.mxu0 0
    %1988 = vmatpush1.bf16.msra.mxu0 %v1950
    %1989 = vmatprep.subr.bf16.mxu0 0
    %1990 = vmatpush1.bf16.msra.mxu0 %v1951
    %1991 = vmatprep.subr.bf16.mxu0 0
    %1992 = vmatpush1.bf16.msra.mxu0 %v1952
    %1993 = vmatprep.subr.bf16.mxu0 0
    %1994 = vmatpush1.bf16.msra.mxu0 %v1953
    %1995 = vmatprep.subr.bf16.mxu0 0
    %1996 = vmatpush1.bf16.msra.mxu0 %v1954
    %1997 = vmatprep.subr.bf16.mxu0 0
    %1998 = vmatpush1.bf16.msra.mxu0 %v1955
    %1999 = vmatprep.subr.bf16.mxu0 0
    %2000 = vmatpush1.bf16.msra.mxu0 %v1956
    %2001 = vmatprep.subr.bf16.mxu0 0
    %2002 = vmatpush1.bf16.msra.mxu0 %v1957
    %2003 = vmatprep.subr.bf16.mxu0 0
    %2004 = vmatpush1.bf16.msra.mxu0 %v1958
    %2005 = vmatprep.subr.bf16.mxu0 0
    %2006 = vmatpush1.bf16.msra.mxu0 %v1959
    %2007 = vmatprep.mubr.bf16.mxu0 %v990
    %2008 = vmatmul.mubr.bf16.gmra.mrb[0].mxu0 %v989
    %v2009 = vpop.f32.mrb[0].mxu0
    %v2010 = vadd.f32 %v1973, %v2009
    %v2011 = vpop.f32.mrb[0].mxu0
    %v2012 = vpop.f32.mrb[0].mxu0
    %v2013 = vadd.f32 %v1973, %v2012
    %v2014 = vpop.f32.mrb[0].mxu0
    %2015 = vmatprep.mubr.bf16.mxu0 %v993
    %2016 = vmatmul.mubr.bf16.gmra.mrb[0].mxu0 %v992
    %v2017 = vpop.f32.mrb[0].mxu0
    %v2018 = vadd.f32 %v1973, %v2017
    %v2019 = vpop.f32.mrb[0].mxu0
    %v2020 = vpop.f32.mrb[0].mxu0
    %v2021 = vadd.f32 %v1973, %v2020
    %v2022 = vpop.f32.mrb[0].mxu0
    %2023 = vmatprep.mubr.bf16.mxu0 %v996
    %2024 = vmatmul.mubr.bf16.gmra.mrb[0].mxu0 %v995
    %v2025 = vpop.f32.mrb[0].mxu0
    %v2026 = vadd.f32 %v1973, %v2025
    %v2027 = vpop.f32.mrb[0].mxu0
    %v2028 = vpop.f32.mrb[0].mxu0
    %v2029 = vadd.f32 %v1973, %v2028
    %v2030 = vpop.f32.mrb[0].mxu0
    %2031 = vmatprep.mubr.bf16.mxu0 %v999
    %2032 = vmatmul.mubr.bf16.gmra.mrb[0].mxu0 %v998
    %v2033 = vpop.f32.mrb[0].mxu0
    %v2034 = vadd.f32 %v1973, %v2033
    %v2035 = vpop.f32.mrb[0].mxu0
    %v2036 = vpop.f32.mrb[0].mxu0
    %v2037 = vadd.f32 %v1973, %v2036
    %v2038 = vpop.f32.mrb[0].mxu0
    %2039 = vmatprep.mubr.bf16.mxu0 %v1002
    %2040 = vmatmul.mubr.bf16.gmra.mrb[0].mxu0 %v1001
    %v2041 = vpop.f32.mrb[0].mxu0
    %v2042 = vadd.f32 %v1973, %v2041
    %v2043 = vpop.f32.mrb[0].mxu0
    %v2044 = vpop.f32.mrb[0].mxu0
    %v2045 = vadd.f32 %v1973, %v2044
    %v2046 = vpop.f32.mrb[0].mxu0
    %2047 = vmatprep.mubr.bf16.mxu0 %v1005
    %2048 = vmatmul.mubr.bf16.gmra.mrb[0].mxu0 %v1004
    %v2049 = vpop.f32.mrb[0].mxu0
    %v2050 = vadd.f32 %v1973, %v2049
    %v2051 = vpop.f32.mrb[0].mxu0
    %v2052 = vpop.f32.mrb[0].mxu0
    %v2053 = vadd.f32 %v1973, %v2052
    %v2054 = vpop.f32.mrb[0].mxu0
    %2055 = vmatprep.mubr.bf16.mxu0 %v1008
    %2056 = vmatmul.mubr.bf16.gmra.mrb[0].mxu0 %v1007
    %v2057 = vpop.f32.mrb[0].mxu0
    %v2058 = vadd.f32 %v1973, %v2057
    %v2059 = vpop.f32.mrb[0].mxu0
    %v2060 = vpop.f32.mrb[0].mxu0
    %v2061 = vadd.f32 %v1973, %v2060
    %v2062 = vpop.f32.mrb[0].mxu0
    %2063 = vmatprep.mubr.bf16.mxu0 %v1011
    %2064 = vmatmul.mubr.bf16.gmra.mrb[0].mxu0 %v1010
    %v2065 = vpop.f32.mrb[0].mxu0
    %v2066 = vadd.f32 %v1973, %v2065
    %v2067 = vpop.f32.mrb[0].mxu0
    %v2068 = vpop.f32.mrb[0].mxu0
    %v2069 = vadd.f32 %v1973, %v2068
    %v2070 = vpop.f32.mrb[0].mxu0
    %2071 = vmatprep.mubr.bf16.mxu0 %v1014
    %2072 = vmatmul.mubr.bf16.gmra.mrb[0].mxu0 %v1013
    %v2073 = vpop.f32.mrb[0].mxu0
    %v2074 = vadd.f32 %v1973, %v2073
    %v2075 = vpop.f32.mrb[0].mxu0
    %v2076 = vpop.f32.mrb[0].mxu0
    %v2077 = vadd.f32 %v1973, %v2076
    %v2078 = vpop.f32.mrb[0].mxu0
    %2079 = vmatprep.mubr.bf16.mxu0 %v1017
    %2080 = vmatmul.mubr.bf16.gmra.mrb[0].mxu0 %v1016
    %v2081 = vpop.f32.mrb[0].mxu0
    %v2082 = vadd.f32 %v1973, %v2081
    %v2083 = vpop.f32.mrb[0].mxu0
    %v2084 = vpop.f32.mrb[0].mxu0
    %v2085 = vadd.f32 %v1973, %v2084
    %v2086 = vpop.f32.mrb[0].mxu0
    %2087 = vmatprep.mubr.bf16.mxu0 %v1020
    %2088 = vmatmul.mubr.bf16.gmra.mrb[0].mxu0 %v1019
    %v2089 = vpop.f32.mrb[0].mxu0
    %v2090 = vadd.f32 %v1973, %v2089
    %v2091 = vpop.f32.mrb[0].mxu0
    %v2092 = vpop.f32.mrb[0].mxu0
    %v2093 = vadd.f32 %v1973, %v2092
    %v2094 = vpop.f32.mrb[0].mxu0
    %2095 = vmatprep.mubr.bf16.mxu0 %v1023
    %2096 = vmatmul.mubr.bf16.gmra.mrb[0].mxu0 %v1022
    %v2097 = vpop.f32.mrb[0].mxu0
    %v2098 = vadd.f32 %v1973, %v2097
    %v2099 = vpop.f32.mrb[0].mxu0
    %v2100 = vpop.f32.mrb[0].mxu0
    %v2101 = vadd.f32 %v1973, %v2100
    %v2102 = vpop.f32.mrb[0].mxu0
    %2103 = vmatprep.mubr.bf16.mxu0 %v1026
    %2104 = vmatmul.mubr.bf16.gmra.mrb[0].mxu0 %v1025
    %v2105 = vpop.f32.mrb[0].mxu0
    %v2106 = vadd.f32 %v1973, %v2105
    %v2107 = vpop.f32.mrb[0].mxu0
    %v2108 = vpop.f32.mrb[0].mxu0
    %v2109 = vadd.f32 %v1973, %v2108
    %v2110 = vpop.f32.mrb[0].mxu0
    %2111 = vmatprep.mubr.bf16.mxu0 %v1029
    %2112 = vmatmul.mubr.bf16.gmra.mrb[0].mxu0 %v1028
    %v2113 = vpop.f32.mrb[0].mxu0
    %v2114 = vadd.f32 %v1973, %v2113
    %v2115 = vpop.f32.mrb[0].mxu0
    %v2116 = vpop.f32.mrb[0].mxu0
    %v2117 = vadd.f32 %v1973, %v2116
    %v2118 = vpop.f32.mrb[0].mxu0
    %2119 = vmatprep.mubr.bf16.mxu0 %v1032
    %2120 = vmatmul.mubr.bf16.gmra.mrb[0].mxu0 %v1031
    %v2121 = vpop.f32.mrb[0].mxu0
    %v2122 = vadd.f32 %v1973, %v2121
    %v2123 = vpop.f32.mrb[0].mxu0
    %v2124 = vpop.f32.mrb[0].mxu0
    %v2125 = vadd.f32 %v1973, %v2124
    %v2126 = vpop.f32.mrb[0].mxu0
    %2127 = vmatprep.mubr.bf16.mxu0 %v1035
    %2128 = vmatmul.mubr.bf16.gmra.mrb[0].mxu0 %v1034
    %v2129 = vpop.f32.mrb[0].mxu0
    %v2130 = vadd.f32 %v1973, %v2129
    %v2131 = vpop.f32.mrb[0].mxu0
    %v2132 = vpop.f32.mrb[0].mxu0
    %v2133 = vadd.f32 %v1973, %v2132
    %v2134 = vpop.f32.mrb[0].mxu0
    %2135 = vmatprep.mubr.bf16.mxu0 %v1038
    %2136 = vmatmul.mubr.bf16.gmra.mrb[0].mxu0 %v1037
    %v2137 = vpop.f32.mrb[0].mxu0
    %v2138 = vadd.f32 %v1973, %v2137
    %v2139 = vpop.f32.mrb[0].mxu0
    %v2140 = vpop.f32.mrb[0].mxu0
    %v2141 = vadd.f32 %v1973, %v2140
    %v2142 = vpop.f32.mrb[0].mxu0
    %2143 = vmatprep.mubr.bf16.mxu0 %v1041
    %2144 = vmatmul.mubr.bf16.gmra.mrb[0].mxu0 %v1040
    %v2145 = vpop.f32.mrb[0].mxu0
    %v2146 = vadd.f32 %v1973, %v2145
    %v2147 = vpop.f32.mrb[0].mxu0
    %v2148 = vpop.f32.mrb[0].mxu0
    %v2149 = vadd.f32 %v1973, %v2148
    %v2150 = vpop.f32.mrb[0].mxu0
    %2151 = vmatprep.mubr.bf16.mxu0 %v1044
    %2152 = vmatmul.mubr.bf16.gmra.mrb[0].mxu0 %v1043
    %v2153 = vpop.f32.mrb[0].mxu0
    %v2154 = vadd.f32 %v1973, %v2153
    %v2155 = vpop.f32.mrb[0].mxu0
    %v2156 = vpop.f32.mrb[0].mxu0
    %v2157 = vadd.f32 %v1973, %v2156
    %v2158 = vpop.f32.mrb[0].mxu0
    %2159 = vmatprep.mubr.bf16.mxu0 %v1047
    %2160 = vmatmul.mubr.bf16.gmra.mrb[0].mxu0 %v1046
    %v2161 = vpop.f32.mrb[0].mxu0
    %v2162 = vadd.f32 %v1973, %v2161
    %v2163 = vpop.f32.mrb[0].mxu0
    %v2164 = vpop.f32.mrb[0].mxu0
    %v2165 = vadd.f32 %v1973, %v2164
    %v2166 = vpop.f32.mrb[0].mxu0
    %2167 = vmatprep.mubr.bf16.mxu0 %v1050
    %2168 = vmatmul.mubr.bf16.gmra.mrb[0].mxu0 %v1049
    %v2169 = vpop.f32.mrb[0].mxu0
    %v2170 = vadd.f32 %v1973, %v2169
    %v2171 = vpop.f32.mrb[0].mxu0
    %v2172 = vpop.f32.mrb[0].mxu0
    %v2173 = vadd.f32 %v1973, %v2172
    %v2174 = vpop.f32.mrb[0].mxu0
    %2175 = vmatprep.mubr.bf16.mxu0 %v1053
    %2176 = vmatmul.mubr.bf16.gmra.mrb[0].mxu0 %v1052
    %v2177 = vpop.f32.mrb[0].mxu0
    %v2178 = vadd.f32 %v1973, %v2177
    %v2179 = vpop.f32.mrb[0].mxu0
    %v2180 = vpop.f32.mrb[0].mxu0
    %v2181 = vadd.f32 %v1973, %v2180
    %v2182 = vpop.f32.mrb[0].mxu0
    %2183 = vmatprep.mubr.bf16.mxu0 %v1056
    %2184 = vmatmul.mubr.bf16.gmra.mrb[0].mxu0 %v1055
    %v2185 = vpop.f32.mrb[0].mxu0
    %v2186 = vadd.f32 %v1973, %v2185
    %v2187 = vpop.f32.mrb[0].mxu0
    %v2188 = vpop.f32.mrb[0].mxu0
    %v2189 = vadd.f32 %v1973, %v2188
    %v2190 = vpop.f32.mrb[0].mxu0
    %2191 = vmatprep.mubr.bf16.mxu0 %v1059
    %2192 = vmatmul.mubr.bf16.gmra.mrb[0].mxu0 %v1058
    %v2193 = vpop.f32.mrb[0].mxu0
    %v2194 = vadd.f32 %v1973, %v2193
    %v2195 = vpop.f32.mrb[0].mxu0
    %v2196 = vpop.f32.mrb[0].mxu0
    %v2197 = vadd.f32 %v1973, %v2196
    %v2198 = vpop.f32.mrb[0].mxu0
    %2199 = vdwg.mxu0
    %2200 = vmatprep.subr.bf16.mxu0 0
    %2201 = vmatpush1.bf16.msra.mxu0 %v1960
    %2202 = vmatprep.subr.bf16.mxu0 0
    %2203 = vmatpush1.bf16.msra.mxu0 %v1961
    %2204 = vmatprep.subr.bf16.mxu0 0
    %2205 = vmatpush1.bf16.msra.mxu0 %v1962
    %2206 = vmatprep.subr.bf16.mxu0 0
    %2207 = vmatpush1.bf16.msra.mxu0 %v1963
    %2208 = vmatprep.subr.bf16.mxu0 0
    %2209 = vmatpush1.bf16.msra.mxu0 %v1964
    %2210 = vmatprep.subr.bf16.mxu0 0
    %2211 = vmatpush1.bf16.msra.mxu0 %v1965
    %2212 = vmatprep.subr.bf16.mxu0 0
    %2213 = vmatpush1.bf16.msra.mxu0 %v1966
    %2214 = vmatprep.subr.bf16.mxu0 0
    %2215 = vmatpush1.bf16.msra.mxu0 %v1967
    %2216 = vmatprep.subr.bf16.mxu0 0
    %2217 = vmatpush1.bf16.msra.mxu0 0
    %2218 = vmatprep.subr.bf16.mxu0 0
    %2219 = vmatpush1.bf16.msra.mxu0 0
    %2220 = vmatprep.subr.bf16.mxu0 0
    %2221 = vmatpush1.bf16.msra.mxu0 0
    %2222 = vmatprep.subr.bf16.mxu0 0
    %2223 = vmatpush1.bf16.msra.mxu0 0
    %2224 = vmatprep.subr.bf16.mxu0 0
    %2225 = vmatpush1.bf16.msra.mxu0 0
    %2226 = vmatprep.subr.bf16.mxu0 0
    %2227 = vmatpush1.bf16.msra.mxu0 0
    %2228 = vmatprep.subr.bf16.mxu0 0
    %2229 = vmatpush1.bf16.msra.mxu0 0
    %2230 = vmatprep.subr.bf16.mxu0 0
    %2231 = vmatpush1.bf16.msra.mxu0 0
    %2232 = vmatprep.mubr.bf16.mxu0 0
    %2233 = vmatmul.mubr.bf16.gmra.mrb[0].mxu0 %v991
    %v2234 = vpop.f32.mrb[0].mxu0
    %v2235 = vadd.f32 %v2010, %v2234
    %v2236 = vpop.f32.mrb[0].mxu0
    %v2237 = vpop.f32.mrb[0].mxu0
    %v2238 = vadd.f32 %v2013, %v2237
    %v2239 = vpop.f32.mrb[0].mxu0
    %2240 = vmatprep.mubr.bf16.mxu0 0
    %2241 = vmatmul.mubr.bf16.gmra.mrb[0].mxu0 %v994
    %v2242 = vpop.f32.mrb[0].mxu0
    %v2243 = vadd.f32 %v2018, %v2242
    %v2244 = vpop.f32.mrb[0].mxu0
    %v2245 = vpop.f32.mrb[0].mxu0
    %v2246 = vadd.f32 %v2021, %v2245
    %v2247 = vpop.f32.mrb[0].mxu0
    %2248 = vmatprep.mubr.bf16.mxu0 0
    %2249 = vmatmul.mubr.bf16.gmra.mrb[0].mxu0 %v997
    %v2250 = vpop.f32.mrb[0].mxu0
    %v2251 = vadd.f32 %v2026, %v2250
    %v2252 = vpop.f32.mrb[0].mxu0
    %v2253 = vpop.f32.mrb[0].mxu0
    %v2254 = vadd.f32 %v2029, %v2253
    %v2255 = vpop.f32.mrb[0].mxu0
    %2256 = vmatprep.mubr.bf16.mxu0 0
    %2257 = vmatmul.mubr.bf16.gmra.mrb[0].mxu0 %v1000
    %v2258 = vpop.f32.mrb[0].mxu0
    %v2259 = vadd.f32 %v2034, %v2258
    %v2260 = vpop.f32.mrb[0].mxu0
    %v2261 = vpop.f32.mrb[0].mxu0
    %v2262 = vadd.f32 %v2037, %v2261
    %v2263 = vpop.f32.mrb[0].mxu0
    %2264 = vmatprep.mubr.bf16.mxu0 0
    %2265 = vmatmul.mubr.bf16.gmra.mrb[0].mxu0 %v1003
    %v2266 = vpop.f32.mrb[0].mxu0
    %v2267 = vadd.f32 %v2042, %v2266
    %v2268 = vpop.f32.mrb[0].mxu0
    %v2269 = vpop.f32.mrb[0].mxu0
    %v2270 = vadd.f32 %v2045, %v2269
    %v2271 = vpop.f32.mrb[0].mxu0
    %2272 = vmatprep.mubr.bf16.mxu0 0
    %2273 = vmatmul.mubr.bf16.gmra.mrb[0].mxu0 %v1006
    %v2274 = vpop.f32.mrb[0].mxu0
    %v2275 = vadd.f32 %v2050, %v2274
    %v2276 = vpop.f32.mrb[0].mxu0
    %v2277 = vpop.f32.mrb[0].mxu0
    %v2278 = vadd.f32 %v2053, %v2277
    %v2279 = vpop.f32.mrb[0].mxu0
    %2280 = vmatprep.mubr.bf16.mxu0 0
    %2281 = vmatmul.mubr.bf16.gmra.mrb[0].mxu0 %v1009
    %v2282 = vpop.f32.mrb[0].mxu0
    %v2283 = vadd.f32 %v2058, %v2282
    %v2284 = vpop.f32.mrb[0].mxu0
    %v2285 = vpop.f32.mrb[0].mxu0
    %v2286 = vadd.f32 %v2061, %v2285
    %v2287 = vpop.f32.mrb[0].mxu0
    %2288 = vmatprep.mubr.bf16.mxu0 0
    %2289 = vmatmul.mubr.bf16.gmra.mrb[0].mxu0 %v1012
    %v2290 = vpop.f32.mrb[0].mxu0
    %v2291 = vadd.f32 %v2066, %v2290
    %v2292 = vpop.f32.mrb[0].mxu0
    %v2293 = vpop.f32.mrb[0].mxu0
    %v2294 = vadd.f32 %v2069, %v2293
    %v2295 = vpop.f32.mrb[0].mxu0
    %2296 = vmatprep.mubr.bf16.mxu0 0
    %2297 = vmatmul.mubr.bf16.gmra.mrb[0].mxu0 %v1015
    %v2298 = vpop.f32.mrb[0].mxu0
    %v2299 = vadd.f32 %v2074, %v2298
    %v2300 = vpop.f32.mrb[0].mxu0
    %v2301 = vpop.f32.mrb[0].mxu0
    %v2302 = vadd.f32 %v2077, %v2301
    %v2303 = vpop.f32.mrb[0].mxu0
    %2304 = vmatprep.mubr.bf16.mxu0 0
    %2305 = vmatmul.mubr.bf16.gmra.mrb[0].mxu0 %v1018
    %v2306 = vpop.f32.mrb[0].mxu0
    %v2307 = vadd.f32 %v2082, %v2306
    %v2308 = vpop.f32.mrb[0].mxu0
    %v2309 = vpop.f32.mrb[0].mxu0
    %v2310 = vadd.f32 %v2085, %v2309
    %v2311 = vpop.f32.mrb[0].mxu0
    %2312 = vmatprep.mubr.bf16.mxu0 0
    %2313 = vmatmul.mubr.bf16.gmra.mrb[0].mxu0 %v1021
    %v2314 = vpop.f32.mrb[0].mxu0
    %v2315 = vadd.f32 %v2090, %v2314
    %v2316 = vpop.f32.mrb[0].mxu0
    %v2317 = vpop.f32.mrb[0].mxu0
    %v2318 = vadd.f32 %v2093, %v2317
    %v2319 = vpop.f32.mrb[0].mxu0
    %2320 = vmatprep.mubr.bf16.mxu0 0
    %2321 = vmatmul.mubr.bf16.gmra.mrb[0].mxu0 %v1024
    %v2322 = vpop.f32.mrb[0].mxu0
    %v2323 = vadd.f32 %v2098, %v2322
    %v2324 = vpop.f32.mrb[0].mxu0
    %v2325 = vpop.f32.mrb[0].mxu0
    %v2326 = vadd.f32 %v2101, %v2325
    %v2327 = vpop.f32.mrb[0].mxu0
    %2328 = vmatprep.mubr.bf16.mxu0 0
    %2329 = vmatmul.mubr.bf16.gmra.mrb[0].mxu0 %v1027
    %v2330 = vpop.f32.mrb[0].mxu0
    %v2331 = vadd.f32 %v2106, %v2330
    %v2332 = vpop.f32.mrb[0].mxu0
    %v2333 = vpop.f32.mrb[0].mxu0
    %v2334 = vadd.f32 %v2109, %v2333
    %v2335 = vpop.f32.mrb[0].mxu0
    %2336 = vmatprep.mubr.bf16.mxu0 0
    %2337 = vmatmul.mubr.bf16.gmra.mrb[0].mxu0 %v1030
    %v2338 = vpop.f32.mrb[0].mxu0
    %v2339 = vadd.f32 %v2114, %v2338
    %v2340 = vpop.f32.mrb[0].mxu0
    %v2341 = vpop.f32.mrb[0].mxu0
    %v2342 = vadd.f32 %v2117, %v2341
    %v2343 = vpop.f32.mrb[0].mxu0
    %2344 = vmatprep.mubr.bf16.mxu0 0
    %2345 = vmatmul.mubr.bf16.gmra.mrb[0].mxu0 %v1033
    %v2346 = vpop.f32.mrb[0].mxu0
    %v2347 = vadd.f32 %v2122, %v2346
    %v2348 = vpop.f32.mrb[0].mxu0
    %v2349 = vpop.f32.mrb[0].mxu0
    %v2350 = vadd.f32 %v2125, %v2349
    %v2351 = vpop.f32.mrb[0].mxu0
    %2352 = vmatprep.mubr.bf16.mxu0 0
    %2353 = vmatmul.mubr.bf16.gmra.mrb[0].mxu0 %v1036
    %v2354 = vpop.f32.mrb[0].mxu0
    %v2355 = vadd.f32 %v2130, %v2354
    %v2356 = vpop.f32.mrb[0].mxu0
    %v2357 = vpop.f32.mrb[0].mxu0
    %v2358 = vadd.f32 %v2133, %v2357
    %v2359 = vpop.f32.mrb[0].mxu0
    %2360 = vmatprep.mubr.bf16.mxu0 0
    %2361 = vmatmul.mubr.bf16.gmra.mrb[0].mxu0 %v1039
    %v2362 = vpop.f32.mrb[0].mxu0
    %v2363 = vadd.f32 %v2138, %v2362
    %v2364 = vpop.f32.mrb[0].mxu0
    %v2365 = vpop.f32.mrb[0].mxu0
    %v2366 = vadd.f32 %v2141, %v2365
    %v2367 = vpop.f32.mrb[0].mxu0
    %2368 = vmatprep.mubr.bf16.mxu0 0
    %2369 = vmatmul.mubr.bf16.gmra.mrb[0].mxu0 %v1042
    %v2370 = vpop.f32.mrb[0].mxu0
    %v2371 = vadd.f32 %v2146, %v2370
    %v2372 = vpop.f32.mrb[0].mxu0
    %v2373 = vpop.f32.mrb[0].mxu0
    %v2374 = vadd.f32 %v2149, %v2373
    %v2375 = vpop.f32.mrb[0].mxu0
    %2376 = vmatprep.mubr.bf16.mxu0 0
    %2377 = vmatmul.mubr.bf16.gmra.mrb[0].mxu0 %v1045
    %v2378 = vpop.f32.mrb[0].mxu0
    %v2379 = vadd.f32 %v2154, %v2378
    %v2380 = vpop.f32.mrb[0].mxu0
    %v2381 = vpop.f32.mrb[0].mxu0
    %v2382 = vadd.f32 %v2157, %v2381
    %v2383 = vpop.f32.mrb[0].mxu0
    %2384 = vmatprep.mubr.bf16.mxu0 0
    %2385 = vmatmul.mubr.bf16.gmra.mrb[0].mxu0 %v1048
    %v2386 = vpop.f32.mrb[0].mxu0
    %v2387 = vadd.f32 %v2162, %v2386
    %v2388 = vpop.f32.mrb[0].mxu0
    %v2389 = vpop.f32.mrb[0].mxu0
    %v2390 = vadd.f32 %v2165, %v2389
    %v2391 = vpop.f32.mrb[0].mxu0
    %2392 = vmatprep.mubr.bf16.mxu0 0
    %2393 = vmatmul.mubr.bf16.gmra.mrb[0].mxu0 %v1051
    %v2394 = vpop.f32.mrb[0].mxu0
    %v2395 = vadd.f32 %v2170, %v2394
    %v2396 = vpop.f32.mrb[0].mxu0
    %v2397 = vpop.f32.mrb[0].mxu0
    %v2398 = vadd.f32 %v2173, %v2397
    %v2399 = vpop.f32.mrb[0].mxu0
    %2400 = vmatprep.mubr.bf16.mxu0 0
    %2401 = vmatmul.mubr.bf16.gmra.mrb[0].mxu0 %v1054
    %v2402 = vpop.f32.mrb[0].mxu0
    %v2403 = vadd.f32 %v2178, %v2402
    %v2404 = vpop.f32.mrb[0].mxu0
    %v2405 = vpop.f32.mrb[0].mxu0
    %v2406 = vadd.f32 %v2181, %v2405
    %v2407 = vpop.f32.mrb[0].mxu0
    %2408 = vmatprep.mubr.bf16.mxu0 0
    %2409 = vmatmul.mubr.bf16.gmra.mrb[0].mxu0 %v1057
    %v2410 = vpop.f32.mrb[0].mxu0
    %v2411 = vadd.f32 %v2186, %v2410
    %v2412 = vpop.f32.mrb[0].mxu0
    %v2413 = vpop.f32.mrb[0].mxu0
    %v2414 = vadd.f32 %v2189, %v2413
    %v2415 = vpop.f32.mrb[0].mxu0
    %2416 = vmatprep.mubr.bf16.mxu0 0
    %2417 = vmatmul.mubr.bf16.gmra.mrb[0].mxu0 %v1060
    %v2418 = vpop.f32.mrb[0].mxu0
    %v2419 = vadd.f32 %v2194, %v2418
    %v2420 = vpop.f32.mrb[0].mxu0
    %v2421 = vpop.f32.mrb[0].mxu0
    %v2422 = vadd.f32 %v2197, %v2421
    %v2423 = vpop.f32.mrb[0].mxu0
    %2424 = vdwg.mxu0
    %v2425 = vmax.f32 %v2235, 0.0
    %v2426 = vmax.f32 %v2238, 0.0
    %v2427 = vmax.f32 %v2243, 0.0
    %v2428 = vmax.f32 %v2246, 0.0
    %v2429 = vmax.f32 %v2251, 0.0
    %v2430 = vmax.f32 %v2254, 0.0
    %v2431 = vmax.f32 %v2259, 0.0
    %v2432 = vmax.f32 %v2262, 0.0
    %v2433 = vmax.f32 %v2267, 0.0
    %v2434 = vmax.f32 %v2270, 0.0
    %v2435 = vmax.f32 %v2275, 0.0
    %v2436 = vmax.f32 %v2278, 0.0
    %v2437 = vmax.f32 %v2283, 0.0
    %v2438 = vmax.f32 %v2286, 0.0
    %v2439 = vmax.f32 %v2291, 0.0
    %v2440 = vmax.f32 %v2294, 0.0
    %v2441 = vmax.f32 %v2299, 0.0
    %v2442 = vmax.f32 %v2302, 0.0
    %v2443 = vmax.f32 %v2307, 0.0
    %v2444 = vmax.f32 %v2310, 0.0
    %v2445 = vmax.f32 %v2315, 0.0
    %v2446 = vmax.f32 %v2318, 0.0
    %v2447 = vmax.f32 %v2323, 0.0
    %v2448 = vmax.f32 %v2326, 0.0
    %v2449 = vmax.f32 %v2331, 0.0
    %v2450 = vmax.f32 %v2334, 0.0
    %v2451 = vmax.f32 %v2339, 0.0
    %v2452 = vmax.f32 %v2342, 0.0
    %v2453 = vmax.f32 %v2347, 0.0
    %v2454 = vmax.f32 %v2350, 0.0
    %v2455 = vmax.f32 %v2355, 0.0
    %v2456 = vmax.f32 %v2358, 0.0
    %v2457 = vmax.f32 %v2363, 0.0
    %v2458 = vmax.f32 %v2366, 0.0
    %v2459 = vmax.f32 %v2371, 0.0
    %v2460 = vmax.f32 %v2374, 0.0
    %v2461 = vmax.f32 %v2379, 0.0
    %v2462 = vmax.f32 %v2382, 0.0
    %v2463 = vmax.f32 %v2387, 0.0
    %v2464 = vmax.f32 %v2390, 0.0
    %v2465 = vmax.f32 %v2395, 0.0
    %v2466 = vmax.f32 %v2398, 0.0
    %v2467 = vmax.f32 %v2403, 0.0
    %v2468 = vmax.f32 %v2406, 0.0
    %v2469 = vmax.f32 %v2411, 0.0
    %v2470 = vmax.f32 %v2414, 0.0
    %v2471 = vmax.f32 %v2419, 0.0
    %v2472 = vmax.f32 %v2422, 0.0
    %v2473 = vpack.c.bf16 %v2426, %v2425
    %v2474 = vpack.c.bf16 %v2428, %v2427
    %v2475 = vpack.c.bf16 %v2430, %v2429
    %v2476 = vpack.c.bf16 %v2432, %v2431
    %v2477 = vpack.c.bf16 %v2434, %v2433
    %v2478 = vpack.c.bf16 %v2436, %v2435
    %v2479 = vpack.c.bf16 %v2438, %v2437
    %v2480 = vpack.c.bf16 %v2440, %v2439
    %v2481 = vpack.c.bf16 %v2442, %v2441
    %v2482 = vpack.c.bf16 %v2444, %v2443
    %v2483 = vpack.c.bf16 %v2446, %v2445
    %v2484 = vpack.c.bf16 %v2448, %v2447
    %v2485 = vpack.c.bf16 %v2450, %v2449
    %v2486 = vpack.c.bf16 %v2452, %v2451
    %v2487 = vpack.c.bf16 %v2454, %v2453
    %v2488 = vpack.c.bf16 %v2456, %v2455
    %v2489 = vpack.c.bf16 %v2458, %v2457
    %v2490 = vpack.c.bf16 %v2460, %v2459
    %v2491 = vpack.c.bf16 %v2462, %v2461
    %v2492 = vpack.c.bf16 %v2464, %v2463
    %v2493 = vpack.c.bf16 %v2466, %v2465
    %v2494 = vpack.c.bf16 %v2468, %v2467
    %v2495 = vpack.c.bf16 %v2470, %v2469
    %v2496 = vpack.c.bf16 %v2472, %v2471
    %v2497 = vld [vmem:[#allocation10] sm:$0xf]
    %v2498 = vld [vmem:[#allocation10 + $0x4] sm:$0xf]
    %v2499 = vld [vmem:[#allocation10 + $0x8] sm:$0xf]
    %v2500 = vld [vmem:[#allocation10 + $0xc] sm:$0xf]
    %v2501 = vld [vmem:[#allocation10 + $0x10] sm:$0xf]
    %v2502 = vld [vmem:[#allocation10 + $0x14] sm:$0xf]
    %v2503 = vld [vmem:[#allocation10 + $0x18] sm:$0xf]
    %v2504 = vld [vmem:[#allocation10 + $0x1c] sm:$0xf]
    %v2505 = vld [vmem:[#allocation10 + $0x20] sm:$0xf]
    %v2506 = vld [vmem:[#allocation10 + $0x24] sm:$0xf]
    %v2507 = vld [vmem:[#allocation10 + $0x28] sm:$0xf]
    %v2508 = vld [vmem:[#allocation10 + $0x2c] sm:$0xf]
    %v2509 = vld [vmem:[#allocation10 + $0x30] sm:$0xf]
    %v2510 = vld [vmem:[#allocation10 + $0x34] sm:$0xf]
    %v2511 = vld [vmem:[#allocation10 + $0x38] sm:$0xf]
    %v2512 = vld [vmem:[#allocation10 + $0x3c] sm:$0xf]
    %v2529 = vunpack.c.l.b16 %v2497
    %v2530 = vunpack.c.l.b16 %v2498
    %v2531 = vunpack.c.l.b16 %v2499
    %v2532 = vunpack.c.l.b16 %v2500
    %v2533 = vunpack.c.l.b16 %v2501
    %v2534 = vunpack.c.l.b16 %v2502
    %v2535 = vunpack.c.l.b16 %v2503
    %v2536 = vunpack.c.l.b16 %v2504
    %v2537 = vunpack.c.l.b16 %v2505
    %v2538 = vunpack.c.l.b16 %v2506
    %v2539 = vunpack.c.l.b16 %v2507
    %v2540 = vunpack.c.l.b16 %v2508
    %v2541 = vunpack.c.l.b16 %v2509
    %v2542 = vunpack.c.l.b16 %v2510
    %v2543 = vunpack.c.l.b16 %v2511
    %v2544 = vunpack.c.l.b16 %v2512
    %v2545 = vpack.c.b16 %v2530, %v2529
    %v2546 = vpack.c.b16 %v2532, %v2531
    %v2547 = vpack.c.b16 %v2534, %v2533
    %v2548 = vpack.c.b16 %v2536, %v2535
    %v2549 = vpack.c.b16 %v2538, %v2537
    %v2550 = vpack.c.b16 %v2540, %v2539
    %v2551 = vpack.c.b16 %v2542, %v2541
    %v2552 = vpack.c.b16 %v2544, %v2543
    %2561 = vmatprep.subr.bf16.mxu0 0
    %2562 = vmatpush1.bf16.msra.mxu0 %v2545
    %2563 = vmatprep.subr.bf16.mxu0 0
    %2564 = vmatpush1.bf16.msra.mxu0 %v2546
    %2565 = vmatprep.subr.bf16.mxu0 0
    %2566 = vmatpush1.bf16.msra.mxu0 %v2547
    %2567 = vmatprep.subr.bf16.mxu0 0
    %2568 = vmatpush1.bf16.msra.mxu0 %v2548
    %2569 = vmatprep.subr.bf16.mxu0 0
    %2570 = vmatpush1.bf16.msra.mxu0 %v2549
    %2571 = vmatprep.subr.bf16.mxu0 0
    %2572 = vmatpush1.bf16.msra.mxu0 %v2550
    %2573 = vmatprep.subr.bf16.mxu0 0
    %2574 = vmatpush1.bf16.msra.mxu0 %v2551
    %2575 = vmatprep.subr.bf16.mxu0 0
    %2576 = vmatpush1.bf16.msra.mxu0 %v2552
    %2577 = vmatprep.subr.bf16.mxu0 0
    %2578 = vmatpush1.bf16.msra.mxu0 0
    %2579 = vmatprep.subr.bf16.mxu0 0
    %2580 = vmatpush1.bf16.msra.mxu0 0
    %2581 = vmatprep.subr.bf16.mxu0 0
    %2582 = vmatpush1.bf16.msra.mxu0 0
    %2583 = vmatprep.subr.bf16.mxu0 0
    %2584 = vmatpush1.bf16.msra.mxu0 0
    %2585 = vmatprep.subr.bf16.mxu0 0
    %2586 = vmatpush1.bf16.msra.mxu0 0
    %2587 = vmatprep.subr.bf16.mxu0 0
    %2588 = vmatpush1.bf16.msra.mxu0 0
    %2589 = vmatprep.subr.bf16.mxu0 0
    %2590 = vmatpush1.bf16.msra.mxu0 0
    %2591 = vmatprep.subr.bf16.mxu0 0
    %2592 = vmatpush1.bf16.msra.mxu0 0
    %2593 = vmatprep.mubr.bf16.mxu0 0
    %2594 = vmatmul.mubr.bf16.gmra.mrb[0].mxu0 %v2473
    %v2595 = vpop.f32.mrb[0].mxu0
    %v2596 = vadd.f32 0.0, %v2595
    %v2597 = vpop.f32.mrb[0].mxu0
    %v2598 = vpop.f32.mrb[0].mxu0
    %v2599 = vadd.f32 0.0, %v2598
    %v2600 = vpop.f32.mrb[0].mxu0
    %2601 = vmatprep.mubr.bf16.mxu0 0
    %2602 = vmatmul.mubr.bf16.gmra.mrb[0].mxu0 %v2474
    %v2603 = vpop.f32.mrb[0].mxu0
    %v2604 = vadd.f32 0.0, %v2603
    %v2605 = vpop.f32.mrb[0].mxu0
    %v2606 = vpop.f32.mrb[0].mxu0
    %v2607 = vadd.f32 0.0, %v2606
    %v2608 = vpop.f32.mrb[0].mxu0
    %2609 = vmatprep.mubr.bf16.mxu0 0
    %2610 = vmatmul.mubr.bf16.gmra.mrb[0].mxu0 %v2475
    %v2611 = vpop.f32.mrb[0].mxu0
    %v2612 = vadd.f32 0.0, %v2611
    %v2613 = vpop.f32.mrb[0].mxu0
    %v2614 = vpop.f32.mrb[0].mxu0
    %v2615 = vadd.f32 0.0, %v2614
    %v2616 = vpop.f32.mrb[0].mxu0
    %2617 = vmatprep.mubr.bf16.mxu0 0
    %2618 = vmatmul.mubr.bf16.gmra.mrb[0].mxu0 %v2476
    %v2619 = vpop.f32.mrb[0].mxu0
    %v2620 = vadd.f32 0.0, %v2619
    %v2621 = vpop.f32.mrb[0].mxu0
    %v2622 = vpop.f32.mrb[0].mxu0
    %v2623 = vadd.f32 0.0, %v2622
    %v2624 = vpop.f32.mrb[0].mxu0
    %2625 = vmatprep.mubr.bf16.mxu0 0
    %2626 = vmatmul.mubr.bf16.gmra.mrb[0].mxu0 %v2477
    %v2627 = vpop.f32.mrb[0].mxu0
    %v2628 = vadd.f32 0.0, %v2627
    %v2629 = vpop.f32.mrb[0].mxu0
    %v2630 = vpop.f32.mrb[0].mxu0
    %v2631 = vadd.f32 0.0, %v2630
    %v2632 = vpop.f32.mrb[0].mxu0
    %2633 = vmatprep.mubr.bf16.mxu0 0
    %2634 = vmatmul.mubr.bf16.gmra.mrb[0].mxu0 %v2478
    %v2635 = vpop.f32.mrb[0].mxu0
    %v2636 = vadd.f32 0.0, %v2635
    %v2637 = vpop.f32.mrb[0].mxu0
    %v2638 = vpop.f32.mrb[0].mxu0
    %v2639 = vadd.f32 0.0, %v2638
    %v2640 = vpop.f32.mrb[0].mxu0
    %2641 = vmatprep.mubr.bf16.mxu0 0
    %2642 = vmatmul.mubr.bf16.gmra.mrb[0].mxu0 %v2479
    %v2643 = vpop.f32.mrb[0].mxu0
    %v2644 = vadd.f32 0.0, %v2643
    %v2645 = vpop.f32.mrb[0].mxu0
    %v2646 = vpop.f32.mrb[0].mxu0
    %v2647 = vadd.f32 0.0, %v2646
    %v2648 = vpop.f32.mrb[0].mxu0
    %2649 = vmatprep.mubr.bf16.mxu0 0
    %2650 = vmatmul.mubr.bf16.gmra.mrb[0].mxu0 %v2480
    %v2651 = vpop.f32.mrb[0].mxu0
    %v2652 = vadd.f32 0.0, %v2651
    %v2653 = vpop.f32.mrb[0].mxu0
    %v2654 = vpop.f32.mrb[0].mxu0
    %v2655 = vadd.f32 0.0, %v2654
    %v2656 = vpop.f32.mrb[0].mxu0
    %2657 = vmatprep.mubr.bf16.mxu0 0
    %2658 = vmatmul.mubr.bf16.gmra.mrb[0].mxu0 %v2481
    %v2659 = vpop.f32.mrb[0].mxu0
    %v2660 = vadd.f32 0.0, %v2659
    %v2661 = vpop.f32.mrb[0].mxu0
    %v2662 = vpop.f32.mrb[0].mxu0
    %v2663 = vadd.f32 0.0, %v2662
    %v2664 = vpop.f32.mrb[0].mxu0
    %2665 = vmatprep.mubr.bf16.mxu0 0
    %2666 = vmatmul.mubr.bf16.gmra.mrb[0].mxu0 %v2482
    %v2667 = vpop.f32.mrb[0].mxu0
    %v2668 = vadd.f32 0.0, %v2667
    %v2669 = vpop.f32.mrb[0].mxu0
    %v2670 = vpop.f32.mrb[0].mxu0
    %v2671 = vadd.f32 0.0, %v2670
    %v2672 = vpop.f32.mrb[0].mxu0
    %2673 = vmatprep.mubr.bf16.mxu0 0
    %2674 = vmatmul.mubr.bf16.gmra.mrb[0].mxu0 %v2483
    %v2675 = vpop.f32.mrb[0].mxu0
    %v2676 = vadd.f32 0.0, %v2675
    %v2677 = vpop.f32.mrb[0].mxu0
    %v2678 = vpop.f32.mrb[0].mxu0
    %v2679 = vadd.f32 0.0, %v2678
    %v2680 = vpop.f32.mrb[0].mxu0
    %2681 = vmatprep.mubr.bf16.mxu0 0
    %2682 = vmatmul.mubr.bf16.gmra.mrb[0].mxu0 %v2484
    %v2683 = vpop.f32.mrb[0].mxu0
    %v2684 = vadd.f32 0.0, %v2683
    %v2685 = vpop.f32.mrb[0].mxu0
    %v2686 = vpop.f32.mrb[0].mxu0
    %v2687 = vadd.f32 0.0, %v2686
    %v2688 = vpop.f32.mrb[0].mxu0
    %2689 = vmatprep.mubr.bf16.mxu0 0
    %2690 = vmatmul.mubr.bf16.gmra.mrb[0].mxu0 %v2485
    %v2691 = vpop.f32.mrb[0].mxu0
    %v2692 = vadd.f32 0.0, %v2691
    %v2693 = vpop.f32.mrb[0].mxu0
    %v2694 = vpop.f32.mrb[0].mxu0
    %v2695 = vadd.f32 0.0, %v2694
    %v2696 = vpop.f32.mrb[0].mxu0
    %2697 = vmatprep.mubr.bf16.mxu0 0
    %2698 = vmatmul.mubr.bf16.gmra.mrb[0].mxu0 %v2486
    %v2699 = vpop.f32.mrb[0].mxu0
    %v2700 = vadd.f32 0.0, %v2699
    %v2701 = vpop.f32.mrb[0].mxu0
    %v2702 = vpop.f32.mrb[0].mxu0
    %v2703 = vadd.f32 0.0, %v2702
    %v2704 = vpop.f32.mrb[0].mxu0
    %2705 = vmatprep.mubr.bf16.mxu0 0
    %2706 = vmatmul.mubr.bf16.gmra.mrb[0].mxu0 %v2487
    %v2707 = vpop.f32.mrb[0].mxu0
    %v2708 = vadd.f32 0.0, %v2707
    %v2709 = vpop.f32.mrb[0].mxu0
    %v2710 = vpop.f32.mrb[0].mxu0
    %v2711 = vadd.f32 0.0, %v2710
    %v2712 = vpop.f32.mrb[0].mxu0
    %2713 = vmatprep.mubr.bf16.mxu0 0
    %2714 = vmatmul.mubr.bf16.gmra.mrb[0].mxu0 %v2488
    %v2715 = vpop.f32.mrb[0].mxu0
    %v2716 = vadd.f32 0.0, %v2715
    %v2717 = vpop.f32.mrb[0].mxu0
    %v2718 = vpop.f32.mrb[0].mxu0
    %v2719 = vadd.f32 0.0, %v2718
    %v2720 = vpop.f32.mrb[0].mxu0
    %2721 = vmatprep.mubr.bf16.mxu0 0
    %2722 = vmatmul.mubr.bf16.gmra.mrb[0].mxu0 %v2489
    %v2723 = vpop.f32.mrb[0].mxu0
    %v2724 = vadd.f32 0.0, %v2723
    %v2725 = vpop.f32.mrb[0].mxu0
    %v2726 = vpop.f32.mrb[0].mxu0
    %v2727 = vadd.f32 0.0, %v2726
    %v2728 = vpop.f32.mrb[0].mxu0
    %2729 = vmatprep.mubr.bf16.mxu0 0
    %2730 = vmatmul.mubr.bf16.gmra.mrb[0].mxu0 %v2490
    %v2731 = vpop.f32.mrb[0].mxu0
    %v2732 = vadd.f32 0.0, %v2731
    %v2733 = vpop.f32.mrb[0].mxu0
    %v2734 = vpop.f32.mrb[0].mxu0
    %v2735 = vadd.f32 0.0, %v2734
    %v2736 = vpop.f32.mrb[0].mxu0
    %2737 = vmatprep.mubr.bf16.mxu0 0
    %2738 = vmatmul.mubr.bf16.gmra.mrb[0].mxu0 %v2491
    %v2739 = vpop.f32.mrb[0].mxu0
    %v2740 = vadd.f32 0.0, %v2739
    %v2741 = vpop.f32.mrb[0].mxu0
    %v2742 = vpop.f32.mrb[0].mxu0
    %v2743 = vadd.f32 0.0, %v2742
    %v2744 = vpop.f32.mrb[0].mxu0
    %2745 = vmatprep.mubr.bf16.mxu0 0
    %2746 = vmatmul.mubr.bf16.gmra.mrb[0].mxu0 %v2492
    %v2747 = vpop.f32.mrb[0].mxu0
    %v2748 = vadd.f32 0.0, %v2747
    %v2749 = vpop.f32.mrb[0].mxu0
    %v2750 = vpop.f32.mrb[0].mxu0
    %v2751 = vadd.f32 0.0, %v2750
    %v2752 = vpop.f32.mrb[0].mxu0
    %2753 = vmatprep.mubr.bf16.mxu0 0
    %2754 = vmatmul.mubr.bf16.gmra.mrb[0].mxu0 %v2493
    %v2755 = vpop.f32.mrb[0].mxu0
    %v2756 = vadd.f32 0.0, %v2755
    %v2757 = vpop.f32.mrb[0].mxu0
    %v2758 = vpop.f32.mrb[0].mxu0
    %v2759 = vadd.f32 0.0, %v2758
    %v2760 = vpop.f32.mrb[0].mxu0
    %2761 = vmatprep.mubr.bf16.mxu0 0
    %2762 = vmatmul.mubr.bf16.gmra.mrb[0].mxu0 %v2494
    %v2763 = vpop.f32.mrb[0].mxu0
    %v2764 = vadd.f32 0.0, %v2763
    %v2765 = vpop.f32.mrb[0].mxu0
    %v2766 = vpop.f32.mrb[0].mxu0
    %v2767 = vadd.f32 0.0, %v2766
    %v2768 = vpop.f32.mrb[0].mxu0
    %2769 = vmatprep.mubr.bf16.mxu0 0
    %2770 = vmatmul.mubr.bf16.gmra.mrb[0].mxu0 %v2495
    %v2771 = vpop.f32.mrb[0].mxu0
    %v2772 = vadd.f32 0.0, %v2771
    %v2773 = vpop.f32.mrb[0].mxu0
    %v2774 = vpop.f32.mrb[0].mxu0
    %v2775 = vadd.f32 0.0, %v2774
    %v2776 = vpop.f32.mrb[0].mxu0
    %2777 = vmatprep.mubr.bf16.mxu0 0
    %2778 = vmatmul.mubr.bf16.gmra.mrb[0].mxu0 %v2496
    %v2779 = vpop.f32.mrb[0].mxu0
    %v2780 = vadd.f32 0.0, %v2779
    %v2781 = vpop.f32.mrb[0].mxu0
    %v2782 = vpop.f32.mrb[0].mxu0
    %v2783 = vadd.f32 0.0, %v2782
    %v2784 = vpop.f32.mrb[0].mxu0
    %2785 = vdwg.mxu0
    %v2786 = vpack.c.bf16 %v2599, %v2596
    %v2787 = vpack.c.bf16 %v2607, %v2604
    %v2788 = vpack.c.bf16 %v2615, %v2612
    %v2789 = vpack.c.bf16 %v2623, %v2620
    %v2790 = vpack.c.bf16 %v2631, %v2628
    %v2791 = vpack.c.bf16 %v2639, %v2636
    %v2792 = vpack.c.bf16 %v2647, %v2644
    %v2793 = vpack.c.bf16 %v2655, %v2652
    %v2794 = vpack.c.bf16 %v2663, %v2660
    %v2795 = vpack.c.bf16 %v2671, %v2668
    %v2796 = vpack.c.bf16 %v2679, %v2676
    %v2797 = vpack.c.bf16 %v2687, %v2684
    %v2798 = vpack.c.bf16 %v2695, %v2692
    %v2799 = vpack.c.bf16 %v2703, %v2700
    %v2800 = vpack.c.bf16 %v2711, %v2708
    %v2801 = vpack.c.bf16 %v2719, %v2716
    %v2802 = vpack.c.bf16 %v2727, %v2724
    %v2803 = vpack.c.bf16 %v2735, %v2732
    %v2804 = vpack.c.bf16 %v2743, %v2740
    %v2805 = vpack.c.bf16 %v2751, %v2748
    %v2806 = vpack.c.bf16 %v2759, %v2756
    %v2807 = vpack.c.bf16 %v2767, %v2764
    %v2808 = vpack.c.bf16 %v2775, %v2772
    %v2809 = vpack.c.bf16 %v2783, %v2780
    %v2810 = vld [vmem:[%s7] sm:$0x1]
    %v2812 = vlaneseq
    %v2813 = vshrl.u32 %v2812, 7
    %v2814 = vsub.s32 0, %v2813
    %v2815 = vrot.slane %v2810, %v2814
    %2817 = vmatprep.subr.bf16.mxu0 0
    %2818 = vmatpush1.bf16.msra.mxu0 %v2786
    %2819 = vmatprep.subr.bf16.mxu0 0
    %2820 = vmatpush1.bf16.msra.mxu0 %v2787
    %2821 = vmatprep.subr.bf16.mxu0 0
    %2822 = vmatpush1.bf16.msra.mxu0 %v2788
    %2823 = vmatprep.subr.bf16.mxu0 0
    %2824 = vmatpush1.bf16.msra.mxu0 %v2789
    %2825 = vmatprep.subr.bf16.mxu0 0
    %2826 = vmatpush1.bf16.msra.mxu0 %v2790
    %2827 = vmatprep.subr.bf16.mxu0 0
    %2828 = vmatpush1.bf16.msra.mxu0 %v2791
    %2829 = vmatprep.subr.bf16.mxu0 0
    %2830 = vmatpush1.bf16.msra.mxu0 %v2792
    %2831 = vmatprep.subr.bf16.mxu0 0
    %2832 = vmatpush1.bf16.msra.mxu0 %v2793
    %2833 = vmatprep.subr.bf16.mxu0 0
    %2834 = vmatpush1.bf16.msra.mxu0 %v2794
    %2835 = vmatprep.subr.bf16.mxu0 0
    %2836 = vmatpush1.bf16.msra.mxu0 %v2795
    %2837 = vmatprep.subr.bf16.mxu0 0
    %2838 = vmatpush1.bf16.msra.mxu0 %v2796
    %2839 = vmatprep.subr.bf16.mxu0 0
    %2840 = vmatpush1.bf16.msra.mxu0 %v2797
    %2841 = vmatprep.subr.bf16.mxu0 0
    %2842 = vmatpush1.bf16.msra.mxu0 %v2798
    %2843 = vmatprep.subr.bf16.mxu0 0
    %2844 = vmatpush1.bf16.msra.mxu0 %v2799
    %2845 = vmatprep.subr.bf16.mxu0 0
    %2846 = vmatpush1.bf16.msra.mxu0 %v2800
    %2847 = vmatprep.subr.bf16.mxu0 0
    %2848 = vmatpush1.bf16.msra.mxu0 %v2801
    %2849 = vmatprep.mubr.bf16.mxu0 %v990
    %2850 = vmatmul.mubr.bf16.gmra.mrb[0].mxu0 %v989
    %v2851 = vpop.f32.mrb[0].mxu0
    %v2852 = vadd.f32 %v2815, %v2851
    %v2853 = vpop.f32.mrb[0].mxu0
    %v2854 = vpop.f32.mrb[0].mxu0
    %v2855 = vadd.f32 %v2815, %v2854
    %v2856 = vpop.f32.mrb[0].mxu0
    %2857 = vmatprep.mubr.bf16.mxu0 %v993
    %2858 = vmatmul.mubr.bf16.gmra.mrb[0].mxu0 %v992
    %v2859 = vpop.f32.mrb[0].mxu0
    %v2860 = vadd.f32 %v2815, %v2859
    %v2861 = vpop.f32.mrb[0].mxu0
    %v2862 = vpop.f32.mrb[0].mxu0
    %v2863 = vadd.f32 %v2815, %v2862
    %v2864 = vpop.f32.mrb[0].mxu0
    %2865 = vmatprep.mubr.bf16.mxu0 %v996
    %2866 = vmatmul.mubr.bf16.gmra.mrb[0].mxu0 %v995
    %v2867 = vpop.f32.mrb[0].mxu0
    %v2868 = vadd.f32 %v2815, %v2867
    %v2869 = vpop.f32.mrb[0].mxu0
    %v2870 = vpop.f32.mrb[0].mxu0
    %v2871 = vadd.f32 %v2815, %v2870
    %v2872 = vpop.f32.mrb[0].mxu0
    %2873 = vmatprep.mubr.bf16.mxu0 %v999
    %2874 = vmatmul.mubr.bf16.gmra.mrb[0].mxu0 %v998
    %v2875 = vpop.f32.mrb[0].mxu0
    %v2876 = vadd.f32 %v2815, %v2875
    %v2877 = vpop.f32.mrb[0].mxu0
    %v2878 = vpop.f32.mrb[0].mxu0
    %v2879 = vadd.f32 %v2815, %v2878
    %v2880 = vpop.f32.mrb[0].mxu0
    %2881 = vmatprep.mubr.bf16.mxu0 %v1002
    %2882 = vmatmul.mubr.bf16.gmra.mrb[0].mxu0 %v1001
    %v2883 = vpop.f32.mrb[0].mxu0
    %v2884 = vadd.f32 %v2815, %v2883
    %v2885 = vpop.f32.mrb[0].mxu0
    %v2886 = vpop.f32.mrb[0].mxu0
    %v2887 = vadd.f32 %v2815, %v2886
    %v2888 = vpop.f32.mrb[0].mxu0
    %2889 = vmatprep.mubr.bf16.mxu0 %v1005
    %2890 = vmatmul.mubr.bf16.gmra.mrb[0].mxu0 %v1004
    %v2891 = vpop.f32.mrb[0].mxu0
    %v2892 = vadd.f32 %v2815, %v2891
    %v2893 = vpop.f32.mrb[0].mxu0
    %v2894 = vpop.f32.mrb[0].mxu0
    %v2895 = vadd.f32 %v2815, %v2894
    %v2896 = vpop.f32.mrb[0].mxu0
    %2897 = vmatprep.mubr.bf16.mxu0 %v1008
    %2898 = vmatmul.mubr.bf16.gmra.mrb[0].mxu0 %v1007
    %v2899 = vpop.f32.mrb[0].mxu0
    %v2900 = vadd.f32 %v2815, %v2899
    %v2901 = vpop.f32.mrb[0].mxu0
    %v2902 = vpop.f32.mrb[0].mxu0
    %v2903 = vadd.f32 %v2815, %v2902
    %v2904 = vpop.f32.mrb[0].mxu0
    %2905 = vmatprep.mubr.bf16.mxu0 %v1011
    %2906 = vmatmul.mubr.bf16.gmra.mrb[0].mxu0 %v1010
    %v2907 = vpop.f32.mrb[0].mxu0
    %v2908 = vadd.f32 %v2815, %v2907
    %v2909 = vpop.f32.mrb[0].mxu0
    %v2910 = vpop.f32.mrb[0].mxu0
    %v2911 = vadd.f32 %v2815, %v2910
    %v2912 = vpop.f32.mrb[0].mxu0
    %2913 = vmatprep.mubr.bf16.mxu0 %v1014
    %2914 = vmatmul.mubr.bf16.gmra.mrb[0].mxu0 %v1013
    %v2915 = vpop.f32.mrb[0].mxu0
    %v2916 = vadd.f32 %v2815, %v2915
    %v2917 = vpop.f32.mrb[0].mxu0
    %v2918 = vpop.f32.mrb[0].mxu0
    %v2919 = vadd.f32 %v2815, %v2918
    %v2920 = vpop.f32.mrb[0].mxu0
    %2921 = vmatprep.mubr.bf16.mxu0 %v1017
    %2922 = vmatmul.mubr.bf16.gmra.mrb[0].mxu0 %v1016
    %v2923 = vpop.f32.mrb[0].mxu0
    %v2924 = vadd.f32 %v2815, %v2923
    %v2925 = vpop.f32.mrb[0].mxu0
    %v2926 = vpop.f32.mrb[0].mxu0
    %v2927 = vadd.f32 %v2815, %v2926
    %v2928 = vpop.f32.mrb[0].mxu0
    %2929 = vmatprep.mubr.bf16.mxu0 %v1020
    %2930 = vmatmul.mubr.bf16.gmra.mrb[0].mxu0 %v1019
    %v2931 = vpop.f32.mrb[0].mxu0
    %v2932 = vadd.f32 %v2815, %v2931
    %v2933 = vpop.f32.mrb[0].mxu0
    %v2934 = vpop.f32.mrb[0].mxu0
    %v2935 = vadd.f32 %v2815, %v2934
    %v2936 = vpop.f32.mrb[0].mxu0
    %2937 = vmatprep.mubr.bf16.mxu0 %v1023
    %2938 = vmatmul.mubr.bf16.gmra.mrb[0].mxu0 %v1022
    %v2939 = vpop.f32.mrb[0].mxu0
    %v2940 = vadd.f32 %v2815, %v2939
    %v2941 = vpop.f32.mrb[0].mxu0
    %v2942 = vpop.f32.mrb[0].mxu0
    %v2943 = vadd.f32 %v2815, %v2942
    %v2944 = vpop.f32.mrb[0].mxu0
    %2945 = vmatprep.mubr.bf16.mxu0 %v1026
    %2946 = vmatmul.mubr.bf16.gmra.mrb[0].mxu0 %v1025
    %v2947 = vpop.f32.mrb[0].mxu0
    %v2948 = vadd.f32 %v2815, %v2947
    %v2949 = vpop.f32.mrb[0].mxu0
    %v2950 = vpop.f32.mrb[0].mxu0
    %v2951 = vadd.f32 %v2815, %v2950
    %v2952 = vpop.f32.mrb[0].mxu0
    %2953 = vmatprep.mubr.bf16.mxu0 %v1029
    %2954 = vmatmul.mubr.bf16.gmra.mrb[0].mxu0 %v1028
    %v2955 = vpop.f32.mrb[0].mxu0
    %v2956 = vadd.f32 %v2815, %v2955
    %v2957 = vpop.f32.mrb[0].mxu0
    %v2958 = vpop.f32.mrb[0].mxu0
    %v2959 = vadd.f32 %v2815, %v2958
    %v2960 = vpop.f32.mrb[0].mxu0
    %2961 = vmatprep.mubr.bf16.mxu0 %v1032
    %2962 = vmatmul.mubr.bf16.gmra.mrb[0].mxu0 %v1031
    %v2963 = vpop.f32.mrb[0].mxu0
    %v2964 = vadd.f32 %v2815, %v2963
    %v2965 = vpop.f32.mrb[0].mxu0
    %v2966 = vpop.f32.mrb[0].mxu0
    %v2967 = vadd.f32 %v2815, %v2966
    %v2968 = vpop.f32.mrb[0].mxu0
    %2969 = vmatprep.mubr.bf16.mxu0 %v1035
    %2970 = vmatmul.mubr.bf16.gmra.mrb[0].mxu0 %v1034
    %v2971 = vpop.f32.mrb[0].mxu0
    %v2972 = vadd.f32 %v2815, %v2971
    %v2973 = vpop.f32.mrb[0].mxu0
    %v2974 = vpop.f32.mrb[0].mxu0
    %v2975 = vadd.f32 %v2815, %v2974
    %v2976 = vpop.f32.mrb[0].mxu0
    %2977 = vmatprep.mubr.bf16.mxu0 %v1038
    %2978 = vmatmul.mubr.bf16.gmra.mrb[0].mxu0 %v1037
    %v2979 = vpop.f32.mrb[0].mxu0
    %v2980 = vadd.f32 %v2815, %v2979
    %v2981 = vpop.f32.mrb[0].mxu0
    %v2982 = vpop.f32.mrb[0].mxu0
    %v2983 = vadd.f32 %v2815, %v2982
    %v2984 = vpop.f32.mrb[0].mxu0
    %2985 = vmatprep.mubr.bf16.mxu0 %v1041
    %2986 = vmatmul.mubr.bf16.gmra.mrb[0].mxu0 %v1040
    %v2987 = vpop.f32.mrb[0].mxu0
    %v2988 = vadd.f32 %v2815, %v2987
    %v2989 = vpop.f32.mrb[0].mxu0
    %v2990 = vpop.f32.mrb[0].mxu0
    %v2991 = vadd.f32 %v2815, %v2990
    %v2992 = vpop.f32.mrb[0].mxu0
    %2993 = vmatprep.mubr.bf16.mxu0 %v1044
    %2994 = vmatmul.mubr.bf16.gmra.mrb[0].mxu0 %v1043
    %v2995 = vpop.f32.mrb[0].mxu0
    %v2996 = vadd.f32 %v2815, %v2995
    %v2997 = vpop.f32.mrb[0].mxu0
    %v2998 = vpop.f32.mrb[0].mxu0
    %v2999 = vadd.f32 %v2815, %v2998
    %v3000 = vpop.f32.mrb[0].mxu0
    %3001 = vmatprep.mubr.bf16.mxu0 %v1047
    %3002 = vmatmul.mubr.bf16.gmra.mrb[0].mxu0 %v1046
    %v3003 = vpop.f32.mrb[0].mxu0
    %v3004 = vadd.f32 %v2815, %v3003
    %v3005 = vpop.f32.mrb[0].mxu0
    %v3006 = vpop.f32.mrb[0].mxu0
    %v3007 = vadd.f32 %v2815, %v3006
    %v3008 = vpop.f32.mrb[0].mxu0
    %3009 = vmatprep.mubr.bf16.mxu0 %v1050
    %3010 = vmatmul.mubr.bf16.gmra.mrb[0].mxu0 %v1049
    %v3011 = vpop.f32.mrb[0].mxu0
    %v3012 = vadd.f32 %v2815, %v3011
    %v3013 = vpop.f32.mrb[0].mxu0
    %v3014 = vpop.f32.mrb[0].mxu0
    %v3015 = vadd.f32 %v2815, %v3014
    %v3016 = vpop.f32.mrb[0].mxu0
    %3017 = vmatprep.mubr.bf16.mxu0 %v1053
    %3018 = vmatmul.mubr.bf16.gmra.mrb[0].mxu0 %v1052
    %v3019 = vpop.f32.mrb[0].mxu0
    %v3020 = vadd.f32 %v2815, %v3019
    %v3021 = vpop.f32.mrb[0].mxu0
    %v3022 = vpop.f32.mrb[0].mxu0
    %v3023 = vadd.f32 %v2815, %v3022
    %v3024 = vpop.f32.mrb[0].mxu0
    %3025 = vmatprep.mubr.bf16.mxu0 %v1056
    %3026 = vmatmul.mubr.bf16.gmra.mrb[0].mxu0 %v1055
    %v3027 = vpop.f32.mrb[0].mxu0
    %v3028 = vadd.f32 %v2815, %v3027
    %v3029 = vpop.f32.mrb[0].mxu0
    %v3030 = vpop.f32.mrb[0].mxu0
    %v3031 = vadd.f32 %v2815, %v3030
    %v3032 = vpop.f32.mrb[0].mxu0
    %3033 = vmatprep.mubr.bf16.mxu0 %v1059
    %3034 = vmatmul.mubr.bf16.gmra.mrb[0].mxu0 %v1058
    %v3035 = vpop.f32.mrb[0].mxu0
    %v3036 = vadd.f32 %v2815, %v3035
    %v3037 = vpop.f32.mrb[0].mxu0
    %v3038 = vpop.f32.mrb[0].mxu0
    %v3039 = vadd.f32 %v2815, %v3038
    %v3040 = vpop.f32.mrb[0].mxu0
    %3041 = vdwg.mxu0
    %3042 = vmatprep.subr.bf16.mxu0 0
    %3043 = vmatpush1.bf16.msra.mxu0 %v2802
    %3044 = vmatprep.subr.bf16.mxu0 0
    %3045 = vmatpush1.bf16.msra.mxu0 %v2803
    %3046 = vmatprep.subr.bf16.mxu0 0
    %3047 = vmatpush1.bf16.msra.mxu0 %v2804
    %3048 = vmatprep.subr.bf16.mxu0 0
    %3049 = vmatpush1.bf16.msra.mxu0 %v2805
    %3050 = vmatprep.subr.bf16.mxu0 0
    %3051 = vmatpush1.bf16.msra.mxu0 %v2806
    %3052 = vmatprep.subr.bf16.mxu0 0
    %3053 = vmatpush1.bf16.msra.mxu0 %v2807
    %3054 = vmatprep.subr.bf16.mxu0 0
    %3055 = vmatpush1.bf16.msra.mxu0 %v2808
    %3056 = vmatprep.subr.bf16.mxu0 0
    %3057 = vmatpush1.bf16.msra.mxu0 %v2809
    %3058 = vmatprep.subr.bf16.mxu0 0
    %3059 = vmatpush1.bf16.msra.mxu0 0
    %3060 = vmatprep.subr.bf16.mxu0 0
    %3061 = vmatpush1.bf16.msra.mxu0 0
    %3062 = vmatprep.subr.bf16.mxu0 0
    %3063 = vmatpush1.bf16.msra.mxu0 0
    %3064 = vmatprep.subr.bf16.mxu0 0
    %3065 = vmatpush1.bf16.msra.mxu0 0
    %3066 = vmatprep.subr.bf16.mxu0 0
    %3067 = vmatpush1.bf16.msra.mxu0 0
    %3068 = vmatprep.subr.bf16.mxu0 0
    %3069 = vmatpush1.bf16.msra.mxu0 0
    %3070 = vmatprep.subr.bf16.mxu0 0
    %3071 = vmatpush1.bf16.msra.mxu0 0
    %3072 = vmatprep.subr.bf16.mxu0 0
    %3073 = vmatpush1.bf16.msra.mxu0 0
    %3074 = vmatprep.mubr.bf16.mxu0 0
    %3075 = vmatmul.mubr.bf16.gmra.mrb[0].mxu0 %v991
    %v3076 = vpop.f32.mrb[0].mxu0
    %v3077 = vadd.f32 %v2852, %v3076
    %v3078 = vpop.f32.mrb[0].mxu0
    %v3079 = vpop.f32.mrb[0].mxu0
    %v3080 = vadd.f32 %v2855, %v3079
    %v3081 = vpop.f32.mrb[0].mxu0
    %3082 = vmatprep.mubr.bf16.mxu0 0
    %3083 = vmatmul.mubr.bf16.gmra.mrb[0].mxu0 %v994
    %v3084 = vpop.f32.mrb[0].mxu0
    %v3085 = vadd.f32 %v2860, %v3084
    %v3086 = vpop.f32.mrb[0].mxu0
    %v3087 = vpop.f32.mrb[0].mxu0
    %v3088 = vadd.f32 %v2863, %v3087
    %v3089 = vpop.f32.mrb[0].mxu0
    %3090 = vmatprep.mubr.bf16.mxu0 0
    %3091 = vmatmul.mubr.bf16.gmra.mrb[0].mxu0 %v997
    %v3092 = vpop.f32.mrb[0].mxu0
    %v3093 = vadd.f32 %v2868, %v3092
    %v3094 = vpop.f32.mrb[0].mxu0
    %v3095 = vpop.f32.mrb[0].mxu0
    %v3096 = vadd.f32 %v2871, %v3095
    %v3097 = vpop.f32.mrb[0].mxu0
    %3098 = vmatprep.mubr.bf16.mxu0 0
    %3099 = vmatmul.mubr.bf16.gmra.mrb[0].mxu0 %v1000
    %v3100 = vpop.f32.mrb[0].mxu0
    %v3101 = vadd.f32 %v2876, %v3100
    %v3102 = vpop.f32.mrb[0].mxu0
    %v3103 = vpop.f32.mrb[0].mxu0
    %v3104 = vadd.f32 %v2879, %v3103
    %v3105 = vpop.f32.mrb[0].mxu0
    %3106 = vmatprep.mubr.bf16.mxu0 0
    %3107 = vmatmul.mubr.bf16.gmra.mrb[0].mxu0 %v1003
    %v3108 = vpop.f32.mrb[0].mxu0
    %v3109 = vadd.f32 %v2884, %v3108
    %v3110 = vpop.f32.mrb[0].mxu0
    %v3111 = vpop.f32.mrb[0].mxu0
    %v3112 = vadd.f32 %v2887, %v3111
    %v3113 = vpop.f32.mrb[0].mxu0
    %3114 = vmatprep.mubr.bf16.mxu0 0
    %3115 = vmatmul.mubr.bf16.gmra.mrb[0].mxu0 %v1006
    %v3116 = vpop.f32.mrb[0].mxu0
    %v3117 = vadd.f32 %v2892, %v3116
    %v3118 = vpop.f32.mrb[0].mxu0
    %v3119 = vpop.f32.mrb[0].mxu0
    %v3120 = vadd.f32 %v2895, %v3119
    %v3121 = vpop.f32.mrb[0].mxu0
    %3122 = vmatprep.mubr.bf16.mxu0 0
    %3123 = vmatmul.mubr.bf16.gmra.mrb[0].mxu0 %v1009
    %v3124 = vpop.f32.mrb[0].mxu0
    %v3125 = vadd.f32 %v2900, %v3124
    %v3126 = vpop.f32.mrb[0].mxu0
    %v3127 = vpop.f32.mrb[0].mxu0
    %v3128 = vadd.f32 %v2903, %v3127
    %v3129 = vpop.f32.mrb[0].mxu0
    %3130 = vmatprep.mubr.bf16.mxu0 0
    %3131 = vmatmul.mubr.bf16.gmra.mrb[0].mxu0 %v1012
    %v3132 = vpop.f32.mrb[0].mxu0
    %v3133 = vadd.f32 %v2908, %v3132
    %v3134 = vpop.f32.mrb[0].mxu0
    %v3135 = vpop.f32.mrb[0].mxu0
    %v3136 = vadd.f32 %v2911, %v3135
    %v3137 = vpop.f32.mrb[0].mxu0
    %3138 = vmatprep.mubr.bf16.mxu0 0
    %3139 = vmatmul.mubr.bf16.gmra.mrb[0].mxu0 %v1015
    %v3140 = vpop.f32.mrb[0].mxu0
    %v3141 = vadd.f32 %v2916, %v3140
    %v3142 = vpop.f32.mrb[0].mxu0
    %v3143 = vpop.f32.mrb[0].mxu0
    %v3144 = vadd.f32 %v2919, %v3143
    %v3145 = vpop.f32.mrb[0].mxu0
    %3146 = vmatprep.mubr.bf16.mxu0 0
    %3147 = vmatmul.mubr.bf16.gmra.mrb[0].mxu0 %v1018
    %v3148 = vpop.f32.mrb[0].mxu0
    %v3149 = vadd.f32 %v2924, %v3148
    %v3150 = vpop.f32.mrb[0].mxu0
    %v3151 = vpop.f32.mrb[0].mxu0
    %v3152 = vadd.f32 %v2927, %v3151
    %v3153 = vpop.f32.mrb[0].mxu0
    %3154 = vmatprep.mubr.bf16.mxu0 0
    %3155 = vmatmul.mubr.bf16.gmra.mrb[0].mxu0 %v1021
    %v3156 = vpop.f32.mrb[0].mxu0
    %v3157 = vadd.f32 %v2932, %v3156
    %v3158 = vpop.f32.mrb[0].mxu0
    %v3159 = vpop.f32.mrb[0].mxu0
    %v3160 = vadd.f32 %v2935, %v3159
    %v3161 = vpop.f32.mrb[0].mxu0
    %3162 = vmatprep.mubr.bf16.mxu0 0
    %3163 = vmatmul.mubr.bf16.gmra.mrb[0].mxu0 %v1024
    %v3164 = vpop.f32.mrb[0].mxu0
    %v3165 = vadd.f32 %v2940, %v3164
    %v3166 = vpop.f32.mrb[0].mxu0
    %v3167 = vpop.f32.mrb[0].mxu0
    %v3168 = vadd.f32 %v2943, %v3167
    %v3169 = vpop.f32.mrb[0].mxu0
    %3170 = vmatprep.mubr.bf16.mxu0 0
    %3171 = vmatmul.mubr.bf16.gmra.mrb[0].mxu0 %v1027
    %v3172 = vpop.f32.mrb[0].mxu0
    %v3173 = vadd.f32 %v2948, %v3172
    %v3174 = vpop.f32.mrb[0].mxu0
    %v3175 = vpop.f32.mrb[0].mxu0
    %v3176 = vadd.f32 %v2951, %v3175
    %v3177 = vpop.f32.mrb[0].mxu0
    %3178 = vmatprep.mubr.bf16.mxu0 0
    %3179 = vmatmul.mubr.bf16.gmra.mrb[0].mxu0 %v1030
    %v3180 = vpop.f32.mrb[0].mxu0
    %v3181 = vadd.f32 %v2956, %v3180
    %v3182 = vpop.f32.mrb[0].mxu0
    %v3183 = vpop.f32.mrb[0].mxu0
    %v3184 = vadd.f32 %v2959, %v3183
    %v3185 = vpop.f32.mrb[0].mxu0
    %3186 = vmatprep.mubr.bf16.mxu0 0
    %3187 = vmatmul.mubr.bf16.gmra.mrb[0].mxu0 %v1033
    %v3188 = vpop.f32.mrb[0].mxu0
    %v3189 = vadd.f32 %v2964, %v3188
    %v3190 = vpop.f32.mrb[0].mxu0
    %v3191 = vpop.f32.mrb[0].mxu0
    %v3192 = vadd.f32 %v2967, %v3191
    %v3193 = vpop.f32.mrb[0].mxu0
    %3194 = vmatprep.mubr.bf16.mxu0 0
    %3195 = vmatmul.mubr.bf16.gmra.mrb[0].mxu0 %v1036
    %v3196 = vpop.f32.mrb[0].mxu0
    %v3197 = vadd.f32 %v2972, %v3196
    %v3198 = vpop.f32.mrb[0].mxu0
    %v3199 = vpop.f32.mrb[0].mxu0
    %v3200 = vadd.f32 %v2975, %v3199
    %v3201 = vpop.f32.mrb[0].mxu0
    %3202 = vmatprep.mubr.bf16.mxu0 0
    %3203 = vmatmul.mubr.bf16.gmra.mrb[0].mxu0 %v1039
    %v3204 = vpop.f32.mrb[0].mxu0
    %v3205 = vadd.f32 %v2980, %v3204
    %v3206 = vpop.f32.mrb[0].mxu0
    %v3207 = vpop.f32.mrb[0].mxu0
    %v3208 = vadd.f32 %v2983, %v3207
    %v3209 = vpop.f32.mrb[0].mxu0
    %3210 = vmatprep.mubr.bf16.mxu0 0
    %3211 = vmatmul.mubr.bf16.gmra.mrb[0].mxu0 %v1042
    %v3212 = vpop.f32.mrb[0].mxu0
    %v3213 = vadd.f32 %v2988, %v3212
    %v3214 = vpop.f32.mrb[0].mxu0
    %v3215 = vpop.f32.mrb[0].mxu0
    %v3216 = vadd.f32 %v2991, %v3215
    %v3217 = vpop.f32.mrb[0].mxu0
    %3218 = vmatprep.mubr.bf16.mxu0 0
    %3219 = vmatmul.mubr.bf16.gmra.mrb[0].mxu0 %v1045
    %v3220 = vpop.f32.mrb[0].mxu0
    %v3221 = vadd.f32 %v2996, %v3220
    %v3222 = vpop.f32.mrb[0].mxu0
    %v3223 = vpop.f32.mrb[0].mxu0
    %v3224 = vadd.f32 %v2999, %v3223
    %v3225 = vpop.f32.mrb[0].mxu0
    %3226 = vmatprep.mubr.bf16.mxu0 0
    %3227 = vmatmul.mubr.bf16.gmra.mrb[0].mxu0 %v1048
    %v3228 = vpop.f32.mrb[0].mxu0
    %v3229 = vadd.f32 %v3004, %v3228
    %v3230 = vpop.f32.mrb[0].mxu0
    %v3231 = vpop.f32.mrb[0].mxu0
    %v3232 = vadd.f32 %v3007, %v3231
    %v3233 = vpop.f32.mrb[0].mxu0
    %3234 = vmatprep.mubr.bf16.mxu0 0
    %3235 = vmatmul.mubr.bf16.gmra.mrb[0].mxu0 %v1051
    %v3236 = vpop.f32.mrb[0].mxu0
    %v3237 = vadd.f32 %v3012, %v3236
    %v3238 = vpop.f32.mrb[0].mxu0
    %v3239 = vpop.f32.mrb[0].mxu0
    %v3240 = vadd.f32 %v3015, %v3239
    %v3241 = vpop.f32.mrb[0].mxu0
    %3242 = vmatprep.mubr.bf16.mxu0 0
    %3243 = vmatmul.mubr.bf16.gmra.mrb[0].mxu0 %v1054
    %v3244 = vpop.f32.mrb[0].mxu0
    %v3245 = vadd.f32 %v3020, %v3244
    %v3246 = vpop.f32.mrb[0].mxu0
    %v3247 = vpop.f32.mrb[0].mxu0
    %v3248 = vadd.f32 %v3023, %v3247
    %v3249 = vpop.f32.mrb[0].mxu0
    %3250 = vmatprep.mubr.bf16.mxu0 0
    %3251 = vmatmul.mubr.bf16.gmra.mrb[0].mxu0 %v1057
    %v3252 = vpop.f32.mrb[0].mxu0
    %v3253 = vadd.f32 %v3028, %v3252
    %v3254 = vpop.f32.mrb[0].mxu0
    %v3255 = vpop.f32.mrb[0].mxu0
    %v3256 = vadd.f32 %v3031, %v3255
    %v3257 = vpop.f32.mrb[0].mxu0
    %3258 = vmatprep.mubr.bf16.mxu0 0
    %3259 = vmatmul.mubr.bf16.gmra.mrb[0].mxu0 %v1060
    %v3260 = vpop.f32.mrb[0].mxu0
    %v3261 = vadd.f32 %v3036, %v3260
    %v3262 = vpop.f32.mrb[0].mxu0
    %v3263 = vpop.f32.mrb[0].mxu0
    %v3264 = vadd.f32 %v3039, %v3263
    %v3265 = vpop.f32.mrb[0].mxu0
    %3266 = vdwg.mxu0
    %3267 = vst [vmem:[#allocation14] sm:$0xff] %v3077
    %3268 = vst [vmem:[#allocation14 + $0x8] sm:$0xff] %v3080
    %3269 = vst [vmem:[#allocation14 + $0x10] sm:$0xff] %v3085
    %3270 = vst [vmem:[#allocation14 + $0x18] sm:$0xff] %v3088
    %3271 = vst [vmem:[#allocation14 + $0x20] sm:$0xff] %v3093
    %3272 = vst [vmem:[#allocation14 + $0x28] sm:$0xff] %v3096
    %3273 = vst [vmem:[#allocation14 + $0x30] sm:$0xff] %v3101
    %3274 = vst [vmem:[#allocation14 + $0x38] sm:$0xff] %v3104
    %3275 = vst [vmem:[#allocation14 + $0x40] sm:$0xff] %v3109
    %3276 = vst [vmem:[#allocation14 + $0x48] sm:$0xff] %v3112
    %3277 = vst [vmem:[#allocation14 + $0x50] sm:$0xff] %v3117
    %3278 = vst [vmem:[#allocation14 + $0x58] sm:$0xff] %v3120
    %3279 = vst [vmem:[#allocation14 + $0x60] sm:$0xff] %v3125
    %3280 = vst [vmem:[#allocation14 + $0x68] sm:$0xff] %v3128
    %3281 = vst [vmem:[#allocation14 + $0x70] sm:$0xff] %v3133
    %3282 = vst [vmem:[#allocation14 + $0x78] sm:$0xff] %v3136
    %3283 = vst [vmem:[#allocation14 + $0x80] sm:$0xff] %v3141
    %3284 = vst [vmem:[#allocation14 + $0x88] sm:$0xff] %v3144
    %3285 = vst [vmem:[#allocation14 + $0x90] sm:$0xff] %v3149
    %3286 = vst [vmem:[#allocation14 + $0x98] sm:$0xff] %v3152
    %3287 = vst [vmem:[#allocation14 + $0xa0] sm:$0xff] %v3157
    %3288 = vst [vmem:[#allocation14 + $0xa8] sm:$0xff] %v3160
    %3289 = vst [vmem:[#allocation14 + $0xb0] sm:$0xff] %v3165
    %3290 = vst [vmem:[#allocation14 + $0xb8] sm:$0xff] %v3168
    %3291 = vst [vmem:[#allocation14 + $0xc0] sm:$0xff] %v3173
    %3292 = vst [vmem:[#allocation14 + $0xc8] sm:$0xff] %v3176
    %3293 = vst [vmem:[#allocation14 + $0xd0] sm:$0xff] %v3181
    %3294 = vst [vmem:[#allocation14 + $0xd8] sm:$0xff] %v3184
    %3295 = vst [vmem:[#allocation14 + $0xe0] sm:$0xff] %v3189
    %3296 = vst [vmem:[#allocation14 + $0xe8] sm:$0xff] %v3192
    %3297 = vst [vmem:[#allocation14 + $0xf0] sm:$0xff] %v3197
    %3298 = vst [vmem:[#allocation14 + $0xf8] sm:$0xff] %v3200
    %3299 = vst [vmem:[#allocation14 + $0x100] sm:$0xff] %v3205
    %3300 = vst [vmem:[#allocation14 + $0x108] sm:$0xff] %v3208
    %3301 = vst [vmem:[#allocation14 + $0x110] sm:$0xff] %v3213
    %3302 = vst [vmem:[#allocation14 + $0x118] sm:$0xff] %v3216
    %3303 = vst [vmem:[#allocation14 + $0x120] sm:$0xff] %v3221
    %3304 = vst [vmem:[#allocation14 + $0x128] sm:$0xff] %v3224
    %3305 = vst [vmem:[#allocation14 + $0x130] sm:$0xff] %v3229
    %3306 = vst [vmem:[#allocation14 + $0x138] sm:$0xff] %v3232
    %3307 = vst [vmem:[#allocation14 + $0x140] sm:$0xff] %v3237
    %3308 = vst [vmem:[#allocation14 + $0x148] sm:$0xff] %v3240
    %3309 = vst [vmem:[#allocation14 + $0x150] sm:$0xff] %v3245
    %3310 = vst [vmem:[#allocation14 + $0x158] sm:$0xff] %v3248
    %3311 = vst [vmem:[#allocation14 + $0x160] sm:$0xff] %v3253
    %3312 = vst [vmem:[#allocation14 + $0x168] sm:$0xff] %v3256
    %3313 = vst [vmem:[#allocation14 + $0x170] sm:$0xff] %v3261
    %3314 = vst [vmem:[#allocation14 + $0x178] sm:$0xff] %v3264
    %v3315 = vmax.f32 %v3077, 0.0
    %v3316 = vmax.f32 %v3080, 0.0
    %v3317 = vmax.f32 %v3085, 0.0
    %v3318 = vmax.f32 %v3088, 0.0
    %v3319 = vmax.f32 %v3093, 0.0
    %v3320 = vmax.f32 %v3096, 0.0
    %v3321 = vmax.f32 %v3101, 0.0
    %v3322 = vmax.f32 %v3104, 0.0
    %v3323 = vmax.f32 %v3109, 0.0
    %v3324 = vmax.f32 %v3112, 0.0
    %v3325 = vmax.f32 %v3117, 0.0
    %v3326 = vmax.f32 %v3120, 0.0
    %v3327 = vmax.f32 %v3125, 0.0
    %v3328 = vmax.f32 %v3128, 0.0
    %v3329 = vmax.f32 %v3133, 0.0
    %v3330 = vmax.f32 %v3136, 0.0
    %v3331 = vmax.f32 %v3141, 0.0
    %v3332 = vmax.f32 %v3144, 0.0
    %v3333 = vmax.f32 %v3149, 0.0
    %v3334 = vmax.f32 %v3152, 0.0
    %v3335 = vmax.f32 %v3157, 0.0
    %v3336 = vmax.f32 %v3160, 0.0
    %v3337 = vmax.f32 %v3165, 0.0
    %v3338 = vmax.f32 %v3168, 0.0
    %v3339 = vmax.f32 %v3173, 0.0
    %v3340 = vmax.f32 %v3176, 0.0
    %v3341 = vmax.f32 %v3181, 0.0
    %v3342 = vmax.f32 %v3184, 0.0
    %v3343 = vmax.f32 %v3189, 0.0
    %v3344 = vmax.f32 %v3192, 0.0
    %v3345 = vmax.f32 %v3197, 0.0
    %v3346 = vmax.f32 %v3200, 0.0
    %v3347 = vmax.f32 %v3205, 0.0
    %v3348 = vmax.f32 %v3208, 0.0
    %v3349 = vmax.f32 %v3213, 0.0
    %v3350 = vmax.f32 %v3216, 0.0
    %v3351 = vmax.f32 %v3221, 0.0
    %v3352 = vmax.f32 %v3224, 0.0
    %v3353 = vmax.f32 %v3229, 0.0
    %v3354 = vmax.f32 %v3232, 0.0
    %v3355 = vmax.f32 %v3237, 0.0
    %v3356 = vmax.f32 %v3240, 0.0
    %v3357 = vmax.f32 %v3245, 0.0
    %v3358 = vmax.f32 %v3248, 0.0
    %v3359 = vmax.f32 %v3253, 0.0
    %v3360 = vmax.f32 %v3256, 0.0
    %v3361 = vmax.f32 %v3261, 0.0
    %v3362 = vmax.f32 %v3264, 0.0
    %v3363 = vpack.c.bf16 %v3316, %v3315
    %v3364 = vpack.c.bf16 %v3318, %v3317
    %v3365 = vpack.c.bf16 %v3320, %v3319
    %v3366 = vpack.c.bf16 %v3322, %v3321
    %v3367 = vpack.c.bf16 %v3324, %v3323
    %v3368 = vpack.c.bf16 %v3326, %v3325
    %v3369 = vpack.c.bf16 %v3328, %v3327
    %v3370 = vpack.c.bf16 %v3330, %v3329
    %v3371 = vpack.c.bf16 %v3332, %v3331
    %v3372 = vpack.c.bf16 %v3334, %v3333
    %v3373 = vpack.c.bf16 %v3336, %v3335
    %v3374 = vpack.c.bf16 %v3338, %v3337
    %v3375 = vpack.c.bf16 %v3340, %v3339
    %v3376 = vpack.c.bf16 %v3342, %v3341
    %v3377 = vpack.c.bf16 %v3344, %v3343
    %v3378 = vpack.c.bf16 %v3346, %v3345
    %v3379 = vpack.c.bf16 %v3348, %v3347
    %v3380 = vpack.c.bf16 %v3350, %v3349
    %v3381 = vpack.c.bf16 %v3352, %v3351
    %v3382 = vpack.c.bf16 %v3354, %v3353
    %v3383 = vpack.c.bf16 %v3356, %v3355
    %v3384 = vpack.c.bf16 %v3358, %v3357
    %v3385 = vpack.c.bf16 %v3360, %v3359
    %v3386 = vpack.c.bf16 %v3362, %v3361
    %v3387 = vld [vmem:[#allocation11] sm:$0xf]
    %v3388 = vld [vmem:[#allocation11 + $0x4] sm:$0xf]
    %v3389 = vld [vmem:[#allocation11 + $0x8] sm:$0xf]
    %v3390 = vld [vmem:[#allocation11 + $0xc] sm:$0xf]
    %v3391 = vld [vmem:[#allocation11 + $0x10] sm:$0xf]
    %v3392 = vld [vmem:[#allocation11 + $0x14] sm:$0xf]
    %v3393 = vld [vmem:[#allocation11 + $0x18] sm:$0xf]
    %v3394 = vld [vmem:[#allocation11 + $0x1c] sm:$0xf]
    %v3395 = vld [vmem:[#allocation11 + $0x20] sm:$0xf]
    %v3396 = vld [vmem:[#allocation11 + $0x24] sm:$0xf]
    %v3397 = vld [vmem:[#allocation11 + $0x28] sm:$0xf]
    %v3398 = vld [vmem:[#allocation11 + $0x2c] sm:$0xf]
    %v3399 = vld [vmem:[#allocation11 + $0x30] sm:$0xf]
    %v3400 = vld [vmem:[#allocation11 + $0x34] sm:$0xf]
    %v3401 = vld [vmem:[#allocation11 + $0x38] sm:$0xf]
    %v3402 = vld [vmem:[#allocation11 + $0x3c] sm:$0xf]
    %v3403 = vld [vmem:[%s9] sm:$0x1]
    %v3405 = vlaneseq
    %v3406 = vshrl.u32 %v3405, 7
    %v3407 = vsub.s32 0, %v3406
    %v3408 = vrot.slane %v3403, %v3407
    %v3426 = vunpack.c.l.b16 %v3387
    %v3427 = vunpack.c.l.b16 %v3388
    %v3428 = vunpack.c.l.b16 %v3389
    %v3429 = vunpack.c.l.b16 %v3390
    %v3430 = vunpack.c.l.b16 %v3391
    %v3431 = vunpack.c.l.b16 %v3392
    %v3432 = vunpack.c.l.b16 %v3393
    %v3433 = vunpack.c.l.b16 %v3394
    %v3434 = vunpack.c.l.b16 %v3395
    %v3435 = vunpack.c.l.b16 %v3396
    %v3436 = vunpack.c.l.b16 %v3397
    %v3437 = vunpack.c.l.b16 %v3398
    %v3438 = vunpack.c.l.b16 %v3399
    %v3439 = vunpack.c.l.b16 %v3400
    %v3440 = vunpack.c.l.b16 %v3401
    %v3441 = vunpack.c.l.b16 %v3402
    %v3442 = vpack.c.b16 %v3427, %v3426
    %v3443 = vpack.c.b16 %v3429, %v3428
    %v3444 = vpack.c.b16 %v3431, %v3430
    %v3445 = vpack.c.b16 %v3433, %v3432
    %v3446 = vpack.c.b16 %v3435, %v3434
    %v3447 = vpack.c.b16 %v3437, %v3436
    %v3448 = vpack.c.b16 %v3439, %v3438
    %v3449 = vpack.c.b16 %v3441, %v3440
    %3458 = vmatprep.subr.bf16.mxu0 0
    %3459 = vmatpush1.bf16.msra.mxu0 %v3442
    %3460 = vmatprep.subr.bf16.mxu0 0
    %3461 = vmatpush1.bf16.msra.mxu0 %v3443
    %3462 = vmatprep.subr.bf16.mxu0 0
    %3463 = vmatpush1.bf16.msra.mxu0 %v3444
    %3464 = vmatprep.subr.bf16.mxu0 0
    %3465 = vmatpush1.bf16.msra.mxu0 %v3445
    %3466 = vmatprep.subr.bf16.mxu0 0
    %3467 = vmatpush1.bf16.msra.mxu0 %v3446
    %3468 = vmatprep.subr.bf16.mxu0 0
    %3469 = vmatpush1.bf16.msra.mxu0 %v3447
    %3470 = vmatprep.subr.bf16.mxu0 0
    %3471 = vmatpush1.bf16.msra.mxu0 %v3448
    %3472 = vmatprep.subr.bf16.mxu0 0
    %3473 = vmatpush1.bf16.msra.mxu0 %v3449
    %3474 = vmatprep.subr.bf16.mxu0 0
    %3475 = vmatpush1.bf16.msra.mxu0 0
    %3476 = vmatprep.subr.bf16.mxu0 0
    %3477 = vmatpush1.bf16.msra.mxu0 0
    %3478 = vmatprep.subr.bf16.mxu0 0
    %3479 = vmatpush1.bf16.msra.mxu0 0
    %3480 = vmatprep.subr.bf16.mxu0 0
    %3481 = vmatpush1.bf16.msra.mxu0 0
    %3482 = vmatprep.subr.bf16.mxu0 0
    %3483 = vmatpush1.bf16.msra.mxu0 0
    %3484 = vmatprep.subr.bf16.mxu0 0
    %3485 = vmatpush1.bf16.msra.mxu0 0
    %3486 = vmatprep.subr.bf16.mxu0 0
    %3487 = vmatpush1.bf16.msra.mxu0 0
    %3488 = vmatprep.subr.bf16.mxu0 0
    %3489 = vmatpush1.bf16.msra.mxu0 0
    %3490 = vmatprep.mubr.bf16.mxu0 0
    %3491 = vmatmul.mubr.bf16.gmra.mrb[0].mxu0 %v3363
    %v3492 = vpop.f32.mrb[0].mxu0
    %v3493 = vadd.f32 %v3408, %v3492
    %v3494 = vpop.f32.mrb[0].mxu0
    %v3495 = vpop.f32.mrb[0].mxu0
    %v3496 = vadd.f32 %v3408, %v3495
    %v3497 = vpop.f32.mrb[0].mxu0
    %3498 = vmatprep.mubr.bf16.mxu0 0
    %3499 = vmatmul.mubr.bf16.gmra.mrb[0].mxu0 %v3364
    %v3500 = vpop.f32.mrb[0].mxu0
    %v3501 = vadd.f32 %v3408, %v3500
    %v3502 = vpop.f32.mrb[0].mxu0
    %v3503 = vpop.f32.mrb[0].mxu0
    %v3504 = vadd.f32 %v3408, %v3503
    %v3505 = vpop.f32.mrb[0].mxu0
    %3506 = vmatprep.mubr.bf16.mxu0 0
    %3507 = vmatmul.mubr.bf16.gmra.mrb[0].mxu0 %v3365
    %v3508 = vpop.f32.mrb[0].mxu0
    %v3509 = vadd.f32 %v3408, %v3508
    %v3510 = vpop.f32.mrb[0].mxu0
    %v3511 = vpop.f32.mrb[0].mxu0
    %v3512 = vadd.f32 %v3408, %v3511
    %v3513 = vpop.f32.mrb[0].mxu0
    %3514 = vmatprep.mubr.bf16.mxu0 0
    %3515 = vmatmul.mubr.bf16.gmra.mrb[0].mxu0 %v3366
    %v3516 = vpop.f32.mrb[0].mxu0
    %v3517 = vadd.f32 %v3408, %v3516
    %v3518 = vpop.f32.mrb[0].mxu0
    %v3519 = vpop.f32.mrb[0].mxu0
    %v3520 = vadd.f32 %v3408, %v3519
    %v3521 = vpop.f32.mrb[0].mxu0
    %3522 = vmatprep.mubr.bf16.mxu0 0
    %3523 = vmatmul.mubr.bf16.gmra.mrb[0].mxu0 %v3367
    %v3524 = vpop.f32.mrb[0].mxu0
    %v3525 = vadd.f32 %v3408, %v3524
    %v3526 = vpop.f32.mrb[0].mxu0
    %v3527 = vpop.f32.mrb[0].mxu0
    %v3528 = vadd.f32 %v3408, %v3527
    %v3529 = vpop.f32.mrb[0].mxu0
    %3530 = vmatprep.mubr.bf16.mxu0 0
    %3531 = vmatmul.mubr.bf16.gmra.mrb[0].mxu0 %v3368
    %v3532 = vpop.f32.mrb[0].mxu0
    %v3533 = vadd.f32 %v3408, %v3532
    %v3534 = vpop.f32.mrb[0].mxu0
    %v3535 = vpop.f32.mrb[0].mxu0
    %v3536 = vadd.f32 %v3408, %v3535
    %v3537 = vpop.f32.mrb[0].mxu0
    %3538 = vmatprep.mubr.bf16.mxu0 0
    %3539 = vmatmul.mubr.bf16.gmra.mrb[0].mxu0 %v3369
    %v3540 = vpop.f32.mrb[0].mxu0
    %v3541 = vadd.f32 %v3408, %v3540
    %v3542 = vpop.f32.mrb[0].mxu0
    %v3543 = vpop.f32.mrb[0].mxu0
    %v3544 = vadd.f32 %v3408, %v3543
    %v3545 = vpop.f32.mrb[0].mxu0
    %3546 = vmatprep.mubr.bf16.mxu0 0
    %3547 = vmatmul.mubr.bf16.gmra.mrb[0].mxu0 %v3370
    %v3548 = vpop.f32.mrb[0].mxu0
    %v3549 = vadd.f32 %v3408, %v3548
    %v3550 = vpop.f32.mrb[0].mxu0
    %v3551 = vpop.f32.mrb[0].mxu0
    %v3552 = vadd.f32 %v3408, %v3551
    %v3553 = vpop.f32.mrb[0].mxu0
    %3554 = vmatprep.mubr.bf16.mxu0 0
    %3555 = vmatmul.mubr.bf16.gmra.mrb[0].mxu0 %v3371
    %v3556 = vpop.f32.mrb[0].mxu0
    %v3557 = vadd.f32 %v3408, %v3556
    %v3558 = vpop.f32.mrb[0].mxu0
    %v3559 = vpop.f32.mrb[0].mxu0
    %v3560 = vadd.f32 %v3408, %v3559
    %v3561 = vpop.f32.mrb[0].mxu0
    %3562 = vmatprep.mubr.bf16.mxu0 0
    %3563 = vmatmul.mubr.bf16.gmra.mrb[0].mxu0 %v3372
    %v3564 = vpop.f32.mrb[0].mxu0
    %v3565 = vadd.f32 %v3408, %v3564
    %v3566 = vpop.f32.mrb[0].mxu0
    %v3567 = vpop.f32.mrb[0].mxu0
    %v3568 = vadd.f32 %v3408, %v3567
    %v3569 = vpop.f32.mrb[0].mxu0
    %3570 = vmatprep.mubr.bf16.mxu0 0
    %3571 = vmatmul.mubr.bf16.gmra.mrb[0].mxu0 %v3373
    %v3572 = vpop.f32.mrb[0].mxu0
    %v3573 = vadd.f32 %v3408, %v3572
    %v3574 = vpop.f32.mrb[0].mxu0
    %v3575 = vpop.f32.mrb[0].mxu0
    %v3576 = vadd.f32 %v3408, %v3575
    %v3577 = vpop.f32.mrb[0].mxu0
    %3578 = vmatprep.mubr.bf16.mxu0 0
    %3579 = vmatmul.mubr.bf16.gmra.mrb[0].mxu0 %v3374
    %v3580 = vpop.f32.mrb[0].mxu0
    %v3581 = vadd.f32 %v3408, %v3580
    %v3582 = vpop.f32.mrb[0].mxu0
    %v3583 = vpop.f32.mrb[0].mxu0
    %v3584 = vadd.f32 %v3408, %v3583
    %v3585 = vpop.f32.mrb[0].mxu0
    %3586 = vmatprep.mubr.bf16.mxu0 0
    %3587 = vmatmul.mubr.bf16.gmra.mrb[0].mxu0 %v3375
    %v3588 = vpop.f32.mrb[0].mxu0
    %v3589 = vadd.f32 %v3408, %v3588
    %v3590 = vpop.f32.mrb[0].mxu0
    %v3591 = vpop.f32.mrb[0].mxu0
    %v3592 = vadd.f32 %v3408, %v3591
    %v3593 = vpop.f32.mrb[0].mxu0
    %3594 = vmatprep.mubr.bf16.mxu0 0
    %3595 = vmatmul.mubr.bf16.gmra.mrb[0].mxu0 %v3376
    %v3596 = vpop.f32.mrb[0].mxu0
    %v3597 = vadd.f32 %v3408, %v3596
    %v3598 = vpop.f32.mrb[0].mxu0
    %v3599 = vpop.f32.mrb[0].mxu0
    %v3600 = vadd.f32 %v3408, %v3599
    %v3601 = vpop.f32.mrb[0].mxu0
    %3602 = vmatprep.mubr.bf16.mxu0 0
    %3603 = vmatmul.mubr.bf16.gmra.mrb[0].mxu0 %v3377
    %v3604 = vpop.f32.mrb[0].mxu0
    %v3605 = vadd.f32 %v3408, %v3604
    %v3606 = vpop.f32.mrb[0].mxu0
    %v3607 = vpop.f32.mrb[0].mxu0
    %v3608 = vadd.f32 %v3408, %v3607
    %v3609 = vpop.f32.mrb[0].mxu0
    %3610 = vmatprep.mubr.bf16.mxu0 0
    %3611 = vmatmul.mubr.bf16.gmra.mrb[0].mxu0 %v3378
    %v3612 = vpop.f32.mrb[0].mxu0
    %v3613 = vadd.f32 %v3408, %v3612
    %v3614 = vpop.f32.mrb[0].mxu0
    %v3615 = vpop.f32.mrb[0].mxu0
    %v3616 = vadd.f32 %v3408, %v3615
    %v3617 = vpop.f32.mrb[0].mxu0
    %3618 = vmatprep.mubr.bf16.mxu0 0
    %3619 = vmatmul.mubr.bf16.gmra.mrb[0].mxu0 %v3379
    %v3620 = vpop.f32.mrb[0].mxu0
    %v3621 = vadd.f32 %v3408, %v3620
    %v3622 = vpop.f32.mrb[0].mxu0
    %v3623 = vpop.f32.mrb[0].mxu0
    %v3624 = vadd.f32 %v3408, %v3623
    %v3625 = vpop.f32.mrb[0].mxu0
    %3626 = vmatprep.mubr.bf16.mxu0 0
    %3627 = vmatmul.mubr.bf16.gmra.mrb[0].mxu0 %v3380
    %v3628 = vpop.f32.mrb[0].mxu0
    %v3629 = vadd.f32 %v3408, %v3628
    %v3630 = vpop.f32.mrb[0].mxu0
    %v3631 = vpop.f32.mrb[0].mxu0
    %v3632 = vadd.f32 %v3408, %v3631
    %v3633 = vpop.f32.mrb[0].mxu0
    %3634 = vmatprep.mubr.bf16.mxu0 0
    %3635 = vmatmul.mubr.bf16.gmra.mrb[0].mxu0 %v3381
    %v3636 = vpop.f32.mrb[0].mxu0
    %v3637 = vadd.f32 %v3408, %v3636
    %v3638 = vpop.f32.mrb[0].mxu0
    %v3639 = vpop.f32.mrb[0].mxu0
    %v3640 = vadd.f32 %v3408, %v3639
    %v3641 = vpop.f32.mrb[0].mxu0
    %3642 = vmatprep.mubr.bf16.mxu0 0
    %3643 = vmatmul.mubr.bf16.gmra.mrb[0].mxu0 %v3382
    %v3644 = vpop.f32.mrb[0].mxu0
    %v3645 = vadd.f32 %v3408, %v3644
    %v3646 = vpop.f32.mrb[0].mxu0
    %v3647 = vpop.f32.mrb[0].mxu0
    %v3648 = vadd.f32 %v3408, %v3647
    %v3649 = vpop.f32.mrb[0].mxu0
    %3650 = vmatprep.mubr.bf16.mxu0 0
    %3651 = vmatmul.mubr.bf16.gmra.mrb[0].mxu0 %v3383
    %v3652 = vpop.f32.mrb[0].mxu0
    %v3653 = vadd.f32 %v3408, %v3652
    %v3654 = vpop.f32.mrb[0].mxu0
    %v3655 = vpop.f32.mrb[0].mxu0
    %v3656 = vadd.f32 %v3408, %v3655
    %v3657 = vpop.f32.mrb[0].mxu0
    %3658 = vmatprep.mubr.bf16.mxu0 0
    %3659 = vmatmul.mubr.bf16.gmra.mrb[0].mxu0 %v3384
    %v3660 = vpop.f32.mrb[0].mxu0
    %v3661 = vadd.f32 %v3408, %v3660
    %v3662 = vpop.f32.mrb[0].mxu0
    %v3663 = vpop.f32.mrb[0].mxu0
    %v3664 = vadd.f32 %v3408, %v3663
    %v3665 = vpop.f32.mrb[0].mxu0
    %3666 = vmatprep.mubr.bf16.mxu0 0
    %3667 = vmatmul.mubr.bf16.gmra.mrb[0].mxu0 %v3385
    %v3668 = vpop.f32.mrb[0].mxu0
    %v3669 = vadd.f32 %v3408, %v3668
    %v3670 = vpop.f32.mrb[0].mxu0
    %v3671 = vpop.f32.mrb[0].mxu0
    %v3672 = vadd.f32 %v3408, %v3671
    %v3673 = vpop.f32.mrb[0].mxu0
    %3674 = vmatprep.mubr.bf16.mxu0 0
    %3675 = vmatmul.mubr.bf16.gmra.mrb[0].mxu0 %v3386
    %v3676 = vpop.f32.mrb[0].mxu0
    %v3677 = vadd.f32 %v3408, %v3676
    %v3678 = vpop.f32.mrb[0].mxu0
    %v3679 = vpop.f32.mrb[0].mxu0
    %v3680 = vadd.f32 %v3408, %v3679
    %v3681 = vpop.f32.mrb[0].mxu0
    %3682 = vdwg.mxu0
    %v3683 = vmax.f32 %v3493, 0.0
    %v3684 = vmax.f32 %v3496, 0.0
    %v3685 = vmax.f32 %v3501, 0.0
    %v3686 = vmax.f32 %v3504, 0.0
    %v3687 = vmax.f32 %v3509, 0.0
    %v3688 = vmax.f32 %v3512, 0.0
    %v3689 = vmax.f32 %v3517, 0.0
    %v3690 = vmax.f32 %v3520, 0.0
    %v3691 = vmax.f32 %v3525, 0.0
    %v3692 = vmax.f32 %v3528, 0.0
    %v3693 = vmax.f32 %v3533, 0.0
    %v3694 = vmax.f32 %v3536, 0.0
    %v3695 = vmax.f32 %v3541, 0.0
    %v3696 = vmax.f32 %v3544, 0.0
    %v3697 = vmax.f32 %v3549, 0.0
    %v3698 = vmax.f32 %v3552, 0.0
    %v3699 = vmax.f32 %v3557, 0.0
    %v3700 = vmax.f32 %v3560, 0.0
    %v3701 = vmax.f32 %v3565, 0.0
    %v3702 = vmax.f32 %v3568, 0.0
    %v3703 = vmax.f32 %v3573, 0.0
    %v3704 = vmax.f32 %v3576, 0.0
    %v3705 = vmax.f32 %v3581, 0.0
    %v3706 = vmax.f32 %v3584, 0.0
    %v3707 = vmax.f32 %v3589, 0.0
    %v3708 = vmax.f32 %v3592, 0.0
    %v3709 = vmax.f32 %v3597, 0.0
    %v3710 = vmax.f32 %v3600, 0.0
    %v3711 = vmax.f32 %v3605, 0.0
    %v3712 = vmax.f32 %v3608, 0.0
    %v3713 = vmax.f32 %v3613, 0.0
    %v3714 = vmax.f32 %v3616, 0.0
    %v3715 = vmax.f32 %v3621, 0.0
    %v3716 = vmax.f32 %v3624, 0.0
    %v3717 = vmax.f32 %v3629, 0.0
    %v3718 = vmax.f32 %v3632, 0.0
    %v3719 = vmax.f32 %v3637, 0.0
    %v3720 = vmax.f32 %v3640, 0.0
    %v3721 = vmax.f32 %v3645, 0.0
    %v3722 = vmax.f32 %v3648, 0.0
    %v3723 = vmax.f32 %v3653, 0.0
    %v3724 = vmax.f32 %v3656, 0.0
    %v3725 = vmax.f32 %v3661, 0.0
    %v3726 = vmax.f32 %v3664, 0.0
    %v3727 = vmax.f32 %v3669, 0.0
    %v3728 = vmax.f32 %v3672, 0.0
    %v3729 = vmax.f32 %v3677, 0.0
    %v3730 = vmax.f32 %v3680, 0.0
    %v3731 = vpack.c.bf16 %v3684, %v3683
    %v3732 = vpack.c.bf16 %v3686, %v3685
    %v3733 = vpack.c.bf16 %v3688, %v3687
    %v3734 = vpack.c.bf16 %v3690, %v3689
    %v3735 = vpack.c.bf16 %v3692, %v3691
    %v3736 = vpack.c.bf16 %v3694, %v3693
    %v3737 = vpack.c.bf16 %v3696, %v3695
    %v3738 = vpack.c.bf16 %v3698, %v3697
    %v3739 = vpack.c.bf16 %v3700, %v3699
    %v3740 = vpack.c.bf16 %v3702, %v3701
    %v3741 = vpack.c.bf16 %v3704, %v3703
    %v3742 = vpack.c.bf16 %v3706, %v3705
    %v3743 = vpack.c.bf16 %v3708, %v3707
    %v3744 = vpack.c.bf16 %v3710, %v3709
    %v3745 = vpack.c.bf16 %v3712, %v3711
    %v3746 = vpack.c.bf16 %v3714, %v3713
    %v3747 = vpack.c.bf16 %v3716, %v3715
    %v3748 = vpack.c.bf16 %v3718, %v3717
    %v3749 = vpack.c.bf16 %v3720, %v3719
    %v3750 = vpack.c.bf16 %v3722, %v3721
    %v3751 = vpack.c.bf16 %v3724, %v3723
    %v3752 = vpack.c.bf16 %v3726, %v3725
    %v3753 = vpack.c.bf16 %v3728, %v3727
    %v3754 = vpack.c.bf16 %v3730, %v3729
    %v3755 = vld [vmem:[#allocation13] sm:$0xf]
    %v3756 = vld [vmem:[#allocation13 + $0x4] sm:$0xf]
    %v3757 = vld [vmem:[#allocation13 + $0x8] sm:$0xf]
    %v3758 = vld [vmem:[#allocation13 + $0xc] sm:$0xf]
    %v3759 = vld [vmem:[#allocation13 + $0x10] sm:$0xf]
    %v3760 = vld [vmem:[#allocation13 + $0x14] sm:$0xf]
    %v3761 = vld [vmem:[#allocation13 + $0x18] sm:$0xf]
    %v3762 = vld [vmem:[#allocation13 + $0x1c] sm:$0xf]
    %v3763 = vld [vmem:[#allocation13 + $0x20] sm:$0xf]
    %v3764 = vld [vmem:[#allocation13 + $0x24] sm:$0xf]
    %v3765 = vld [vmem:[#allocation13 + $0x28] sm:$0xf]
    %v3766 = vld [vmem:[#allocation13 + $0x2c] sm:$0xf]
    %v3767 = vld [vmem:[#allocation13 + $0x30] sm:$0xf]
    %v3768 = vld [vmem:[#allocation13 + $0x34] sm:$0xf]
    %v3769 = vld [vmem:[#allocation13 + $0x38] sm:$0xf]
    %v3770 = vld [vmem:[#allocation13 + $0x3c] sm:$0xf]
    %v3771 = vld [vmem:[%s11] sm:$0x1]
    %v3773 = vlaneseq
    %v3774 = vshrl.u32 %v3773, 7
    %v3775 = vsub.s32 0, %v3774
    %v3776 = vrot.slane %v3771, %v3775
    %v3794 = vunpack.c.l.b16 %v3755
    %v3795 = vunpack.c.l.b16 %v3756
    %v3796 = vunpack.c.l.b16 %v3757
    %v3797 = vunpack.c.l.b16 %v3758
    %v3798 = vunpack.c.l.b16 %v3759
    %v3799 = vunpack.c.l.b16 %v3760
    %v3800 = vunpack.c.l.b16 %v3761
    %v3801 = vunpack.c.l.b16 %v3762
    %v3802 = vunpack.c.l.b16 %v3763
    %v3803 = vunpack.c.l.b16 %v3764
    %v3804 = vunpack.c.l.b16 %v3765
    %v3805 = vunpack.c.l.b16 %v3766
    %v3806 = vunpack.c.l.b16 %v3767
    %v3807 = vunpack.c.l.b16 %v3768
    %v3808 = vunpack.c.l.b16 %v3769
    %v3809 = vunpack.c.l.b16 %v3770
    %v3810 = vpack.c.b16 %v3795, %v3794
    %v3811 = vpack.c.b16 %v3797, %v3796
    %v3812 = vpack.c.b16 %v3799, %v3798
    %v3813 = vpack.c.b16 %v3801, %v3800
    %v3814 = vpack.c.b16 %v3803, %v3802
    %v3815 = vpack.c.b16 %v3805, %v3804
    %v3816 = vpack.c.b16 %v3807, %v3806
    %v3817 = vpack.c.b16 %v3809, %v3808
    %3826 = vmatprep.subr.bf16.mxu0 0
    %3827 = vmatpush1.bf16.msra.mxu0 %v3810
    %3828 = vmatprep.subr.bf16.mxu0 0
    %3829 = vmatpush1.bf16.msra.mxu0 %v3811
    %3830 = vmatprep.subr.bf16.mxu0 0
    %3831 = vmatpush1.bf16.msra.mxu0 %v3812
    %3832 = vmatprep.subr.bf16.mxu0 0
    %3833 = vmatpush1.bf16.msra.mxu0 %v3813
    %3834 = vmatprep.subr.bf16.mxu0 0
    %3835 = vmatpush1.bf16.msra.mxu0 %v3814
    %3836 = vmatprep.subr.bf16.mxu0 0
    %3837 = vmatpush1.bf16.msra.mxu0 %v3815
    %3838 = vmatprep.subr.bf16.mxu0 0
    %3839 = vmatpush1.bf16.msra.mxu0 %v3816
    %3840 = vmatprep.subr.bf16.mxu0 0
    %3841 = vmatpush1.bf16.msra.mxu0 %v3817
    %3842 = vmatprep.subr.bf16.mxu0 0
    %3843 = vmatpush1.bf16.msra.mxu0 0
    %3844 = vmatprep.subr.bf16.mxu0 0
    %3845 = vmatpush1.bf16.msra.mxu0 0
    %3846 = vmatprep.subr.bf16.mxu0 0
    %3847 = vmatpush1.bf16.msra.mxu0 0
    %3848 = vmatprep.subr.bf16.mxu0 0
    %3849 = vmatpush1.bf16.msra.mxu0 0
    %3850 = vmatprep.subr.bf16.mxu0 0
    %3851 = vmatpush1.bf16.msra.mxu0 0
    %3852 = vmatprep.subr.bf16.mxu0 0
    %3853 = vmatpush1.bf16.msra.mxu0 0
    %3854 = vmatprep.subr.bf16.mxu0 0
    %3855 = vmatpush1.bf16.msra.mxu0 0
    %3856 = vmatprep.subr.bf16.mxu0 0
    %3857 = vmatpush1.bf16.msra.mxu0 0
    %3858 = vmatprep.mubr.bf16.mxu0 0
    %3859 = vmatmul.mubr.bf16.gmra.mrb[0].mxu0 %v3731
    %v3860 = vpop.f32.mrb[0].mxu0
    %v3861 = vadd.f32 %v3776, %v3860
    %v3862 = vpop.f32.mrb[0].mxu0
    %v3863 = vpop.f32.mrb[0].mxu0
    %v3864 = vadd.f32 %v3776, %v3863
    %v3865 = vpop.f32.mrb[0].mxu0
    %3866 = vmatprep.mubr.bf16.mxu0 0
    %3867 = vmatmul.mubr.bf16.gmra.mrb[0].mxu0 %v3732
    %v3868 = vpop.f32.mrb[0].mxu0
    %v3869 = vadd.f32 %v3776, %v3868
    %v3870 = vpop.f32.mrb[0].mxu0
    %v3871 = vpop.f32.mrb[0].mxu0
    %v3872 = vadd.f32 %v3776, %v3871
    %v3873 = vpop.f32.mrb[0].mxu0
    %3874 = vmatprep.mubr.bf16.mxu0 0
    %3875 = vmatmul.mubr.bf16.gmra.mrb[0].mxu0 %v3733
    %v3876 = vpop.f32.mrb[0].mxu0
    %v3877 = vadd.f32 %v3776, %v3876
    %v3878 = vpop.f32.mrb[0].mxu0
    %v3879 = vpop.f32.mrb[0].mxu0
    %v3880 = vadd.f32 %v3776, %v3879
    %v3881 = vpop.f32.mrb[0].mxu0
    %3882 = vmatprep.mubr.bf16.mxu0 0
    %3883 = vmatmul.mubr.bf16.gmra.mrb[0].mxu0 %v3734
    %v3884 = vpop.f32.mrb[0].mxu0
    %v3885 = vadd.f32 %v3776, %v3884
    %v3886 = vpop.f32.mrb[0].mxu0
    %v3887 = vpop.f32.mrb[0].mxu0
    %v3888 = vadd.f32 %v3776, %v3887
    %v3889 = vpop.f32.mrb[0].mxu0
    %3890 = vmatprep.mubr.bf16.mxu0 0
    %3891 = vmatmul.mubr.bf16.gmra.mrb[0].mxu0 %v3735
    %v3892 = vpop.f32.mrb[0].mxu0
    %v3893 = vadd.f32 %v3776, %v3892
    %v3894 = vpop.f32.mrb[0].mxu0
    %v3895 = vpop.f32.mrb[0].mxu0
    %v3896 = vadd.f32 %v3776, %v3895
    %v3897 = vpop.f32.mrb[0].mxu0
    %3898 = vmatprep.mubr.bf16.mxu0 0
    %3899 = vmatmul.mubr.bf16.gmra.mrb[0].mxu0 %v3736
    %v3900 = vpop.f32.mrb[0].mxu0
    %v3901 = vadd.f32 %v3776, %v3900
    %v3902 = vpop.f32.mrb[0].mxu0
    %v3903 = vpop.f32.mrb[0].mxu0
    %v3904 = vadd.f32 %v3776, %v3903
    %v3905 = vpop.f32.mrb[0].mxu0
    %3906 = vmatprep.mubr.bf16.mxu0 0
    %3907 = vmatmul.mubr.bf16.gmra.mrb[0].mxu0 %v3737
    %v3908 = vpop.f32.mrb[0].mxu0
    %v3909 = vadd.f32 %v3776, %v3908
    %v3910 = vpop.f32.mrb[0].mxu0
    %v3911 = vpop.f32.mrb[0].mxu0
    %v3912 = vadd.f32 %v3776, %v3911
    %v3913 = vpop.f32.mrb[0].mxu0
    %3914 = vmatprep.mubr.bf16.mxu0 0
    %3915 = vmatmul.mubr.bf16.gmra.mrb[0].mxu0 %v3738
    %v3916 = vpop.f32.mrb[0].mxu0
    %v3917 = vadd.f32 %v3776, %v3916
    %v3918 = vpop.f32.mrb[0].mxu0
    %v3919 = vpop.f32.mrb[0].mxu0
    %v3920 = vadd.f32 %v3776, %v3919
    %v3921 = vpop.f32.mrb[0].mxu0
    %3922 = vmatprep.mubr.bf16.mxu0 0
    %3923 = vmatmul.mubr.bf16.gmra.mrb[0].mxu0 %v3739
    %v3924 = vpop.f32.mrb[0].mxu0
    %v3925 = vadd.f32 %v3776, %v3924
    %v3926 = vpop.f32.mrb[0].mxu0
    %v3927 = vpop.f32.mrb[0].mxu0
    %v3928 = vadd.f32 %v3776, %v3927
    %v3929 = vpop.f32.mrb[0].mxu0
    %3930 = vmatprep.mubr.bf16.mxu0 0
    %3931 = vmatmul.mubr.bf16.gmra.mrb[0].mxu0 %v3740
    %v3932 = vpop.f32.mrb[0].mxu0
    %v3933 = vadd.f32 %v3776, %v3932
    %v3934 = vpop.f32.mrb[0].mxu0
    %v3935 = vpop.f32.mrb[0].mxu0
    %v3936 = vadd.f32 %v3776, %v3935
    %v3937 = vpop.f32.mrb[0].mxu0
    %3938 = vmatprep.mubr.bf16.mxu0 0
    %3939 = vmatmul.mubr.bf16.gmra.mrb[0].mxu0 %v3741
    %v3940 = vpop.f32.mrb[0].mxu0
    %v3941 = vadd.f32 %v3776, %v3940
    %v3942 = vpop.f32.mrb[0].mxu0
    %v3943 = vpop.f32.mrb[0].mxu0
    %v3944 = vadd.f32 %v3776, %v3943
    %v3945 = vpop.f32.mrb[0].mxu0
    %3946 = vmatprep.mubr.bf16.mxu0 0
    %3947 = vmatmul.mubr.bf16.gmra.mrb[0].mxu0 %v3742
    %v3948 = vpop.f32.mrb[0].mxu0
    %v3949 = vadd.f32 %v3776, %v3948
    %v3950 = vpop.f32.mrb[0].mxu0
    %v3951 = vpop.f32.mrb[0].mxu0
    %v3952 = vadd.f32 %v3776, %v3951
    %v3953 = vpop.f32.mrb[0].mxu0
    %3954 = vmatprep.mubr.bf16.mxu0 0
    %3955 = vmatmul.mubr.bf16.gmra.mrb[0].mxu0 %v3743
    %v3956 = vpop.f32.mrb[0].mxu0
    %v3957 = vadd.f32 %v3776, %v3956
    %v3958 = vpop.f32.mrb[0].mxu0
    %v3959 = vpop.f32.mrb[0].mxu0
    %v3960 = vadd.f32 %v3776, %v3959
    %v3961 = vpop.f32.mrb[0].mxu0
    %3962 = vmatprep.mubr.bf16.mxu0 0
    %3963 = vmatmul.mubr.bf16.gmra.mrb[0].mxu0 %v3744
    %v3964 = vpop.f32.mrb[0].mxu0
    %v3965 = vadd.f32 %v3776, %v3964
    %v3966 = vpop.f32.mrb[0].mxu0
    %v3967 = vpop.f32.mrb[0].mxu0
    %v3968 = vadd.f32 %v3776, %v3967
    %v3969 = vpop.f32.mrb[0].mxu0
    %3970 = vmatprep.mubr.bf16.mxu0 0
    %3971 = vmatmul.mubr.bf16.gmra.mrb[0].mxu0 %v3745
    %v3972 = vpop.f32.mrb[0].mxu0
    %v3973 = vadd.f32 %v3776, %v3972
    %v3974 = vpop.f32.mrb[0].mxu0
    %v3975 = vpop.f32.mrb[0].mxu0
    %v3976 = vadd.f32 %v3776, %v3975
    %v3977 = vpop.f32.mrb[0].mxu0
    %3978 = vmatprep.mubr.bf16.mxu0 0
    %3979 = vmatmul.mubr.bf16.gmra.mrb[0].mxu0 %v3746
    %v3980 = vpop.f32.mrb[0].mxu0
    %v3981 = vadd.f32 %v3776, %v3980
    %v3982 = vpop.f32.mrb[0].mxu0
    %v3983 = vpop.f32.mrb[0].mxu0
    %v3984 = vadd.f32 %v3776, %v3983
    %v3985 = vpop.f32.mrb[0].mxu0
    %3986 = vmatprep.mubr.bf16.mxu0 0
    %3987 = vmatmul.mubr.bf16.gmra.mrb[0].mxu0 %v3747
    %v3988 = vpop.f32.mrb[0].mxu0
    %v3989 = vadd.f32 %v3776, %v3988
    %v3990 = vpop.f32.mrb[0].mxu0
    %v3991 = vpop.f32.mrb[0].mxu0
    %v3992 = vadd.f32 %v3776, %v3991
    %v3993 = vpop.f32.mrb[0].mxu0
    %3994 = vmatprep.mubr.bf16.mxu0 0
    %3995 = vmatmul.mubr.bf16.gmra.mrb[0].mxu0 %v3748
    %v3996 = vpop.f32.mrb[0].mxu0
    %v3997 = vadd.f32 %v3776, %v3996
    %v3998 = vpop.f32.mrb[0].mxu0
    %v3999 = vpop.f32.mrb[0].mxu0
    %v4000 = vadd.f32 %v3776, %v3999
    %v4001 = vpop.f32.mrb[0].mxu0
    %4002 = vmatprep.mubr.bf16.mxu0 0
    %4003 = vmatmul.mubr.bf16.gmra.mrb[0].mxu0 %v3749
    %v4004 = vpop.f32.mrb[0].mxu0
    %v4005 = vadd.f32 %v3776, %v4004
    %v4006 = vpop.f32.mrb[0].mxu0
    %v4007 = vpop.f32.mrb[0].mxu0
    %v4008 = vadd.f32 %v3776, %v4007
    %v4009 = vpop.f32.mrb[0].mxu0
    %4010 = vmatprep.mubr.bf16.mxu0 0
    %4011 = vmatmul.mubr.bf16.gmra.mrb[0].mxu0 %v3750
    %v4012 = vpop.f32.mrb[0].mxu0
    %v4013 = vadd.f32 %v3776, %v4012
    %v4014 = vpop.f32.mrb[0].mxu0
    %v4015 = vpop.f32.mrb[0].mxu0
    %v4016 = vadd.f32 %v3776, %v4015
    %v4017 = vpop.f32.mrb[0].mxu0
    %4018 = vmatprep.mubr.bf16.mxu0 0
    %4019 = vmatmul.mubr.bf16.gmra.mrb[0].mxu0 %v3751
    %v4020 = vpop.f32.mrb[0].mxu0
    %v4021 = vadd.f32 %v3776, %v4020
    %v4022 = vpop.f32.mrb[0].mxu0
    %v4023 = vpop.f32.mrb[0].mxu0
    %v4024 = vadd.f32 %v3776, %v4023
    %v4025 = vpop.f32.mrb[0].mxu0
    %4026 = vmatprep.mubr.bf16.mxu0 0
    %4027 = vmatmul.mubr.bf16.gmra.mrb[0].mxu0 %v3752
    %v4028 = vpop.f32.mrb[0].mxu0
    %v4029 = vadd.f32 %v3776, %v4028
    %v4030 = vpop.f32.mrb[0].mxu0
    %v4031 = vpop.f32.mrb[0].mxu0
    %v4032 = vadd.f32 %v3776, %v4031
    %v4033 = vpop.f32.mrb[0].mxu0
    %4034 = vmatprep.mubr.bf16.mxu0 0
    %4035 = vmatmul.mubr.bf16.gmra.mrb[0].mxu0 %v3753
    %v4036 = vpop.f32.mrb[0].mxu0
    %v4037 = vadd.f32 %v3776, %v4036
    %v4038 = vpop.f32.mrb[0].mxu0
    %v4039 = vpop.f32.mrb[0].mxu0
    %v4040 = vadd.f32 %v3776, %v4039
    %v4041 = vpop.f32.mrb[0].mxu0
    %4042 = vmatprep.mubr.bf16.mxu0 0
    %4043 = vmatmul.mubr.bf16.gmra.mrb[0].mxu0 %v3754
    %v4044 = vpop.f32.mrb[0].mxu0
    %v4045 = vadd.f32 %v3776, %v4044
    %v4046 = vpop.f32.mrb[0].mxu0
    %v4047 = vpop.f32.mrb[0].mxu0
    %v4048 = vadd.f32 %v3776, %v4047
    %v4049 = vpop.f32.mrb[0].mxu0
    %4050 = vdwg.mxu0
    %4051 = vmax.xlane.f32.xlu0 %v3861
    %v4052 = vpop.xlane.xlu0 %4051
    %4053 = vmax.xlane.f32.xlu0 %v3864
    %v4054 = vpop.xlane.xlu0 %4053
    %4055 = vmax.xlane.f32.xlu0 %v3869
    %v4056 = vpop.xlane.xlu0 %4055
    %4057 = vmax.xlane.f32.xlu0 %v3872
    %v4058 = vpop.xlane.xlu0 %4057
    %4059 = vmax.xlane.f32.xlu0 %v3877
    %v4060 = vpop.xlane.xlu0 %4059
    %4061 = vmax.xlane.f32.xlu0 %v3880
    %v4062 = vpop.xlane.xlu0 %4061
    %4063 = vmax.xlane.f32.xlu0 %v3885
    %v4064 = vpop.xlane.xlu0 %4063
    %4065 = vmax.xlane.f32.xlu0 %v3888
    %v4066 = vpop.xlane.xlu0 %4065
    %4067 = vmax.xlane.f32.xlu0 %v3893
    %v4068 = vpop.xlane.xlu0 %4067
    %4069 = vmax.xlane.f32.xlu0 %v3896
    %v4070 = vpop.xlane.xlu0 %4069
    %4071 = vmax.xlane.f32.xlu0 %v3901
    %v4072 = vpop.xlane.xlu0 %4071
    %4073 = vmax.xlane.f32.xlu0 %v3904
    %v4074 = vpop.xlane.xlu0 %4073
    %4075 = vmax.xlane.f32.xlu0 %v3909
    %v4076 = vpop.xlane.xlu0 %4075
    %4077 = vmax.xlane.f32.xlu0 %v3912
    %v4078 = vpop.xlane.xlu0 %4077
    %4079 = vmax.xlane.f32.xlu0 %v3917
    %v4080 = vpop.xlane.xlu0 %4079
    %4081 = vmax.xlane.f32.xlu0 %v3920
    %v4082 = vpop.xlane.xlu0 %4081
    %4083 = vmax.xlane.f32.xlu0 %v3925
    %v4084 = vpop.xlane.xlu0 %4083
    %4085 = vmax.xlane.f32.xlu0 %v3928
    %v4086 = vpop.xlane.xlu0 %4085
    %4087 = vmax.xlane.f32.xlu0 %v3933
    %v4088 = vpop.xlane.xlu0 %4087
    %4089 = vmax.xlane.f32.xlu0 %v3936
    %v4090 = vpop.xlane.xlu0 %4089
    %4091 = vmax.xlane.f32.xlu0 %v3941
    %v4092 = vpop.xlane.xlu0 %4091
    %4093 = vmax.xlane.f32.xlu0 %v3944
    %v4094 = vpop.xlane.xlu0 %4093
    %4095 = vmax.xlane.f32.xlu0 %v3949
    %v4096 = vpop.xlane.xlu0 %4095
    %4097 = vmax.xlane.f32.xlu0 %v3952
    %v4098 = vpop.xlane.xlu0 %4097
    %4099 = vmax.xlane.f32.xlu0 %v3957
    %v4100 = vpop.xlane.xlu0 %4099
    %4101 = vmax.xlane.f32.xlu0 %v3960
    %v4102 = vpop.xlane.xlu0 %4101
    %4103 = vmax.xlane.f32.xlu0 %v3965
    %v4104 = vpop.xlane.xlu0 %4103
    %4105 = vmax.xlane.f32.xlu0 %v3968
    %v4106 = vpop.xlane.xlu0 %4105
    %4107 = vmax.xlane.f32.xlu0 %v3973
    %v4108 = vpop.xlane.xlu0 %4107
    %4109 = vmax.xlane.f32.xlu0 %v3976
    %v4110 = vpop.xlane.xlu0 %4109
    %4111 = vmax.xlane.f32.xlu0 %v3981
    %v4112 = vpop.xlane.xlu0 %4111
    %4113 = vmax.xlane.f32.xlu0 %v3984
    %v4114 = vpop.xlane.xlu0 %4113
    %4115 = vmax.xlane.f32.xlu0 %v3989
    %v4116 = vpop.xlane.xlu0 %4115
    %4117 = vmax.xlane.f32.xlu0 %v3992
    %v4118 = vpop.xlane.xlu0 %4117
    %4119 = vmax.xlane.f32.xlu0 %v3997
    %v4120 = vpop.xlane.xlu0 %4119
    %4121 = vmax.xlane.f32.xlu0 %v4000
    %v4122 = vpop.xlane.xlu0 %4121
    %4123 = vmax.xlane.f32.xlu0 %v4005
    %v4124 = vpop.xlane.xlu0 %4123
    %4125 = vmax.xlane.f32.xlu0 %v4008
    %v4126 = vpop.xlane.xlu0 %4125
    %4127 = vmax.xlane.f32.xlu0 %v4013
    %v4128 = vpop.xlane.xlu0 %4127
    %4129 = vmax.xlane.f32.xlu0 %v4016
    %v4130 = vpop.xlane.xlu0 %4129
    %4131 = vmax.xlane.f32.xlu0 %v4021
    %v4132 = vpop.xlane.xlu0 %4131
    %4133 = vmax.xlane.f32.xlu0 %v4024
    %v4134 = vpop.xlane.xlu0 %4133
    %4135 = vmax.xlane.f32.xlu0 %v4029
    %v4136 = vpop.xlane.xlu0 %4135
    %4137 = vmax.xlane.f32.xlu0 %v4032
    %v4138 = vpop.xlane.xlu0 %4137
    %4139 = vmax.xlane.f32.xlu0 %v4037
    %v4140 = vpop.xlane.xlu0 %4139
    %4141 = vmax.xlane.f32.xlu0 %v4040
    %v4142 = vpop.xlane.xlu0 %4141
    %4143 = vmax.xlane.f32.xlu0 %v4045
    %v4144 = vpop.xlane.xlu0 %4143
    %4145 = vmax.xlane.f32.xlu0 %v4048
    %v4146 = vpop.xlane.xlu0 %4145
    %v4147 = vsub.f32 %v3861, %v4052
    %v4148 = vsub.f32 %v3864, %v4054
    %v4149 = vsub.f32 %v3869, %v4056
    %v4150 = vsub.f32 %v3872, %v4058
    %v4151 = vsub.f32 %v3877, %v4060
    %v4152 = vsub.f32 %v3880, %v4062
    %v4153 = vsub.f32 %v3885, %v4064
    %v4154 = vsub.f32 %v3888, %v4066
    %v4155 = vsub.f32 %v3893, %v4068
    %v4156 = vsub.f32 %v3896, %v4070
    %v4157 = vsub.f32 %v3901, %v4072
    %v4158 = vsub.f32 %v3904, %v4074
    %v4159 = vsub.f32 %v3909, %v4076
    %v4160 = vsub.f32 %v3912, %v4078
    %v4161 = vsub.f32 %v3917, %v4080
    %v4162 = vsub.f32 %v3920, %v4082
    %v4163 = vsub.f32 %v3925, %v4084
    %v4164 = vsub.f32 %v3928, %v4086
    %v4165 = vsub.f32 %v3933, %v4088
    %v4166 = vsub.f32 %v3936, %v4090
    %v4167 = vsub.f32 %v3941, %v4092
    %v4168 = vsub.f32 %v3944, %v4094
    %v4169 = vsub.f32 %v3949, %v4096
    %v4170 = vsub.f32 %v3952, %v4098
    %v4171 = vsub.f32 %v3957, %v4100
    %v4172 = vsub.f32 %v3960, %v4102
    %v4173 = vsub.f32 %v3965, %v4104
    %v4174 = vsub.f32 %v3968, %v4106
    %v4175 = vsub.f32 %v3973, %v4108
    %v4176 = vsub.f32 %v3976, %v4110
    %v4177 = vsub.f32 %v3981, %v4112
    %v4178 = vsub.f32 %v3984, %v4114
    %v4179 = vsub.f32 %v3989, %v4116
    %v4180 = vsub.f32 %v3992, %v4118
    %v4181 = vsub.f32 %v3997, %v4120
    %v4182 = vsub.f32 %v4000, %v4122
    %v4183 = vsub.f32 %v4005, %v4124
    %v4184 = vsub.f32 %v4008, %v4126
    %v4185 = vsub.f32 %v4013, %v4128
    %v4186 = vsub.f32 %v4016, %v4130
    %v4187 = vsub.f32 %v4021, %v4132
    %v4188 = vsub.f32 %v4024, %v4134
    %v4189 = vsub.f32 %v4029, %v4136
    %v4190 = vsub.f32 %v4032, %v4138
    %v4191 = vsub.f32 %v4037, %v4140
    %v4192 = vsub.f32 %v4040, %v4142
    %v4193 = vsub.f32 %v4045, %v4144
    %v4194 = vsub.f32 %v4048, %v4146
    %v4195 = vmul.f32 %v4147, 1.442695
    %v4196 = vpow.pop %v4195
    %v4197 = vmul.f32 %v4148, 1.442695
    %v4198 = vpow.pop %v4197
    %v4199 = vmul.f32 %v4149, 1.442695
    %v4200 = vpow.pop %v4199
    %v4201 = vmul.f32 %v4150, 1.442695
    %v4202 = vpow.pop %v4201
    %v4203 = vmul.f32 %v4151, 1.442695
    %v4204 = vpow.pop %v4203
    %v4205 = vmul.f32 %v4152, 1.442695
    %v4206 = vpow.pop %v4205
    %v4207 = vmul.f32 %v4153, 1.442695
    %v4208 = vpow.pop %v4207
    %v4209 = vmul.f32 %v4154, 1.442695
    %v4210 = vpow.pop %v4209
    %v4211 = vmul.f32 %v4155, 1.442695
    %v4212 = vpow.pop %v4211
    %v4213 = vmul.f32 %v4156, 1.442695
    %v4214 = vpow.pop %v4213
    %v4215 = vmul.f32 %v4157, 1.442695
    %v4216 = vpow.pop %v4215
    %v4217 = vmul.f32 %v4158, 1.442695
    %v4218 = vpow.pop %v4217
    %v4219 = vmul.f32 %v4159, 1.442695
    %v4220 = vpow.pop %v4219
    %v4221 = vmul.f32 %v4160, 1.442695
    %v4222 = vpow.pop %v4221
    %v4223 = vmul.f32 %v4161, 1.442695
    %v4224 = vpow.pop %v4223
    %v4225 = vmul.f32 %v4162, 1.442695
    %v4226 = vpow.pop %v4225
    %v4227 = vmul.f32 %v4163, 1.442695
    %v4228 = vpow.pop %v4227
    %v4229 = vmul.f32 %v4164, 1.442695
    %v4230 = vpow.pop %v4229
    %v4231 = vmul.f32 %v4165, 1.442695
    %v4232 = vpow.pop %v4231
    %v4233 = vmul.f32 %v4166, 1.442695
    %v4234 = vpow.pop %v4233
    %v4235 = vmul.f32 %v4167, 1.442695
    %v4236 = vpow.pop %v4235
    %v4237 = vmul.f32 %v4168, 1.442695
    %v4238 = vpow.pop %v4237
    %v4239 = vmul.f32 %v4169, 1.442695
    %v4240 = vpow.pop %v4239
    %v4241 = vmul.f32 %v4170, 1.442695
    %v4242 = vpow.pop %v4241
    %v4243 = vmul.f32 %v4171, 1.442695
    %v4244 = vpow.pop %v4243
    %v4245 = vmul.f32 %v4172, 1.442695
    %v4246 = vpow.pop %v4245
    %v4247 = vmul.f32 %v4173, 1.442695
    %v4248 = vpow.pop %v4247
    %v4249 = vmul.f32 %v4174, 1.442695
    %v4250 = vpow.pop %v4249
    %v4251 = vmul.f32 %v4175, 1.442695
    %v4252 = vpow.pop %v4251
    %v4253 = vmul.f32 %v4176, 1.442695
    %v4254 = vpow.pop %v4253
    %v4255 = vmul.f32 %v4177, 1.442695
    %v4256 = vpow.pop %v4255
    %v4257 = vmul.f32 %v4178, 1.442695
    %v4258 = vpow.pop %v4257
    %v4259 = vmul.f32 %v4179, 1.442695
    %v4260 = vpow.pop %v4259
    %v4261 = vmul.f32 %v4180, 1.442695
    %v4262 = vpow.pop %v4261
    %v4263 = vmul.f32 %v4181, 1.442695
    %v4264 = vpow.pop %v4263
    %v4265 = vmul.f32 %v4182, 1.442695
    %v4266 = vpow.pop %v4265
    %v4267 = vmul.f32 %v4183, 1.442695
    %v4268 = vpow.pop %v4267
    %v4269 = vmul.f32 %v4184, 1.442695
    %v4270 = vpow.pop %v4269
    %v4271 = vmul.f32 %v4185, 1.442695
    %v4272 = vpow.pop %v4271
    %v4273 = vmul.f32 %v4186, 1.442695
    %v4274 = vpow.pop %v4273
    %v4275 = vmul.f32 %v4187, 1.442695
    %v4276 = vpow.pop %v4275
    %v4277 = vmul.f32 %v4188, 1.442695
    %v4278 = vpow.pop %v4277
    %v4279 = vmul.f32 %v4189, 1.442695
    %v4280 = vpow.pop %v4279
    %v4281 = vmul.f32 %v4190, 1.442695
    %v4282 = vpow.pop %v4281
    %v4283 = vmul.f32 %v4191, 1.442695
    %v4284 = vpow.pop %v4283
    %v4285 = vmul.f32 %v4192, 1.442695
    %v4286 = vpow.pop %v4285
    %v4287 = vmul.f32 %v4193, 1.442695
    %v4288 = vpow.pop %v4287
    %v4289 = vmul.f32 %v4194, 1.442695
    %v4290 = vpow.pop %v4289
    %4291 = vadd.xlane.f32.xlu0 %v4196
    %v4292 = vpop.xlane.xlu0 %4291
    %4293 = vadd.xlane.f32.xlu0 %v4198
    %v4294 = vpop.xlane.xlu0 %4293
    %4295 = vadd.xlane.f32.xlu0 %v4200
    %v4296 = vpop.xlane.xlu0 %4295
    %4297 = vadd.xlane.f32.xlu0 %v4202
    %v4298 = vpop.xlane.xlu0 %4297
    %4299 = vadd.xlane.f32.xlu0 %v4204
    %v4300 = vpop.xlane.xlu0 %4299
    %4301 = vadd.xlane.f32.xlu0 %v4206
    %v4302 = vpop.xlane.xlu0 %4301
    %4303 = vadd.xlane.f32.xlu0 %v4208
    %v4304 = vpop.xlane.xlu0 %4303
    %4305 = vadd.xlane.f32.xlu0 %v4210
    %v4306 = vpop.xlane.xlu0 %4305
    %4307 = vadd.xlane.f32.xlu0 %v4212
    %v4308 = vpop.xlane.xlu0 %4307
    %4309 = vadd.xlane.f32.xlu0 %v4214
    %v4310 = vpop.xlane.xlu0 %4309
    %4311 = vadd.xlane.f32.xlu0 %v4216
    %v4312 = vpop.xlane.xlu0 %4311
    %4313 = vadd.xlane.f32.xlu0 %v4218
    %v4314 = vpop.xlane.xlu0 %4313
    %4315 = vadd.xlane.f32.xlu0 %v4220
    %v4316 = vpop.xlane.xlu0 %4315
    %4317 = vadd.xlane.f32.xlu0 %v4222
    %v4318 = vpop.xlane.xlu0 %4317
    %4319 = vadd.xlane.f32.xlu0 %v4224
    %v4320 = vpop.xlane.xlu0 %4319
    %4321 = vadd.xlane.f32.xlu0 %v4226
    %v4322 = vpop.xlane.xlu0 %4321
    %4323 = vadd.xlane.f32.xlu0 %v4228
    %v4324 = vpop.xlane.xlu0 %4323
    %4325 = vadd.xlane.f32.xlu0 %v4230
    %v4326 = vpop.xlane.xlu0 %4325
    %4327 = vadd.xlane.f32.xlu0 %v4232
    %v4328 = vpop.xlane.xlu0 %4327
    %4329 = vadd.xlane.f32.xlu0 %v4234
    %v4330 = vpop.xlane.xlu0 %4329
    %4331 = vadd.xlane.f32.xlu0 %v4236
    %v4332 = vpop.xlane.xlu0 %4331
    %4333 = vadd.xlane.f32.xlu0 %v4238
    %v4334 = vpop.xlane.xlu0 %4333
    %4335 = vadd.xlane.f32.xlu0 %v4240
    %v4336 = vpop.xlane.xlu0 %4335
    %4337 = vadd.xlane.f32.xlu0 %v4242
    %v4338 = vpop.xlane.xlu0 %4337
    %4339 = vadd.xlane.f32.xlu0 %v4244
    %v4340 = vpop.xlane.xlu0 %4339
    %4341 = vadd.xlane.f32.xlu0 %v4246
    %v4342 = vpop.xlane.xlu0 %4341
    %4343 = vadd.xlane.f32.xlu0 %v4248
    %v4344 = vpop.xlane.xlu0 %4343
    %4345 = vadd.xlane.f32.xlu0 %v4250
    %v4346 = vpop.xlane.xlu0 %4345
    %4347 = vadd.xlane.f32.xlu0 %v4252
    %v4348 = vpop.xlane.xlu0 %4347
    %4349 = vadd.xlane.f32.xlu0 %v4254
    %v4350 = vpop.xlane.xlu0 %4349
    %4351 = vadd.xlane.f32.xlu0 %v4256
    %v4352 = vpop.xlane.xlu0 %4351
    %4353 = vadd.xlane.f32.xlu0 %v4258
    %v4354 = vpop.xlane.xlu0 %4353
    %4355 = vadd.xlane.f32.xlu0 %v4260
    %v4356 = vpop.xlane.xlu0 %4355
    %4357 = vadd.xlane.f32.xlu0 %v4262
    %v4358 = vpop.xlane.xlu0 %4357
    %4359 = vadd.xlane.f32.xlu0 %v4264
    %v4360 = vpop.xlane.xlu0 %4359
    %4361 = vadd.xlane.f32.xlu0 %v4266
    %v4362 = vpop.xlane.xlu0 %4361
    %4363 = vadd.xlane.f32.xlu0 %v4268
    %v4364 = vpop.xlane.xlu0 %4363
    %4365 = vadd.xlane.f32.xlu0 %v4270
    %v4366 = vpop.xlane.xlu0 %4365
    %4367 = vadd.xlane.f32.xlu0 %v4272
    %v4368 = vpop.xlane.xlu0 %4367
    %4369 = vadd.xlane.f32.xlu0 %v4274
    %v4370 = vpop.xlane.xlu0 %4369
    %4371 = vadd.xlane.f32.xlu0 %v4276
    %v4372 = vpop.xlane.xlu0 %4371
    %4373 = vadd.xlane.f32.xlu0 %v4278
    %v4374 = vpop.xlane.xlu0 %4373
    %4375 = vadd.xlane.f32.xlu0 %v4280
    %v4376 = vpop.xlane.xlu0 %4375
    %4377 = vadd.xlane.f32.xlu0 %v4282
    %v4378 = vpop.xlane.xlu0 %4377
    %4379 = vadd.xlane.f32.xlu0 %v4284
    %v4380 = vpop.xlane.xlu0 %4379
    %4381 = vadd.xlane.f32.xlu0 %v4286
    %v4382 = vpop.xlane.xlu0 %4381
    %4383 = vadd.xlane.f32.xlu0 %v4288
    %v4384 = vpop.xlane.xlu0 %4383
    %4385 = vadd.xlane.f32.xlu0 %v4290
    %v4386 = vpop.xlane.xlu0 %4385
    %v4387 = vlog2.pop %v4292
    %v4388 = vmul.f32 %v4387, 0.6931472
    %v4389 = vlog2.pop %v4294
    %v4390 = vmul.f32 %v4389, 0.6931472
    %v4391 = vlog2.pop %v4296
    %v4392 = vmul.f32 %v4391, 0.6931472
    %v4393 = vlog2.pop %v4298
    %v4394 = vmul.f32 %v4393, 0.6931472
    %v4395 = vlog2.pop %v4300
    %v4396 = vmul.f32 %v4395, 0.6931472
    %v4397 = vlog2.pop %v4302
    %v4398 = vmul.f32 %v4397, 0.6931472
    %v4399 = vlog2.pop %v4304
    %v4400 = vmul.f32 %v4399, 0.6931472
    %v4401 = vlog2.pop %v4306
    %v4402 = vmul.f32 %v4401, 0.6931472
    %v4403 = vlog2.pop %v4308
    %v4404 = vmul.f32 %v4403, 0.6931472
    %v4405 = vlog2.pop %v4310
    %v4406 = vmul.f32 %v4405, 0.6931472
    %v4407 = vlog2.pop %v4312
    %v4408 = vmul.f32 %v4407, 0.6931472
    %v4409 = vlog2.pop %v4314
    %v4410 = vmul.f32 %v4409, 0.6931472
    %v4411 = vlog2.pop %v4316
    %v4412 = vmul.f32 %v4411, 0.6931472
    %v4413 = vlog2.pop %v4318
    %v4414 = vmul.f32 %v4413, 0.6931472
    %v4415 = vlog2.pop %v4320
    %v4416 = vmul.f32 %v4415, 0.6931472
    %v4417 = vlog2.pop %v4322
    %v4418 = vmul.f32 %v4417, 0.6931472
    %v4419 = vlog2.pop %v4324
    %v4420 = vmul.f32 %v4419, 0.6931472
    %v4421 = vlog2.pop %v4326
    %v4422 = vmul.f32 %v4421, 0.6931472
    %v4423 = vlog2.pop %v4328
    %v4424 = vmul.f32 %v4423, 0.6931472
    %v4425 = vlog2.pop %v4330
    %v4426 = vmul.f32 %v4425, 0.6931472
    %v4427 = vlog2.pop %v4332
    %v4428 = vmul.f32 %v4427, 0.6931472
    %v4429 = vlog2.pop %v4334
    %v4430 = vmul.f32 %v4429, 0.6931472
    %v4431 = vlog2.pop %v4336
    %v4432 = vmul.f32 %v4431, 0.6931472
    %v4433 = vlog2.pop %v4338
    %v4434 = vmul.f32 %v4433, 0.6931472
    %v4435 = vlog2.pop %v4340
    %v4436 = vmul.f32 %v4435, 0.6931472
    %v4437 = vlog2.pop %v4342
    %v4438 = vmul.f32 %v4437, 0.6931472
    %v4439 = vlog2.pop %v4344
    %v4440 = vmul.f32 %v4439, 0.6931472
    %v4441 = vlog2.pop %v4346
    %v4442 = vmul.f32 %v4441, 0.6931472
    %v4443 = vlog2.pop %v4348
    %v4444 = vmul.f32 %v4443, 0.6931472
    %v4445 = vlog2.pop %v4350
    %v4446 = vmul.f32 %v4445, 0.6931472
    %v4447 = vlog2.pop %v4352
    %v4448 = vmul.f32 %v4447, 0.6931472
    %v4449 = vlog2.pop %v4354
    %v4450 = vmul.f32 %v4449, 0.6931472
    %v4451 = vlog2.pop %v4356
    %v4452 = vmul.f32 %v4451, 0.6931472
    %v4453 = vlog2.pop %v4358
    %v4454 = vmul.f32 %v4453, 0.6931472
    %v4455 = vlog2.pop %v4360
    %v4456 = vmul.f32 %v4455, 0.6931472
    %v4457 = vlog2.pop %v4362
    %v4458 = vmul.f32 %v4457, 0.6931472
    %v4459 = vlog2.pop %v4364
    %v4460 = vmul.f32 %v4459, 0.6931472
    %v4461 = vlog2.pop %v4366
    %v4462 = vmul.f32 %v4461, 0.6931472
    %v4463 = vlog2.pop %v4368
    %v4464 = vmul.f32 %v4463, 0.6931472
    %v4465 = vlog2.pop %v4370
    %v4466 = vmul.f32 %v4465, 0.6931472
    %v4467 = vlog2.pop %v4372
    %v4468 = vmul.f32 %v4467, 0.6931472
    %v4469 = vlog2.pop %v4374
    %v4470 = vmul.f32 %v4469, 0.6931472
    %v4471 = vlog2.pop %v4376
    %v4472 = vmul.f32 %v4471, 0.6931472
    %v4473 = vlog2.pop %v4378
    %v4474 = vmul.f32 %v4473, 0.6931472
    %v4475 = vlog2.pop %v4380
    %v4476 = vmul.f32 %v4475, 0.6931472
    %v4477 = vlog2.pop %v4382
    %v4478 = vmul.f32 %v4477, 0.6931472
    %v4479 = vlog2.pop %v4384
    %v4480 = vmul.f32 %v4479, 0.6931472
    %v4481 = vlog2.pop %v4386
    %v4482 = vmul.f32 %v4481, 0.6931472
    %v4483 = vsub.f32 %v4147, %v4388
    %v4484 = vsub.f32 %v4148, %v4390
    %v4485 = vsub.f32 %v4149, %v4392
    %v4486 = vsub.f32 %v4150, %v4394
    %v4487 = vsub.f32 %v4151, %v4396
    %v4488 = vsub.f32 %v4152, %v4398
    %v4489 = vsub.f32 %v4153, %v4400
    %v4490 = vsub.f32 %v4154, %v4402
    %v4491 = vsub.f32 %v4155, %v4404
    %v4492 = vsub.f32 %v4156, %v4406
    %v4493 = vsub.f32 %v4157, %v4408
    %v4494 = vsub.f32 %v4158, %v4410
    %v4495 = vsub.f32 %v4159, %v4412
    %v4496 = vsub.f32 %v4160, %v4414
    %v4497 = vsub.f32 %v4161, %v4416
    %v4498 = vsub.f32 %v4162, %v4418
    %v4499 = vsub.f32 %v4163, %v4420
    %v4500 = vsub.f32 %v4164, %v4422
    %v4501 = vsub.f32 %v4165, %v4424
    %v4502 = vsub.f32 %v4166, %v4426
    %v4503 = vsub.f32 %v4167, %v4428
    %v4504 = vsub.f32 %v4168, %v4430
    %v4505 = vsub.f32 %v4169, %v4432
    %v4506 = vsub.f32 %v4170, %v4434
    %v4507 = vsub.f32 %v4171, %v4436
    %v4508 = vsub.f32 %v4172, %v4438
    %v4509 = vsub.f32 %v4173, %v4440
    %v4510 = vsub.f32 %v4174, %v4442
    %v4511 = vsub.f32 %v4175, %v4444
    %v4512 = vsub.f32 %v4176, %v4446
    %v4513 = vsub.f32 %v4177, %v4448
    %v4514 = vsub.f32 %v4178, %v4450
    %v4515 = vsub.f32 %v4179, %v4452
    %v4516 = vsub.f32 %v4180, %v4454
    %v4517 = vsub.f32 %v4181, %v4456
    %v4518 = vsub.f32 %v4182, %v4458
    %v4519 = vsub.f32 %v4183, %v4460
    %v4520 = vsub.f32 %v4184, %v4462
    %v4521 = vsub.f32 %v4185, %v4464
    %v4522 = vsub.f32 %v4186, %v4466
    %v4523 = vsub.f32 %v4187, %v4468
    %v4524 = vsub.f32 %v4188, %v4470
    %v4525 = vsub.f32 %v4189, %v4472
    %v4526 = vsub.f32 %v4190, %v4474
    %v4527 = vsub.f32 %v4191, %v4476
    %v4528 = vsub.f32 %v4192, %v4478
    %v4529 = vsub.f32 %v4193, %v4480
    %v4530 = vsub.f32 %v4194, %v4482
    %4531 = vst [vmem:[#allocation15] sm:$0xff] %v4483
    %4532 = vst [vmem:[#allocation15 + $0x8] sm:$0xff] %v4484
    %4533 = vst [vmem:[#allocation15 + $0x10] sm:$0xff] %v4485
    %4534 = vst [vmem:[#allocation15 + $0x18] sm:$0xff] %v4486
    %4535 = vst [vmem:[#allocation15 + $0x20] sm:$0xff] %v4487
    %4536 = vst [vmem:[#allocation15 + $0x28] sm:$0xff] %v4488
    %4537 = vst [vmem:[#allocation15 + $0x30] sm:$0xff] %v4489
    %4538 = vst [vmem:[#allocation15 + $0x38] sm:$0xff] %v4490
    %4539 = vst [vmem:[#allocation15 + $0x40] sm:$0xff] %v4491
    %4540 = vst [vmem:[#allocation15 + $0x48] sm:$0xff] %v4492
    %4541 = vst [vmem:[#allocation15 + $0x50] sm:$0xff] %v4493
    %4542 = vst [vmem:[#allocation15 + $0x58] sm:$0xff] %v4494
    %4543 = vst [vmem:[#allocation15 + $0x60] sm:$0xff] %v4495
    %4544 = vst [vmem:[#allocation15 + $0x68] sm:$0xff] %v4496
    %4545 = vst [vmem:[#allocation15 + $0x70] sm:$0xff] %v4497
    %4546 = vst [vmem:[#allocation15 + $0x78] sm:$0xff] %v4498
    %4547 = vst [vmem:[#allocation15 + $0x80] sm:$0xff] %v4499
    %4548 = vst [vmem:[#allocation15 + $0x88] sm:$0xff] %v4500
    %4549 = vst [vmem:[#allocation15 + $0x90] sm:$0xff] %v4501
    %4550 = vst [vmem:[#allocation15 + $0x98] sm:$0xff] %v4502
    %4551 = vst [vmem:[#allocation15 + $0xa0] sm:$0xff] %v4503
    %4552 = vst [vmem:[#allocation15 + $0xa8] sm:$0xff] %v4504
    %4553 = vst [vmem:[#allocation15 + $0xb0] sm:$0xff] %v4505
    %4554 = vst [vmem:[#allocation15 + $0xb8] sm:$0xff] %v4506
    %4555 = vst [vmem:[#allocation15 + $0xc0] sm:$0xff] %v4507
    %4556 = vst [vmem:[#allocation15 + $0xc8] sm:$0xff] %v4508
    %4557 = vst [vmem:[#allocation15 + $0xd0] sm:$0xff] %v4509
    %4558 = vst [vmem:[#allocation15 + $0xd8] sm:$0xff] %v4510
    %4559 = vst [vmem:[#allocation15 + $0xe0] sm:$0xff] %v4511
    %4560 = vst [vmem:[#allocation15 + $0xe8] sm:$0xff] %v4512
    %4561 = vst [vmem:[#allocation15 + $0xf0] sm:$0xff] %v4513
    %4562 = vst [vmem:[#allocation15 + $0xf8] sm:$0xff] %v4514
    %4563 = vst [vmem:[#allocation15 + $0x100] sm:$0xff] %v4515
    %4564 = vst [vmem:[#allocation15 + $0x108] sm:$0xff] %v4516
    %4565 = vst [vmem:[#allocation15 + $0x110] sm:$0xff] %v4517
    %4566 = vst [vmem:[#allocation15 + $0x118] sm:$0xff] %v4518
    %4567 = vst [vmem:[#allocation15 + $0x120] sm:$0xff] %v4519
    %4568 = vst [vmem:[#allocation15 + $0x128] sm:$0xff] %v4520
    %4569 = vst [vmem:[#allocation15 + $0x130] sm:$0xff] %v4521
    %4570 = vst [vmem:[#allocation15 + $0x138] sm:$0xff] %v4522
    %4571 = vst [vmem:[#allocation15 + $0x140] sm:$0xff] %v4523
    %4572 = vst [vmem:[#allocation15 + $0x148] sm:$0xff] %v4524
    %4573 = vst [vmem:[#allocation15 + $0x150] sm:$0xff] %v4525
    %4574 = vst [vmem:[#allocation15 + $0x158] sm:$0xff] %v4526
    %4575 = vst [vmem:[#allocation15 + $0x160] sm:$0xff] %v4527
    %4576 = vst [vmem:[#allocation15 + $0x168] sm:$0xff] %v4528
    %4577 = vst [vmem:[#allocation15 + $0x170] sm:$0xff] %v4529
    %4578 = vst [vmem:[#allocation15 + $0x178] sm:$0xff] %v4530
    // Predicated region
    $region78: #{tpu_custom_call.1} parent=1 // pred_check
      _
    $region79: #{tpu_custom_call.1} parent=1 // pred_check_branch
      %4580 = sbr.rel (0) target = $region81
    $region80: #{tpu_custom_call.1} parent=1 // pred_region
      %s4582 = ssub.s32 6144, 6144
      %4583 = vsyncadd [#allocation4], %s4582
      %s4584 = sshll.u32 [#allocation14], 4
      %s4585 = int_to_ptr.vmem [resolvable:$true] %s4584
      %4590 = dma.vmem_to_hbm [thread:$0]  %s4585, 6144, %s12, [#allocation4], 128, 128, 8
    $region81: #{tpu_custom_call.1} parent=1 // pred_fallthru
      _
    // Predicated region
    $region82: #{tpu_custom_call.1} parent=1 // pred_check
      _
    $region83: #{tpu_custom_call.1} parent=1 // pred_check_branch
      %4592 = sbr.rel (0) target = $region85
    $region84: #{tpu_custom_call.1} parent=1 // pred_region
      %s4594 = ssub.s32 6144, 6144
      %4595 = vsyncadd [#allocation16], %s4594
      %s4596 = sshll.u32 [#allocation15], 4
      %s4597 = int_to_ptr.vmem [resolvable:$true] %s4596
      %4602 = dma.vmem_to_hbm [thread:$0]  %s4597, 6144, %s13, [#allocation16], 128, 128, 8
    $region85: #{tpu_custom_call.1} parent=1 // pred_fallthru
      _
    // Predicated region
    $region86: #{tpu_custom_call.1} parent=1 // pred_check
      _
    $region87: #{tpu_custom_call.1} parent=1 // pred_check_branch
      %4604 = sbr.rel (0) target = $region89
    $region88: #{tpu_custom_call.1} parent=1 // pred_region
      %4605 = dma.done [#allocation4], 6144
    $region89: #{tpu_custom_call.1} parent=1 // pred_fallthru
      _
    // Predicated region
    $region90: #{tpu_custom_call.1} parent=1 // pred_check
      _
    $region91: #{tpu_custom_call.1} parent=1 // pred_check_branch
      %4607 = sbr.rel (0) target = $region93
    $region92: #{tpu_custom_call.1} parent=1 // pred_region
      %4608 = dma.done [#allocation16], 6144
    $region93: #{tpu_custom_call.1} parent=1 // pred_fallthru
      _
    %4609 = vsyncpa [#allocation3], 1
    %4610 = vsyncpa [#allocation6], 1
    %4611 = vsyncpa [#allocation9], 1
    %4612 = vsyncpa [#allocation12], 1
    %4613 = vsyncpa [#allocation4], 1
    %4614 = vsyncpa [#allocation16], 1

</llo_original>
